<compile_context>
chip_gen: v5e
topology: v5e:2x2
jax: 0.10.0
libtpu: 0.0.40
codegen_flags: <defaults>
</compile_context>

<pallas_src>
import functools

import jax
import jax.numpy as jnp
import numpy as np
from jax.experimental import pallas as pl
from jax.experimental.pallas import tpu as pltpu


# ----------------------------------------------------------------------------- kernel
def _fuse_kernel(xh_ref, xl_ref,
                 w_fh_ref, b_fh_ref,
                 w_td1_ref, b_td1_ref, w_td2_ref, b_td2_ref,
                 w_bu1_ref, b_bu1_ref, w_bu2_ref, b_bu2_ref,
                 w_post_ref, b_post_ref,
                 out_ref, *, H, W):
    HW = H * W
    C = xl_ref.shape[2]

    def sigmoid(x):
        return 1.0 / (1.0 + jnp.exp(-x))

    # feature_high: 1x1 conv (+folded BN) + ReLU.  xh dies into this matmul.
    xh_f = jnp.maximum(
        jnp.dot(xh_ref[0], w_fh_ref[...],
                preferred_element_type=jnp.float32) + b_fh_ref[...], 0.0)

    # topdown gate (local, per pixel): 1x1 -> BN -> ReLU -> 1x1 -> BN -> sigmoid
    td = jnp.maximum(
        jnp.dot(xh_f, w_td1_ref[...],
                preferred_element_type=jnp.float32) + b_td1_ref[...], 0.0)
    td = sigmoid(jnp.dot(td, w_td2_ref[...],
                         preferred_element_type=jnp.float32) + b_td2_ref[...])

    # bottomup gate: 1x1 -> BN -> ReLU -> 1x1 -> BN -> sigmoid
    xl = xl_ref[0]
    bu = jnp.maximum(
        jnp.dot(xl, w_bu1_ref[...],
                preferred_element_type=jnp.float32) + b_bu1_ref[...], 0.0)
    bu = sigmoid(jnp.dot(bu, w_bu2_ref[...],
                         preferred_element_type=jnp.float32) + b_bu2_ref[...])

    # bidirectional fusion; the module's "2 *" scale is folded into w_post.
    xs = xl * td + xh_f * bu                                        # (HW, C)

    # post: 3x3 conv (padding=1) + folded BN + ReLU.
    # dx taps: +/-1 shifts along the flattened HW (sublane) axis via pltpu.roll,
    # zeroing the wrapped boundary column, then channel-concat -> K = 3C operand.
    wpos = jax.lax.broadcasted_iota(jnp.int32, (HW, C), 0) % W      # column index, full shape
    xs_l = jnp.where(wpos >= 1, pltpu.roll(xs, shift=1, axis=0), 0.0)           # x[h, w-1]
    xs_r = jnp.where(wpos <= W - 2, pltpu.roll(xs, shift=HW - 1, axis=0), 0.0)  # x[h, w+1]
    row = jnp.concatenate([xs_l, xs, xs_r], axis=-1)                # (HW, 3C)

    # dy taps: whole-row (multiple-of-W, sublane-aligned) shifts of the 3C slab.
    zrow = jnp.zeros((W, 3 * C), jnp.float32)
    row_u = jnp.concatenate([zrow, row[:HW - W]], axis=0)           # x[h-1, w+dx]
    row_d = jnp.concatenate([row[W:], zrow], axis=0)                # x[h+1, w+dx]

    acc = jnp.dot(row_u, w_post_ref[0], preferred_element_type=jnp.float32)
    acc = acc + jnp.dot(row, w_post_ref[1], preferred_element_type=jnp.float32)
    acc = acc + jnp.dot(row_d, w_post_ref[2], preferred_element_type=jnp.float32)

    out_ref[0] = jnp.maximum(acc + b_post_ref[...], 0.0).astype(out_ref.dtype)


# ----------------------------------------------------------------------------- wrapper
def bi_local_cha_fuse_reduce(xh, xl, params):
    """xh: (B, H, W, Ch) high-level features, xl: (B, H, W, C) low-level features."""
    B, H, W, Ch = xh.shape
    C = xl.shape[3]
    HW = H * W
    (w_fh, b_fh, w_td1, b_td1, w_td2, b_td2,
     w_bu1, b_bu1, w_bu2, b_bu2, w_post, b_post) = params

    # Kernel-side parameter packing (tiny, fused by XLA):
    #  * fold the "2 *" fusion scale into the linear post conv,
    #  * repack the 3x3 taps (dy, dx, Cin, Cout) -> (dy, 3*Cin, Cout) so the three
    #    dx taps of each dy become one K=3C matmul,
    #  * biases as (1, C)/(1, Cb) rows for clean 2-D VMEM layouts.
    w_post_cat = (2.0 * w_post).reshape(3, 3 * C, C)
    args = (xh.reshape(B, HW, Ch), xl.reshape(B, HW, C),
            w_fh, b_fh[None, :], w_td1, b_td1[None, :], w_td2, b_td2[None, :],
            w_bu1, b_bu1[None, :], w_bu2, b_bu2[None, :],
            w_post_cat, b_post[None, :])

    def full(a):
        # Whole-array block; block index is constant across the grid so the
        # weights are DMA'd into VMEM only once.
        return pl.BlockSpec(a.shape, lambda b, n=a.ndim: (0,) * n)

    out = pl.pallas_call(
        functools.partial(_fuse_kernel, H=H, W=W),
        out_shape=jax.ShapeDtypeStruct((B, HW, C), jnp.float32),
        grid=(B,),
        in_specs=[pl.BlockSpec((1, HW, Ch), lambda b: (b, 0, 0)),
                  pl.BlockSpec((1, HW, C), lambda b: (b, 0, 0))]
                 + [full(a) for a in args[2:]],
        out_specs=pl.BlockSpec((1, HW, C), lambda b: (b, 0, 0)),
        # Batch images are independent -> "parallel" lets v7x's two TensorCores
        # split the grid; on single-TC v5e/v6e it behaves like "arbitrary".
        compiler_params=pltpu.CompilerParams(
            dimension_semantics=("parallel",)),
    )(*args)
    return out.reshape(B, H, W, C)


# ----------------------------------------------------------------------------- params
def _fold_bn(w, b, gamma, beta, mean, var, eps=1e-5):
    """Fold inference-mode BatchNorm into a (Cin, Cout) matmul weight + bias."""
    scale = gamma / jnp.sqrt(var + eps)
    return w * scale[None, :], (b - mean) * scale + beta


def init_params(key, Ch, C, Cb):
    keys = iter(jax.random.split(key, 40))

    def nrm(shape, s=0.1):
        return s * jax.random.normal(next(keys), shape, jnp.float32)

    def bn(c):
        gamma = 1.0 + 0.1 * jax.random.normal(next(keys), (c,), jnp.float32)
        beta = 0.05 * jax.random.normal(next(keys), (c,), jnp.float32)
        mean = 0.1 * jax.random.normal(next(keys), (c,), jnp.float32)
        var = 0.5 + jax.random.uniform(next(keys), (c,), jnp.float32)
        return gamma, beta, mean, var

    # feature_high: Conv1x1(Ch->C) + BN
    w_fh, b_fh = _fold_bn(nrm((Ch, C)), nrm((C,), 0.05), *bn(C))
    # topdown: Conv1x1(C->Cb)+BN, Conv1x1(Cb->C)+BN
    w_td1, b_td1 = _fold_bn(nrm((C, Cb)), nrm((Cb,), 0.05), *bn(Cb))
    w_td2, b_td2 = _fold_bn(nrm((Cb, C)), nrm((C,), 0.05), *bn(C))
    # bottomup: Conv1x1(C->Cb)+BN, Conv1x1(Cb->C)+BN
    w_bu1, b_bu1 = _fold_bn(nrm((C, Cb)), nrm((Cb,), 0.05), *bn(Cb))
    w_bu2, b_bu2 = _fold_bn(nrm((Cb, C)), nrm((C,), 0.05), *bn(C))
    # post: Conv3x3(C->C) + BN, taps stored as (dy, dx, Cin, Cout)
    w_post = nrm((3, 3, C, C))
    b_post = nrm((C,), 0.05)
    gamma, beta, mean, var = bn(C)
    scale = gamma / jnp.sqrt(var + 1e-5)
    w_post = w_post * scale
    b_post = (b_post - mean) * scale + beta

    return (w_fh, b_fh, w_td1, b_td1, w_td2, b_td2,
            w_bu1, b_bu1, w_bu2, b_bu2, w_post, b_post)


# ----------------------------------------------------------------------------- reference
def reference(xh, xl, params):
    """Plain-JAX forward of BiLocalChaFuseReduce with folded BN (default matmul
    precision, same as the kernel)."""
    (w_fh, b_fh, w_td1, b_td1, w_td2, b_td2,
     w_bu1, b_bu1, w_bu2, b_bu2, w_post, b_post) = params
    B, H, W, Ch = xh.shape
    C = xl.shape[3]

    xh2 = xh.reshape(B, H * W, Ch)
    xl2 = xl.reshape(B, H * W, C)
    xh_f = jnp.maximum(jnp.matmul(xh2, w_fh) + b_fh, 0.0)
    td = jnp.maximum(jnp.matmul(xh_f, w_td1) + b_td1, 0.0)
    td = jax.nn.sigmoid(jnp.matmul(td, w_td2) + b_td2)
    bu = jnp.maximum(jnp.matmul(xl2, w_bu1) + b_bu1, 0.0)
    bu = jax.nn.sigmoid(jnp.matmul(bu, w_bu2) + b_bu2)
    xs = (2.0 * xl2 * td + 2.0 * xh_f * bu).reshape(B, H, W, C)

    xp = jnp.pad(xs, ((0, 0), (1, 1), (1, 1), (0, 0)))
    acc = jnp.zeros((B, H, W, C), jnp.float32)
    for dy in range(3):
        for dx in range(3):
            acc = acc + jnp.einsum('bhwc,cd->bhwd',
                                   xp[:, dy:dy + H, dx:dx + W, :], w_post[dy, dx])
    return jnp.maximum(acc + b_post, 0.0)


# ----------------------------------------------------------------------------- main
if __name__ == "__main__":
    B, H, W = 2, 16, 16
    Ch = 16          # in_high_channels
    C = 64           # in_low_channels == out_channels (module asserts equality)
    r = 4
    Cb = C // r      # bottleneck channels

    key = jax.random.PRNGKey(0)
    kxh, kxl, kp = jax.random.split(key, 3)
    xh = jax.random.normal(kxh, (B, H, W, Ch), jnp.float32)
    xl = jax.random.normal(kxl, (B, H, W, C), jnp.float32)

    params = init_params(kp, Ch, C, Cb)

    out = jax.block_until_ready(bi_local_cha_fuse_reduce(xh, xl, params))
    assert out.shape == (B, H, W, C)

    ref = reference(xh, xl, params)
    # Tolerance covers possible MXU default-precision (bf16-pass) differences
    # between the Mosaic kernel and the XLA reference dots.
    np.testing.assert_allclose(np.asarray(out), np.asarray(ref),
                               rtol=2e-2, atol=2e-2)
    print("KERNEL_OK")
</pallas_src>

<mosaic_0001>
module attributes {stable_mosaic.version = 11 : i64} {
  func.func @_fuse_kernel(%arg0: i32, %arg1: memref<1x256x16xf32, #tpu.memory_space<vmem>>, %arg2: memref<1x256x64xf32, #tpu.memory_space<vmem>>, %arg3: memref<16x64xf32, #tpu.memory_space<vmem>>, %arg4: memref<1x64xf32, #tpu.memory_space<vmem>>, %arg5: memref<64x16xf32, #tpu.memory_space<vmem>>, %arg6: memref<1x16xf32, #tpu.memory_space<vmem>>, %arg7: memref<16x64xf32, #tpu.memory_space<vmem>>, %arg8: memref<1x64xf32, #tpu.memory_space<vmem>>, %arg9: memref<64x16xf32, #tpu.memory_space<vmem>>, %arg10: memref<1x16xf32, #tpu.memory_space<vmem>>, %arg11: memref<16x64xf32, #tpu.memory_space<vmem>>, %arg12: memref<1x64xf32, #tpu.memory_space<vmem>>, %arg13: memref<3x192x64xf32, #tpu.memory_space<vmem>>, %arg14: memref<1x64xf32, #tpu.memory_space<vmem>>, %arg15: memref<1x256x64xf32, #tpu.memory_space<vmem>>) attributes {dimension_semantics = [#tpu.dimension_semantics<parallel>], iteration_bounds = array<i64: 2>, scalar_prefetch = 0 : i64, scratch_operands = 0 : i64, tpu.core_type = #tpu.core_type<tc>, window_params = [{transform_indices = @transform_0, window_bounds = array<i64: 1, 256, 16>}, {transform_indices = @transform_1, window_bounds = array<i64: 1, 256, 64>}, {pipeline_mode = #tpu.pipeline_mode<synchronous>, transform_indices = @transform_2, window_bounds = array<i64: 16, 64>}, {pipeline_mode = #tpu.pipeline_mode<synchronous>, transform_indices = @transform_3, window_bounds = array<i64: 1, 64>}, {pipeline_mode = #tpu.pipeline_mode<synchronous>, transform_indices = @transform_4, window_bounds = array<i64: 64, 16>}, {pipeline_mode = #tpu.pipeline_mode<synchronous>, transform_indices = @transform_5, window_bounds = array<i64: 1, 16>}, {pipeline_mode = #tpu.pipeline_mode<synchronous>, transform_indices = @transform_6, window_bounds = array<i64: 16, 64>}, {pipeline_mode = #tpu.pipeline_mode<synchronous>, transform_indices = @transform_7, window_bounds = array<i64: 1, 64>}, {pipeline_mode = #tpu.pipeline_mode<synchronous>, transform_indices = @transform_8, window_bounds = array<i64: 64, 16>}, {pipeline_mode = #tpu.pipeline_mode<synchronous>, transform_indices = @transform_9, window_bounds = array<i64: 1, 16>}, {pipeline_mode = #tpu.pipeline_mode<synchronous>, transform_indices = @transform_10, window_bounds = array<i64: 16, 64>}, {pipeline_mode = #tpu.pipeline_mode<synchronous>, transform_indices = @transform_11, window_bounds = array<i64: 1, 64>}, {pipeline_mode = #tpu.pipeline_mode<synchronous>, transform_indices = @transform_12, window_bounds = array<i64: 3, 192, 64>}, {pipeline_mode = #tpu.pipeline_mode<synchronous>, transform_indices = @transform_13, window_bounds = array<i64: 1, 64>}, {transform_indices = @transform_14, window_bounds = array<i64: 1, 256, 64>}]} {
    %c0 = arith.constant 0 : index
    %c0_0 = arith.constant 0 : index
    %c0_1 = arith.constant 0 : index
    %0 = vector.load %arg1[%c0, %c0_0, %c0_1] : memref<1x256x16xf32, #tpu.memory_space<vmem>>, vector<1x256x16xf32>
    %1 = vector.shape_cast %0 : vector<1x256x16xf32> to vector<256x16xf32>
    %c0_2 = arith.constant 0 : index
    %c0_3 = arith.constant 0 : index
    %2 = vector.load %arg3[%c0_2, %c0_3] : memref<16x64xf32, #tpu.memory_space<vmem>>, vector<16x64xf32>
    %cst = arith.constant dense<0.000000e+00> : vector<256x64xf32>
    %3 = tpu.matmul %1, %2, %cst {dimension_numbers = #tpu.dot_dimension_numbers<[1], [0], [0], [1], [0, 0, 1, 1], [], []>} : vector<256x16xf32>, vector<16x64xf32>, vector<256x64xf32> -> vector<256x64xf32>
    %c0_4 = arith.constant 0 : index
    %c0_5 = arith.constant 0 : index
    %4 = vector.load %arg4[%c0_4, %c0_5] : memref<1x64xf32, #tpu.memory_space<vmem>>, vector<1x64xf32>
    %5 = vector.broadcast %4 : vector<1x64xf32> to vector<256x64xf32>
    %6 = arith.addf %3, %5 : vector<256x64xf32>
    %cst_6 = arith.constant 0.000000e+00 : f32
    %7 = vector.broadcast %cst_6 : f32 to vector<256x64xf32>
    %8 = arith.maximumf %6, %7 : vector<256x64xf32>
    %c0_7 = arith.constant 0 : index
    %c0_8 = arith.constant 0 : index
    %9 = vector.load %arg5[%c0_7, %c0_8] : memref<64x16xf32, #tpu.memory_space<vmem>>, vector<64x16xf32>
    %cst_9 = arith.constant dense<0.000000e+00> : vector<256x16xf32>
    %10 = tpu.matmul %8, %9, %cst_9 {dimension_numbers = #tpu.dot_dimension_numbers<[1], [0], [0], [1], [0, 0, 1, 1], [], []>} : vector<256x64xf32>, vector<64x16xf32>, vector<256x16xf32> -> vector<256x16xf32>
    %c0_10 = arith.constant 0 : index
    %c0_11 = arith.constant 0 : index
    %11 = vector.load %arg6[%c0_10, %c0_11] : memref<1x16xf32, #tpu.memory_space<vmem>>, vector<1x16xf32>
    %12 = vector.broadcast %11 : vector<1x16xf32> to vector<256x16xf32>
    %13 = arith.addf %10, %12 : vector<256x16xf32>
    %cst_12 = arith.constant 0.000000e+00 : f32
    %14 = vector.broadcast %cst_12 : f32 to vector<256x16xf32>
    %15 = arith.maximumf %13, %14 : vector<256x16xf32>
    %c0_13 = arith.constant 0 : index
    %c0_14 = arith.constant 0 : index
    %16 = vector.load %arg7[%c0_13, %c0_14] : memref<16x64xf32, #tpu.memory_space<vmem>>, vector<16x64xf32>
    %cst_15 = arith.constant dense<0.000000e+00> : vector<256x64xf32>
    %17 = tpu.matmul %15, %16, %cst_15 {dimension_numbers = #tpu.dot_dimension_numbers<[1], [0], [0], [1], [0, 0, 1, 1], [], []>} : vector<256x16xf32>, vector<16x64xf32>, vector<256x64xf32> -> vector<256x64xf32>
    %c0_16 = arith.constant 0 : index
    %c0_17 = arith.constant 0 : index
    %18 = vector.load %arg8[%c0_16, %c0_17] : memref<1x64xf32, #tpu.memory_space<vmem>>, vector<1x64xf32>
    %19 = vector.broadcast %18 : vector<1x64xf32> to vector<256x64xf32>
    %20 = arith.addf %17, %19 : vector<256x64xf32>
    %cst_18 = arith.constant 0.000000e+00 : f32
    %21 = vector.broadcast %cst_18 : f32 to vector<256x64xf32>
    %22 = arith.subf %21, %20 : vector<256x64xf32>
    %23 = math.exp %22 : vector<256x64xf32>
    %cst_19 = arith.constant 1.000000e+00 : f32
    %24 = vector.broadcast %cst_19 : f32 to vector<256x64xf32>
    %25 = arith.addf %24, %23 : vector<256x64xf32>
    %cst_20 = arith.constant 1.000000e+00 : f32
    %26 = vector.broadcast %cst_20 : f32 to vector<256x64xf32>
    %27 = arith.divf %26, %25 : vector<256x64xf32>
    %c0_21 = arith.constant 0 : index
    %c0_22 = arith.constant 0 : index
    %c0_23 = arith.constant 0 : index
    %28 = vector.load %arg2[%c0_21, %c0_22, %c0_23] : memref<1x256x64xf32, #tpu.memory_space<vmem>>, vector<1x256x64xf32>
    %29 = vector.shape_cast %28 : vector<1x256x64xf32> to vector<256x64xf32>
    %c0_24 = arith.constant 0 : index
    %c0_25 = arith.constant 0 : index
    %30 = vector.load %arg9[%c0_24, %c0_25] : memref<64x16xf32, #tpu.memory_space<vmem>>, vector<64x16xf32>
    %cst_26 = arith.constant dense<0.000000e+00> : vector<256x16xf32>
    %31 = tpu.matmul %29, %30, %cst_26 {dimension_numbers = #tpu.dot_dimension_numbers<[1], [0], [0], [1], [0, 0, 1, 1], [], []>} : vector<256x64xf32>, vector<64x16xf32>, vector<256x16xf32> -> vector<256x16xf32>
    %c0_27 = arith.constant 0 : index
    %c0_28 = arith.constant 0 : index
    %32 = vector.load %arg10[%c0_27, %c0_28] : memref<1x16xf32, #tpu.memory_space<vmem>>, vector<1x16xf32>
    %33 = vector.broadcast %32 : vector<1x16xf32> to vector<256x16xf32>
    %34 = arith.addf %31, %33 : vector<256x16xf32>
    %cst_29 = arith.constant 0.000000e+00 : f32
    %35 = vector.broadcast %cst_29 : f32 to vector<256x16xf32>
    %36 = arith.maximumf %34, %35 : vector<256x16xf32>
    %c0_30 = arith.constant 0 : index
    %c0_31 = arith.constant 0 : index
    %37 = vector.load %arg11[%c0_30, %c0_31] : memref<16x64xf32, #tpu.memory_space<vmem>>, vector<16x64xf32>
    %cst_32 = arith.constant dense<0.000000e+00> : vector<256x64xf32>
    %38 = tpu.matmul %36, %37, %cst_32 {dimension_numbers = #tpu.dot_dimension_numbers<[1], [0], [0], [1], [0, 0, 1, 1], [], []>} : vector<256x16xf32>, vector<16x64xf32>, vector<256x64xf32> -> vector<256x64xf32>
    %c0_33 = arith.constant 0 : index
    %c0_34 = arith.constant 0 : index
    %39 = vector.load %arg12[%c0_33, %c0_34] : memref<1x64xf32, #tpu.memory_space<vmem>>, vector<1x64xf32>
    %40 = vector.broadcast %39 : vector<1x64xf32> to vector<256x64xf32>
    %41 = arith.addf %38, %40 : vector<256x64xf32>
    %cst_35 = arith.constant 0.000000e+00 : f32
    %42 = vector.broadcast %cst_35 : f32 to vector<256x64xf32>
    %43 = arith.subf %42, %41 : vector<256x64xf32>
    %44 = math.exp %43 : vector<256x64xf32>
    %cst_36 = arith.constant 1.000000e+00 : f32
    %45 = vector.broadcast %cst_36 : f32 to vector<256x64xf32>
    %46 = arith.addf %45, %44 : vector<256x64xf32>
    %cst_37 = arith.constant 1.000000e+00 : f32
    %47 = vector.broadcast %cst_37 : f32 to vector<256x64xf32>
    %48 = arith.divf %47, %46 : vector<256x64xf32>
    %49 = arith.mulf %29, %27 : vector<256x64xf32>
    %50 = arith.mulf %8, %48 : vector<256x64xf32>
    %51 = arith.addf %49, %50 : vector<256x64xf32>
    %52 = tpu.iota {dimensions = array<i32: 0>} : vector<256x64xi32>
    %c16_i32 = arith.constant 16 : i32
    %c0_i32 = arith.constant 0 : i32
    %53 = arith.cmpi eq, %c16_i32, %c0_i32 : i32
    %c1_i32 = arith.constant 1 : i32
    %54 = arith.select %53, %c1_i32, %c16_i32 : i32
    %55 = vector.broadcast %54 : i32 to vector<256x64xi32>
    %56 = arith.remsi %52, %55 : vector<256x64xi32>
    %c0_i32_38 = arith.constant 0 : i32
    %57 = vector.broadcast %c0_i32_38 : i32 to vector<256x64xi32>
    %58 = arith.cmpi ne, %56, %57 : vector<256x64xi32>
    %c0_i32_39 = arith.constant 0 : i32
    %59 = vector.broadcast %c0_i32_39 : i32 to vector<256x64xi32>
    %60 = arith.cmpi slt, %56, %59 : vector<256x64xi32>
    %c0_i32_40 = arith.constant 0 : i32
    %61 = arith.cmpi slt, %54, %c0_i32_40 : i32
    %62 = vector.broadcast %61 : i1 to vector<256x64xi1>
    %63 = vector.broadcast %62 : vector<256x64xi1> to vector<256x64xi1>
    %64 = arith.xori %60, %63 : vector<256x64xi1>
    %65 = arith.andi %64, %58 : vector<256x64xi1>
    %66 = vector.broadcast %54 : i32 to vector<256x64xi32>
    %67 = arith.addi %56, %66 : vector<256x64xi32>
    %68 = arith.select %65, %67, %56 : vector<256x64xi1>, vector<256x64xi32>
    %c1_i32_41 = arith.constant 1 : i32
    %69 = vector.broadcast %c1_i32_41 : i32 to vector<256x64xi32>
    %70 = arith.cmpi sge, %68, %69 : vector<256x64xi32>
    %c1_i32_42 = arith.constant 1 : i32
    %71 = tpu.dynamic_rotate %51 by %c1_i32_42 dim 0 : vector<256x64xf32>, i32 -> vector<256x64xf32>
    %cst_43 = arith.constant 0.000000e+00 : f32
    %72 = vector.broadcast %cst_43 : f32 to vector<256x64xf32>
    %73 = arith.select %70, %71, %72 : vector<256x64xi1>, vector<256x64xf32>
    %c14_i32 = arith.constant 14 : i32
    %74 = vector.broadcast %c14_i32 : i32 to vector<256x64xi32>
    %75 = arith.cmpi sle, %68, %74 : vector<256x64xi32>
    %c255_i32 = arith.constant 255 : i32
    %76 = tpu.dynamic_rotate %51 by %c255_i32 dim 0 : vector<256x64xf32>, i32 -> vector<256x64xf32>
    %cst_44 = arith.constant 0.000000e+00 : f32
    %77 = vector.broadcast %cst_44 : f32 to vector<256x64xf32>
    %78 = arith.select %75, %76, %77 : vector<256x64xi1>, vector<256x64xf32>
    %79 = tpu.concatenate %73, %51, %78 in 1 : vector<256x64xf32>, vector<256x64xf32>, vector<256x64xf32> -> vector<256x192xf32>
    %cst_45 = arith.constant 0.000000e+00 : f32
    %80 = vector.broadcast %cst_45 : f32 to vector<16x192xf32>
    %81 = vector.extract_strided_slice %79 {offsets = [0, 0], sizes = [240, 192], strides = [1, 1]} : vector<256x192xf32> to vector<240x192xf32>
    %82 = tpu.concatenate %80, %81 in 0 : vector<16x192xf32>, vector<240x192xf32> -> vector<256x192xf32>
    %83 = vector.extract_strided_slice %79 {offsets = [16, 0], sizes = [240, 192], strides = [1, 1]} : vector<256x192xf32> to vector<240x192xf32>
    %84 = tpu.concatenate %83, %80 in 0 : vector<240x192xf32>, vector<16x192xf32> -> vector<256x192xf32>
    %c0_46 = arith.constant 0 : index
    %c0_47 = arith.constant 0 : index
    %c0_48 = arith.constant 0 : index
    %85 = vector.load %arg13[%c0_46, %c0_47, %c0_48] : memref<3x192x64xf32, #tpu.memory_space<vmem>>, vector<1x192x64xf32>
    %86 = vector.shape_cast %85 : vector<1x192x64xf32> to vector<192x64xf32>
    %cst_49 = arith.constant dense<0.000000e+00> : vector<256x64xf32>
    %87 = tpu.matmul %82, %86, %cst_49 {dimension_numbers = #tpu.dot_dimension_numbers<[1], [0], [0], [1], [0, 0, 1, 1], [], []>} : vector<256x192xf32>, vector<192x64xf32>, vector<256x64xf32> -> vector<256x64xf32>
    %c1 = arith.constant 1 : index
    %c0_50 = arith.constant 0 : index
    %c0_51 = arith.constant 0 : index
    %88 = vector.load %arg13[%c1, %c0_50, %c0_51] : memref<3x192x64xf32, #tpu.memory_space<vmem>>, vector<1x192x64xf32>
    %89 = vector.shape_cast %88 : vector<1x192x64xf32> to vector<192x64xf32>
    %cst_52 = arith.constant dense<0.000000e+00> : vector<256x64xf32>
    %90 = tpu.matmul %79, %89, %cst_52 {dimension_numbers = #tpu.dot_dimension_numbers<[1], [0], [0], [1], [0, 0, 1, 1], [], []>} : vector<256x192xf32>, vector<192x64xf32>, vector<256x64xf32> -> vector<256x64xf32>
    %91 = arith.addf %87, %90 : vector<256x64xf32>
    %c2 = arith.constant 2 : index
    %c0_53 = arith.constant 0 : index
    %c0_54 = arith.constant 0 : index
    %92 = vector.load %arg13[%c2, %c0_53, %c0_54] : memref<3x192x64xf32, #tpu.memory_space<vmem>>, vector<1x192x64xf32>
    %93 = vector.shape_cast %92 : vector<1x192x64xf32> to vector<192x64xf32>
    %cst_55 = arith.constant dense<0.000000e+00> : vector<256x64xf32>
    %94 = tpu.matmul %84, %93, %cst_55 {dimension_numbers = #tpu.dot_dimension_numbers<[1], [0], [0], [1], [0, 0, 1, 1], [], []>} : vector<256x192xf32>, vector<192x64xf32>, vector<256x64xf32> -> vector<256x64xf32>
    %95 = arith.addf %91, %94 : vector<256x64xf32>
    %c0_56 = arith.constant 0 : index
    %c0_57 = arith.constant 0 : index
    %96 = vector.load %arg14[%c0_56, %c0_57] : memref<1x64xf32, #tpu.memory_space<vmem>>, vector<1x64xf32>
    %97 = vector.broadcast %96 : vector<1x64xf32> to vector<256x64xf32>
    %98 = arith.addf %95, %97 : vector<256x64xf32>
    %cst_58 = arith.constant 0.000000e+00 : f32
    %99 = vector.broadcast %cst_58 : f32 to vector<256x64xf32>
    %100 = arith.maximumf %98, %99 : vector<256x64xf32>
    %c0_59 = arith.constant 0 : index
    %c0_60 = arith.constant 0 : index
    %c0_61 = arith.constant 0 : index
    %101 = vector.load %arg15[%c0_59, %c0_60, %c0_61] : memref<1x256x64xf32, #tpu.memory_space<vmem>>, vector<1x256x64xf32>
    %102 = vector.shape_cast %101 : vector<1x256x64xf32> to vector<256x64xf32>
    %103 = vector.shape_cast %100 : vector<256x64xf32> to vector<1x256x64xf32>
    tpu.vector_store %arg15[%c0_59, %c0_60, %c0_61], %103 {strides = array<i32>} : memref<1x256x64xf32, #tpu.memory_space<vmem>>, vector<1x256x64xf32>,
    return
  }
  func.func @transform_0(%arg0: i32) -> (i32, i32, i32) {
    %c0_i32 = arith.constant 0 : i32
    %c0_i32_0 = arith.constant 0 : i32
    %c0_i32_1 = arith.constant 0 : i32
    return %arg0, %c0_i32, %c0_i32_0 : i32, i32, i32
  }
  func.func @transform_1(%arg0: i32) -> (i32, i32, i32) {
    %c0_i32 = arith.constant 0 : i32
    %c0_i32_0 = arith.constant 0 : i32
    %c0_i32_1 = arith.constant 0 : i32
    return %arg0, %c0_i32, %c0_i32_0 : i32, i32, i32
  }
  func.func @transform_2(%arg0: i32) -> (i32, i32) {
    %c0_i32 = arith.constant 0 : i32
    %c0_i32_0 = arith.constant 0 : i32
    %c0_i32_1 = arith.constant 0 : i32
    return %c0_i32, %c0_i32_0 : i32, i32
  }
  func.func @transform_3(%arg0: i32) -> (i32, i32) {
    %c0_i32 = arith.constant 0 : i32
    %c0_i32_0 = arith.constant 0 : i32
    %c0_i32_1 = arith.constant 0 : i32
    return %c0_i32, %c0_i32_0 : i32, i32
  }
  func.func @transform_4(%arg0: i32) -> (i32, i32) {
    %c0_i32 = arith.constant 0 : i32
    %c0_i32_0 = arith.constant 0 : i32
    %c0_i32_1 = arith.constant 0 : i32
    return %c0_i32, %c0_i32_0 : i32, i32
  }
  func.func @transform_5(%arg0: i32) -> (i32, i32) {
    %c0_i32 = arith.constant 0 : i32
    %c0_i32_0 = arith.constant 0 : i32
    %c0_i32_1 = arith.constant 0 : i32
    return %c0_i32, %c0_i32_0 : i32, i32
  }
  func.func @transform_6(%arg0: i32) -> (i32, i32) {
    %c0_i32 = arith.constant 0 : i32
    %c0_i32_0 = arith.constant 0 : i32
    %c0_i32_1 = arith.constant 0 : i32
    return %c0_i32, %c0_i32_0 : i32, i32
  }
  func.func @transform_7(%arg0: i32) -> (i32, i32) {
    %c0_i32 = arith.constant 0 : i32
    %c0_i32_0 = arith.constant 0 : i32
    %c0_i32_1 = arith.constant 0 : i32
    return %c0_i32, %c0_i32_0 : i32, i32
  }
  func.func @transform_8(%arg0: i32) -> (i32, i32) {
    %c0_i32 = arith.constant 0 : i32
    %c0_i32_0 = arith.constant 0 : i32
    %c0_i32_1 = arith.constant 0 : i32
    return %c0_i32, %c0_i32_0 : i32, i32
  }
  func.func @transform_9(%arg0: i32) -> (i32, i32) {
    %c0_i32 = arith.constant 0 : i32
    %c0_i32_0 = arith.constant 0 : i32
    %c0_i32_1 = arith.constant 0 : i32
    return %c0_i32, %c0_i32_0 : i32, i32
  }
  func.func @transform_10(%arg0: i32) -> (i32, i32) {
    %c0_i32 = arith.constant 0 : i32
    %c0_i32_0 = arith.constant 0 : i32
    %c0_i32_1 = arith.constant 0 : i32
    return %c0_i32, %c0_i32_0 : i32, i32
  }
  func.func @transform_11(%arg0: i32) -> (i32, i32) {
    %c0_i32 = arith.constant 0 : i32
    %c0_i32_0 = arith.constant 0 : i32
    %c0_i32_1 = arith.constant 0 : i32
    return %c0_i32, %c0_i32_0 : i32, i32
  }
  func.func @transform_12(%arg0: i32) -> (i32, i32, i32) {
    %c0_i32 = arith.constant 0 : i32
    %c0_i32_0 = arith.constant 0 : i32
    %c0_i32_1 = arith.constant 0 : i32
    %c0_i32_2 = arith.constant 0 : i32
    return %c0_i32, %c0_i32_0, %c0_i32_1 : i32, i32, i32
  }
  func.func @transform_13(%arg0: i32) -> (i32, i32) {
    %c0_i32 = arith.constant 0 : i32
    %c0_i32_0 = arith.constant 0 : i32
    %c0_i32_1 = arith.constant 0 : i32
    return %c0_i32, %c0_i32_0 : i32, i32
  }
  func.func @transform_14(%arg0: i32) -> (i32, i32, i32) {
    %c0_i32 = arith.constant 0 : i32
    %c0_i32_0 = arith.constant 0 : i32
    %c0_i32_1 = arith.constant 0 : i32
    return %arg0, %c0_i32, %c0_i32_0 : i32, i32, i32
  }
}

</mosaic_0001>

<llo_original>
// kernel: tpu_custom_call.1
$region0: #{tpu_custom_call.1}
  #allocation0 [shape = 'u32[]', space=smem, size = 0x4, offset = 0x4, fixed_abs, tag = 'smem constant byte address 0x4 - core index']
  #allocation1 [shape = 'u32[72,128]{1,0:T(1,128)}', space=vmem, size = 0x9000, scoped, tag = 'internal scratch']
  %s0 = inlined_call_operand.vmem [shape: f32[2,256,16], index: 0, kind: input, shape index: {}]
  %s1 = inlined_call_operand.vmem [shape: f32[2,256,64], index: 1, kind: input, shape index: {}]
  %s2 = inlined_call_operand.vmem [shape: f32[16,64], index: 2, kind: input, shape index: {}]
  %s3 = inlined_call_operand.vmem [shape: f32[1,64], index: 3, kind: input, shape index: {}]
  %s4 = inlined_call_operand.vmem [shape: f32[64,16], index: 4, kind: input, shape index: {}]
  %s5 = inlined_call_operand.vmem [shape: f32[1,16], index: 5, kind: input, shape index: {}]
  %s6 = inlined_call_operand.vmem [shape: f32[16,64], index: 6, kind: input, shape index: {}]
  %s7 = inlined_call_operand.vmem [shape: f32[1,64], index: 7, kind: input, shape index: {}]
  %s8 = inlined_call_operand.vmem [shape: f32[64,16], index: 8, kind: input, shape index: {}]
  %s9 = inlined_call_operand.vmem [shape: f32[1,16], index: 9, kind: input, shape index: {}]
  %s10 = inlined_call_operand.vmem [shape: f32[16,64], index: 10, kind: input, shape index: {}]
  %s11 = inlined_call_operand.vmem [shape: f32[1,64], index: 11, kind: input, shape index: {}]
  %s12 = inlined_call_operand.vmem [shape: f32[3,192,64], index: 12, kind: input, shape index: {}]
  %s13 = inlined_call_operand.vmem [shape: f32[1,64], index: 13, kind: input, shape index: {}]
  %s14 = inlined_call_operand.vmem [shape: f32[2,256,64], index: 14, kind: output, shape index: {}]
  %s15 = sld [smem:[#allocation0]]
  $region89: #{tpu_custom_call.1} parent=0
    _
  %s17 = ssub.s32 1, %s15
  %s18 = scalar_select 0, %s17, %s15
  loop: start=0, step=1, limit=4
  $region2: #{tpu_custom_call.1} parent=0 // loop_pre_header
    _
  $region3: #{tpu_custom_call.1} parent=0 // loop_header
    %s20 = sphi 0, %s24
    %p21 = scmp.ge.s32.totalorder %s20, 4
    %s30 = sphi 0, %s32
    %s33 = sphi 0, %s30
    %s34 = sphi 0, %s33
    %s50 = sphi 0, %s34
    %s56 = sphi 0, %s58
    %s59 = sphi 0, %s56
    %s60 = sphi 0, %s59
    %s76 = sphi 0, %s60
    %s80 = sphi 0, %s80
    %s82 = sphi 0, %s80
    %s83 = sphi 0, %s82
    %s97 = sphi 0, %s83
    %s101 = sphi 0, %s101
    %s103 = sphi 0, %s101
    %s104 = sphi 0, %s103
    %s118 = sphi 0, %s104
    %s122 = sphi 0, %s122
    %s124 = sphi 0, %s122
    %s125 = sphi 0, %s124
    %s139 = sphi 0, %s125
    %s143 = sphi 0, %s143
    %s145 = sphi 0, %s143
    %s146 = sphi 0, %s145
    %s160 = sphi 0, %s146
    %s164 = sphi 0, %s164
    %s166 = sphi 0, %s164
    %s167 = sphi 0, %s166
    %s181 = sphi 0, %s167
    %s185 = sphi 0, %s185
    %s187 = sphi 0, %s185
    %s188 = sphi 0, %s187
    %s202 = sphi 0, %s188
    %s206 = sphi 0, %s206
    %s208 = sphi 0, %s206
    %s209 = sphi 0, %s208
    %s223 = sphi 0, %s209
    %s227 = sphi 0, %s227
    %s229 = sphi 0, %s227
    %s230 = sphi 0, %s229
    %s244 = sphi 0, %s230
    %s248 = sphi 0, %s248
    %s250 = sphi 0, %s248
    %s251 = sphi 0, %s250
    %s265 = sphi 0, %s251
    %s269 = sphi 0, %s269
    %s271 = sphi 0, %s269
    %s272 = sphi 0, %s271
    %s286 = sphi 0, %s272
    %s290 = sphi 0, %s290
    %s292 = sphi 0, %s290
    %s293 = sphi 0, %s292
    %s307 = sphi 0, %s293
    %s311 = sphi 0, %s311
    %s313 = sphi 0, %s311
    %s314 = sphi 0, %s313
    %s328 = sphi 0, %s314
    %s334 = sphi 0, %s336
    %s337 = sphi 0, %s334
    %s338 = sphi 0, %s337
    %s354 = sphi 0, %s338
  $region4: #{tpu_custom_call.1} parent=0 // loop_header_branch
    %23 = sbr.rel (%p21) target = $region8
  $region5: #{tpu_custom_call.1} parent=0 // loop_body
    %s25 = ssub.s32 %s20, 1
    %s26 = ssub.s32 %s20, 2
    %s27 = sadd.s32 %s20, 1
    %s28 = ssub.s32 %s20, %s27
    %p29 = scmp.eq.s32.totalorder %s28, 0
    %s31 = sadd.s32 %s30, 1
    %s32 = scalar_select %p29, %s30, %s31
    %p35 = pneg %p29
    %p36 = scmp.eq.s32.totalorder %s20, 1
    %p37 = por %p35, %p36
    %p38 = scmp.ne.s32.totalorder %s30, %s33
    %p39 = scmp.eq.s32.totalorder %s20, 0
    %p40 = por %p38, %p39
    %p41 = scmp.ne.s32.totalorder %s30, %s33
    %p42 = scmp.eq.s32.totalorder %s25, 1
    %p43 = por %p41, %p42
    %p44 = scmp.ne.s32.totalorder %s33, %s34
    %p45 = scmp.eq.s32.totalorder %s25, 0
    %p46 = por %p44, %p45
    %p47 = scmp.ne.s32.totalorder %s33, %s34
    %p48 = scmp.eq.s32.totalorder %s26, 1
    %p49 = por %p47, %p48
    %p51 = scmp.ne.s32.totalorder %s34, %s50
    %p52 = scmp.eq.s32.totalorder %s26, 0
    %p53 = por %p51, %p52
    %s54 = ssub.s32 %s20, %s27
    %p55 = scmp.eq.s32.totalorder %s54, 0
    %s57 = sadd.s32 %s56, 1
    %s58 = scalar_select %p55, %s56, %s57
    %p61 = pneg %p55
    %p62 = scmp.eq.s32.totalorder %s20, 1
    %p63 = por %p61, %p62
    %p64 = scmp.ne.s32.totalorder %s56, %s59
    %p65 = scmp.eq.s32.totalorder %s20, 0
    %p66 = por %p64, %p65
    %p67 = scmp.ne.s32.totalorder %s56, %s59
    %p68 = scmp.eq.s32.totalorder %s25, 1
    %p69 = por %p67, %p68
    %p70 = scmp.ne.s32.totalorder %s59, %s60
    %p71 = scmp.eq.s32.totalorder %s25, 0
    %p72 = por %p70, %p71
    %p73 = scmp.ne.s32.totalorder %s59, %s60
    %p74 = scmp.eq.s32.totalorder %s26, 1
    %p75 = por %p73, %p74
    %p77 = scmp.ne.s32.totalorder %s60, %s76
    %p78 = scmp.eq.s32.totalorder %s26, 0
    %p79 = por %p77, %p78
    %s81 = sadd.s32 %s80, 1
    %p84 = scmp.eq.s32.totalorder %s20, 1
    %p85 = scmp.ne.s32.totalorder %s80, %s82
    %p86 = scmp.eq.s32.totalorder %s20, 0
    %p87 = por %p85, %p86
    %p88 = scmp.ne.s32.totalorder %s80, %s82
    %p89 = scmp.eq.s32.totalorder %s25, 1
    %p90 = por %p88, %p89
    %p91 = scmp.ne.s32.totalorder %s82, %s83
    %p92 = scmp.eq.s32.totalorder %s25, 0
    %p93 = por %p91, %p92
    %p94 = scmp.ne.s32.totalorder %s82, %s83
    %p95 = scmp.eq.s32.totalorder %s26, 1
    %p96 = por %p94, %p95
    %p98 = scmp.ne.s32.totalorder %s83, %s97
    %p99 = scmp.eq.s32.totalorder %s26, 0
    %p100 = por %p98, %p99
    %s102 = sadd.s32 %s101, 1
    %p105 = scmp.eq.s32.totalorder %s20, 1
    %p106 = scmp.ne.s32.totalorder %s101, %s103
    %p107 = scmp.eq.s32.totalorder %s20, 0
    %p108 = por %p106, %p107
    %p109 = scmp.ne.s32.totalorder %s101, %s103
    %p110 = scmp.eq.s32.totalorder %s25, 1
    %p111 = por %p109, %p110
    %p112 = scmp.ne.s32.totalorder %s103, %s104
    %p113 = scmp.eq.s32.totalorder %s25, 0
    %p114 = por %p112, %p113
    %p115 = scmp.ne.s32.totalorder %s103, %s104
    %p116 = scmp.eq.s32.totalorder %s26, 1
    %p117 = por %p115, %p116
    %p119 = scmp.ne.s32.totalorder %s104, %s118
    %p120 = scmp.eq.s32.totalorder %s26, 0
    %p121 = por %p119, %p120
    %s123 = sadd.s32 %s122, 1
    %p126 = scmp.eq.s32.totalorder %s20, 1
    %p127 = scmp.ne.s32.totalorder %s122, %s124
    %p128 = scmp.eq.s32.totalorder %s20, 0
    %p129 = por %p127, %p128
    %p130 = scmp.ne.s32.totalorder %s122, %s124
    %p131 = scmp.eq.s32.totalorder %s25, 1
    %p132 = por %p130, %p131
    %p133 = scmp.ne.s32.totalorder %s124, %s125
    %p134 = scmp.eq.s32.totalorder %s25, 0
    %p135 = por %p133, %p134
    %p136 = scmp.ne.s32.totalorder %s124, %s125
    %p137 = scmp.eq.s32.totalorder %s26, 1
    %p138 = por %p136, %p137
    %p140 = scmp.ne.s32.totalorder %s125, %s139
    %p141 = scmp.eq.s32.totalorder %s26, 0
    %p142 = por %p140, %p141
    %s144 = sadd.s32 %s143, 1
    %p147 = scmp.eq.s32.totalorder %s20, 1
    %p148 = scmp.ne.s32.totalorder %s143, %s145
    %p149 = scmp.eq.s32.totalorder %s20, 0
    %p150 = por %p148, %p149
    %p151 = scmp.ne.s32.totalorder %s143, %s145
    %p152 = scmp.eq.s32.totalorder %s25, 1
    %p153 = por %p151, %p152
    %p154 = scmp.ne.s32.totalorder %s145, %s146
    %p155 = scmp.eq.s32.totalorder %s25, 0
    %p156 = por %p154, %p155
    %p157 = scmp.ne.s32.totalorder %s145, %s146
    %p158 = scmp.eq.s32.totalorder %s26, 1
    %p159 = por %p157, %p158
    %p161 = scmp.ne.s32.totalorder %s146, %s160
    %p162 = scmp.eq.s32.totalorder %s26, 0
    %p163 = por %p161, %p162
    %s165 = sadd.s32 %s164, 1
    %p168 = scmp.eq.s32.totalorder %s20, 1
    %p169 = scmp.ne.s32.totalorder %s164, %s166
    %p170 = scmp.eq.s32.totalorder %s20, 0
    %p171 = por %p169, %p170
    %p172 = scmp.ne.s32.totalorder %s164, %s166
    %p173 = scmp.eq.s32.totalorder %s25, 1
    %p174 = por %p172, %p173
    %p175 = scmp.ne.s32.totalorder %s166, %s167
    %p176 = scmp.eq.s32.totalorder %s25, 0
    %p177 = por %p175, %p176
    %p178 = scmp.ne.s32.totalorder %s166, %s167
    %p179 = scmp.eq.s32.totalorder %s26, 1
    %p180 = por %p178, %p179
    %p182 = scmp.ne.s32.totalorder %s167, %s181
    %p183 = scmp.eq.s32.totalorder %s26, 0
    %p184 = por %p182, %p183
    %s186 = sadd.s32 %s185, 1
    %p189 = scmp.eq.s32.totalorder %s20, 1
    %p190 = scmp.ne.s32.totalorder %s185, %s187
    %p191 = scmp.eq.s32.totalorder %s20, 0
    %p192 = por %p190, %p191
    %p193 = scmp.ne.s32.totalorder %s185, %s187
    %p194 = scmp.eq.s32.totalorder %s25, 1
    %p195 = por %p193, %p194
    %p196 = scmp.ne.s32.totalorder %s187, %s188
    %p197 = scmp.eq.s32.totalorder %s25, 0
    %p198 = por %p196, %p197
    %p199 = scmp.ne.s32.totalorder %s187, %s188
    %p200 = scmp.eq.s32.totalorder %s26, 1
    %p201 = por %p199, %p200
    %p203 = scmp.ne.s32.totalorder %s188, %s202
    %p204 = scmp.eq.s32.totalorder %s26, 0
    %p205 = por %p203, %p204
    %s207 = sadd.s32 %s206, 1
    %p210 = scmp.eq.s32.totalorder %s20, 1
    %p211 = scmp.ne.s32.totalorder %s206, %s208
    %p212 = scmp.eq.s32.totalorder %s20, 0
    %p213 = por %p211, %p212
    %p214 = scmp.ne.s32.totalorder %s206, %s208
    %p215 = scmp.eq.s32.totalorder %s25, 1
    %p216 = por %p214, %p215
    %p217 = scmp.ne.s32.totalorder %s208, %s209
    %p218 = scmp.eq.s32.totalorder %s25, 0
    %p219 = por %p217, %p218
    %p220 = scmp.ne.s32.totalorder %s208, %s209
    %p221 = scmp.eq.s32.totalorder %s26, 1
    %p222 = por %p220, %p221
    %p224 = scmp.ne.s32.totalorder %s209, %s223
    %p225 = scmp.eq.s32.totalorder %s26, 0
    %p226 = por %p224, %p225
    %s228 = sadd.s32 %s227, 1
    %p231 = scmp.eq.s32.totalorder %s20, 1
    %p232 = scmp.ne.s32.totalorder %s227, %s229
    %p233 = scmp.eq.s32.totalorder %s20, 0
    %p234 = por %p232, %p233
    %p235 = scmp.ne.s32.totalorder %s227, %s229
    %p236 = scmp.eq.s32.totalorder %s25, 1
    %p237 = por %p235, %p236
    %p238 = scmp.ne.s32.totalorder %s229, %s230
    %p239 = scmp.eq.s32.totalorder %s25, 0
    %p240 = por %p238, %p239
    %p241 = scmp.ne.s32.totalorder %s229, %s230
    %p242 = scmp.eq.s32.totalorder %s26, 1
    %p243 = por %p241, %p242
    %p245 = scmp.ne.s32.totalorder %s230, %s244
    %p246 = scmp.eq.s32.totalorder %s26, 0
    %p247 = por %p245, %p246
    %s249 = sadd.s32 %s248, 1
    %p252 = scmp.eq.s32.totalorder %s20, 1
    %p253 = scmp.ne.s32.totalorder %s248, %s250
    %p254 = scmp.eq.s32.totalorder %s20, 0
    %p255 = por %p253, %p254
    %p256 = scmp.ne.s32.totalorder %s248, %s250
    %p257 = scmp.eq.s32.totalorder %s25, 1
    %p258 = por %p256, %p257
    %p259 = scmp.ne.s32.totalorder %s250, %s251
    %p260 = scmp.eq.s32.totalorder %s25, 0
    %p261 = por %p259, %p260
    %p262 = scmp.ne.s32.totalorder %s250, %s251
    %p263 = scmp.eq.s32.totalorder %s26, 1
    %p264 = por %p262, %p263
    %p266 = scmp.ne.s32.totalorder %s251, %s265
    %p267 = scmp.eq.s32.totalorder %s26, 0
    %p268 = por %p266, %p267
    %s270 = sadd.s32 %s269, 1
    %p273 = scmp.eq.s32.totalorder %s20, 1
    %p274 = scmp.ne.s32.totalorder %s269, %s271
    %p275 = scmp.eq.s32.totalorder %s20, 0
    %p276 = por %p274, %p275
    %p277 = scmp.ne.s32.totalorder %s269, %s271
    %p278 = scmp.eq.s32.totalorder %s25, 1
    %p279 = por %p277, %p278
    %p280 = scmp.ne.s32.totalorder %s271, %s272
    %p281 = scmp.eq.s32.totalorder %s25, 0
    %p282 = por %p280, %p281
    %p283 = scmp.ne.s32.totalorder %s271, %s272
    %p284 = scmp.eq.s32.totalorder %s26, 1
    %p285 = por %p283, %p284
    %p287 = scmp.ne.s32.totalorder %s272, %s286
    %p288 = scmp.eq.s32.totalorder %s26, 0
    %p289 = por %p287, %p288
    %s291 = sadd.s32 %s290, 1
    %p294 = scmp.eq.s32.totalorder %s20, 1
    %p295 = scmp.ne.s32.totalorder %s290, %s292
    %p296 = scmp.eq.s32.totalorder %s20, 0
    %p297 = por %p295, %p296
    %p298 = scmp.ne.s32.totalorder %s290, %s292
    %p299 = scmp.eq.s32.totalorder %s25, 1
    %p300 = por %p298, %p299
    %p301 = scmp.ne.s32.totalorder %s292, %s293
    %p302 = scmp.eq.s32.totalorder %s25, 0
    %p303 = por %p301, %p302
    %p304 = scmp.ne.s32.totalorder %s292, %s293
    %p305 = scmp.eq.s32.totalorder %s26, 1
    %p306 = por %p304, %p305
    %p308 = scmp.ne.s32.totalorder %s293, %s307
    %p309 = scmp.eq.s32.totalorder %s26, 0
    %p310 = por %p308, %p309
    %s312 = sadd.s32 %s311, 1
    %p315 = scmp.eq.s32.totalorder %s20, 1
    %p316 = scmp.ne.s32.totalorder %s311, %s313
    %p317 = scmp.eq.s32.totalorder %s20, 0
    %p318 = por %p316, %p317
    %p319 = scmp.ne.s32.totalorder %s311, %s313
    %p320 = scmp.eq.s32.totalorder %s25, 1
    %p321 = por %p319, %p320
    %p322 = scmp.ne.s32.totalorder %s313, %s314
    %p323 = scmp.eq.s32.totalorder %s25, 0
    %p324 = por %p322, %p323
    %p325 = scmp.ne.s32.totalorder %s313, %s314
    %p326 = scmp.eq.s32.totalorder %s26, 1
    %p327 = por %p325, %p326
    %p329 = scmp.ne.s32.totalorder %s314, %s328
    %p330 = scmp.eq.s32.totalorder %s26, 0
    %p331 = por %p329, %p330
    %s332 = ssub.s32 %s20, %s27
    %p333 = scmp.eq.s32.totalorder %s332, 0
    %s335 = sadd.s32 %s334, 1
    %s336 = scalar_select %p333, %s334, %s335
    %p339 = pneg %p333
    %p340 = scmp.eq.s32.totalorder %s20, 1
    %p341 = por %p339, %p340
    %p342 = scmp.ne.s32.totalorder %s334, %s337
    %p343 = scmp.eq.s32.totalorder %s20, 0
    %p344 = por %p342, %p343
    %p345 = scmp.ne.s32.totalorder %s334, %s337
    %p346 = scmp.eq.s32.totalorder %s25, 1
    %p347 = por %p345, %p346
    %p348 = scmp.ne.s32.totalorder %s337, %s338
    %p349 = scmp.eq.s32.totalorder %s25, 0
    %p350 = por %p348, %p349
    %p351 = scmp.ne.s32.totalorder %s337, %s338
    %p352 = scmp.eq.s32.totalorder %s26, 1
    %p353 = por %p351, %p352
    %p355 = scmp.ne.s32.totalorder %s338, %s354
    %p356 = scmp.eq.s32.totalorder %s26, 0
    %p357 = por %p355, %p356
    %p358 = scmp.le.s32.totalorder 1, %s20
    %p359 = scmp.lt.s32.totalorder %s20, 3
    %p360 = pnand %p358, %p359
    %p361 = pneg %p360
    // Predicated region
    $region9: #{tpu_custom_call.1} parent=5 // pred_check
      _
    $region10: #{tpu_custom_call.1} parent=5 // pred_check_branch
      %363 = sbr.rel (%p360) target = $region12
    $region11: #{tpu_custom_call.1} parent=5 // pred_region
      %s364 = ssub.s32 %s20, 1
      // Predicated region
      $region13: #{tpu_custom_call.1} parent=11 // pred_check
        %p365 = pneg %p93
      $region14: #{tpu_custom_call.1} parent=11 // pred_check_branch
        %367 = sbr.rel (%p365) target = $region16
      $region15: #{tpu_custom_call.1} parent=11 // pred_region
        _
      $region16: #{tpu_custom_call.1} parent=11 // pred_fallthru
        _
      // Predicated region
      $region17: #{tpu_custom_call.1} parent=11 // pred_check
        %p368 = pneg %p114
      $region18: #{tpu_custom_call.1} parent=11 // pred_check_branch
        %370 = sbr.rel (%p368) target = $region20
      $region19: #{tpu_custom_call.1} parent=11 // pred_region
        _
      $region20: #{tpu_custom_call.1} parent=11 // pred_fallthru
        _
      // Predicated region
      $region21: #{tpu_custom_call.1} parent=11 // pred_check
        %p371 = pneg %p135
      $region22: #{tpu_custom_call.1} parent=11 // pred_check_branch
        %373 = sbr.rel (%p371) target = $region24
      $region23: #{tpu_custom_call.1} parent=11 // pred_region
        _
      $region24: #{tpu_custom_call.1} parent=11 // pred_fallthru
        _
      // Predicated region
      $region25: #{tpu_custom_call.1} parent=11 // pred_check
        %p374 = pneg %p156
      $region26: #{tpu_custom_call.1} parent=11 // pred_check_branch
        %376 = sbr.rel (%p374) target = $region28
      $region27: #{tpu_custom_call.1} parent=11 // pred_region
        _
      $region28: #{tpu_custom_call.1} parent=11 // pred_fallthru
        _
      // Predicated region
      $region29: #{tpu_custom_call.1} parent=11 // pred_check
        %p377 = pneg %p177
      $region30: #{tpu_custom_call.1} parent=11 // pred_check_branch
        %379 = sbr.rel (%p377) target = $region32
      $region31: #{tpu_custom_call.1} parent=11 // pred_region
        _
      $region32: #{tpu_custom_call.1} parent=11 // pred_fallthru
        _
      // Predicated region
      $region33: #{tpu_custom_call.1} parent=11 // pred_check
        %p380 = pneg %p198
      $region34: #{tpu_custom_call.1} parent=11 // pred_check_branch
        %382 = sbr.rel (%p380) target = $region36
      $region35: #{tpu_custom_call.1} parent=11 // pred_region
        _
      $region36: #{tpu_custom_call.1} parent=11 // pred_fallthru
        _
      // Predicated region
      $region37: #{tpu_custom_call.1} parent=11 // pred_check
        %p383 = pneg %p219
      $region38: #{tpu_custom_call.1} parent=11 // pred_check_branch
        %385 = sbr.rel (%p383) target = $region40
      $region39: #{tpu_custom_call.1} parent=11 // pred_region
        _
      $region40: #{tpu_custom_call.1} parent=11 // pred_fallthru
        _
      // Predicated region
      $region41: #{tpu_custom_call.1} parent=11 // pred_check
        %p386 = pneg %p240
      $region42: #{tpu_custom_call.1} parent=11 // pred_check_branch
        %388 = sbr.rel (%p386) target = $region44
      $region43: #{tpu_custom_call.1} parent=11 // pred_region
        _
      $region44: #{tpu_custom_call.1} parent=11 // pred_fallthru
        _
      // Predicated region
      $region45: #{tpu_custom_call.1} parent=11 // pred_check
        %p389 = pneg %p261
      $region46: #{tpu_custom_call.1} parent=11 // pred_check_branch
        %391 = sbr.rel (%p389) target = $region48
      $region47: #{tpu_custom_call.1} parent=11 // pred_region
        _
      $region48: #{tpu_custom_call.1} parent=11 // pred_fallthru
        _
      // Predicated region
      $region49: #{tpu_custom_call.1} parent=11 // pred_check
        %p392 = pneg %p282
      $region50: #{tpu_custom_call.1} parent=11 // pred_check_branch
        %394 = sbr.rel (%p392) target = $region52
      $region51: #{tpu_custom_call.1} parent=11 // pred_region
        _
      $region52: #{tpu_custom_call.1} parent=11 // pred_fallthru
        _
      // Predicated region
      $region53: #{tpu_custom_call.1} parent=11 // pred_check
        %p395 = pneg %p303
      $region54: #{tpu_custom_call.1} parent=11 // pred_check_branch
        %397 = sbr.rel (%p395) target = $region56
      $region55: #{tpu_custom_call.1} parent=11 // pred_region
        _
      $region56: #{tpu_custom_call.1} parent=11 // pred_fallthru
        _
      // Predicated region
      $region57: #{tpu_custom_call.1} parent=11 // pred_check
        %p398 = pneg %p324
      $region58: #{tpu_custom_call.1} parent=11 // pred_check_branch
        %400 = sbr.rel (%p398) target = $region60
      $region59: #{tpu_custom_call.1} parent=11 // pred_region
        _
      $region60: #{tpu_custom_call.1} parent=11 // pred_fallthru
        _
    $region12: #{tpu_custom_call.1} parent=5 // pred_fallthru
      _
    %p401 = scmp.lt.s32.totalorder %s20, 2
    // Predicated region
    $region61: #{tpu_custom_call.1} parent=5 // pred_check
      %p402 = pneg %p401
    $region62: #{tpu_custom_call.1} parent=5 // pred_check_branch
      %404 = sbr.rel (%p402) target = $region64
    $region63: #{tpu_custom_call.1} parent=5 // pred_region
      // Predicated region
      $region65: #{tpu_custom_call.1} parent=63 // pred_check
        %p405 = pneg %p40
      $region66: #{tpu_custom_call.1} parent=63 // pred_check_branch
        %407 = sbr.rel (%p405) target = $region68
      $region67: #{tpu_custom_call.1} parent=63 // pred_region
        %p408 = scmp.lt.s32.totalorder %s20, 1
        %s409 = scalar_select %p408, %s20, 1
        %s410 = smul.addr %s409, 32
        %s411 = smul.addr %s410, 8
        %s412 = scalar_lea.vmem %s0, %s411
      $region68: #{tpu_custom_call.1} parent=63 // pred_fallthru
        _
      // Predicated region
      $region69: #{tpu_custom_call.1} parent=63 // pred_check
        %p413 = pneg %p66
      $region70: #{tpu_custom_call.1} parent=63 // pred_check_branch
        %415 = sbr.rel (%p413) target = $region72
      $region71: #{tpu_custom_call.1} parent=63 // pred_region
        %p416 = scmp.lt.s32.totalorder %s20, 1
        %s417 = scalar_select %p416, %s20, 1
        %s418 = smul.addr %s417, 32
        %s419 = smul.addr %s418, 8
        %s420 = scalar_lea.vmem %s1, %s419
      $region72: #{tpu_custom_call.1} parent=63 // pred_fallthru
        _
    $region64: #{tpu_custom_call.1} parent=5 // pred_fallthru
      _
    %p421 = scmp.le.s32.totalorder 1, %s20
    %p422 = scmp.lt.s32.totalorder %s20, 3
    %p423 = pnand %p421, %p422
    %p424 = pneg %p423
    // Predicated region
    $region73: #{tpu_custom_call.1} parent=5 // pred_check
      _
    $region74: #{tpu_custom_call.1} parent=5 // pred_check_branch
      %426 = sbr.rel (%p423) target = $region76
    $region75: #{tpu_custom_call.1} parent=5 // pred_region
      %s427 = ssub.s32 %s20, 1
      %p428 = scmp.lt.s32.totalorder %s25, 1
      %s429 = scalar_select %p428, %s25, 1
      %s430 = smul.addr %s429, 32
      %s431 = smul.addr %s430, 8
      %s432 = scalar_lea.vmem %s0, %s431
      %p433 = pneg %p46
      %p434 = pneg %p43
      %p435 = scmp.lt.s32.totalorder %s25, 1
      %s436 = scalar_select %p435, %s25, 1
      %s437 = smul.addr %s436, 32
      %s438 = smul.addr %s437, 8
      %s439 = scalar_lea.vmem %s1, %s438
      %p440 = pneg %p72
      %p441 = pneg %p69
      %p442 = pneg %p93
      %p443 = pneg %p90
      %p444 = pneg %p114
      %p445 = pneg %p111
      %p446 = pneg %p135
      %p447 = pneg %p132
      %p448 = pneg %p156
      %p449 = pneg %p153
      %p450 = pneg %p177
      %p451 = pneg %p174
      %p452 = pneg %p198
      %p453 = pneg %p195
      %p454 = pneg %p219
      %p455 = pneg %p216
      %p456 = pneg %p240
      %p457 = pneg %p237
      %p458 = pneg %p261
      %p459 = pneg %p258
      %p460 = pneg %p282
      %p461 = pneg %p279
      %p462 = pneg %p303
      %p463 = pneg %p300
      %p464 = pneg %p324
      %p465 = pneg %p321
      %p466 = pneg %p350
      %p467 = pneg %p347
      %p468 = scmp.lt.s32.totalorder %s25, 1
      %s469 = scalar_select %p468, %s25, 1
      %s470 = smul.addr %s469, 32
      %s471 = smul.addr %s470, 8
      %s472 = scalar_lea.vmem %s14, %s471
      %p473 = scmp.lt.s32.totalorder %s25, 1
      %s474 = scalar_select %p473, %s25, 1
      %s475 = smul.addr %s474, 32
      %s476 = smul.addr %s475, 8
      %s477 = scalar_lea.vmem %s0, %s476
      %p478 = scmp.lt.s32.totalorder %s25, 1
      %s479 = scalar_select %p478, %s25, 1
      %s480 = smul.addr %s479, 32
      %s481 = smul.addr %s480, 8
      %s482 = scalar_lea.vmem %s1, %s481
      %p483 = scmp.lt.s32.totalorder %s25, 1
      %s484 = scalar_select %p483, %s25, 1
      %s485 = smul.addr %s484, 32
      %s486 = smul.addr %s485, 8
      %s487 = scalar_lea.vmem %s14, %s486
      %v488 = vld [vmem:[%s477] sm:$0xff]
      %v489 = vld [vmem:[%s477 + $0x8] sm:$0xff]
      %v490 = vld [vmem:[%s477 + $0x10] sm:$0xff]
      %v491 = vld [vmem:[%s477 + $0x18] sm:$0xff]
      %v492 = vld [vmem:[%s477 + $0x20] sm:$0xff]
      %v493 = vld [vmem:[%s477 + $0x28] sm:$0xff]
      %v494 = vld [vmem:[%s477 + $0x30] sm:$0xff]
      %v495 = vld [vmem:[%s477 + $0x38] sm:$0xff]
      %v496 = vld [vmem:[%s477 + $0x40] sm:$0xff]
      %v497 = vld [vmem:[%s477 + $0x48] sm:$0xff]
      %v498 = vld [vmem:[%s477 + $0x50] sm:$0xff]
      %v499 = vld [vmem:[%s477 + $0x58] sm:$0xff]
      %v500 = vld [vmem:[%s477 + $0x60] sm:$0xff]
      %v501 = vld [vmem:[%s477 + $0x68] sm:$0xff]
      %v502 = vld [vmem:[%s477 + $0x70] sm:$0xff]
      %v503 = vld [vmem:[%s477 + $0x78] sm:$0xff]
      %v504 = vld [vmem:[%s477 + $0x80] sm:$0xff]
      %v505 = vld [vmem:[%s477 + $0x88] sm:$0xff]
      %v506 = vld [vmem:[%s477 + $0x90] sm:$0xff]
      %v507 = vld [vmem:[%s477 + $0x98] sm:$0xff]
      %v508 = vld [vmem:[%s477 + $0xa0] sm:$0xff]
      %v509 = vld [vmem:[%s477 + $0xa8] sm:$0xff]
      %v510 = vld [vmem:[%s477 + $0xb0] sm:$0xff]
      %v511 = vld [vmem:[%s477 + $0xb8] sm:$0xff]
      %v512 = vld [vmem:[%s477 + $0xc0] sm:$0xff]
      %v513 = vld [vmem:[%s477 + $0xc8] sm:$0xff]
      %v514 = vld [vmem:[%s477 + $0xd0] sm:$0xff]
      %v515 = vld [vmem:[%s477 + $0xd8] sm:$0xff]
      %v516 = vld [vmem:[%s477 + $0xe0] sm:$0xff]
      %v517 = vld [vmem:[%s477 + $0xe8] sm:$0xff]
      %v518 = vld [vmem:[%s477 + $0xf0] sm:$0xff]
      %v519 = vld [vmem:[%s477 + $0xf8] sm:$0xff]
      %v520 = vld [vmem:[%s2] sm:$0xff]
      %v521 = vld [vmem:[%s2 + $0x8] sm:$0xff]
      %v522 = vld [vmem:[%s3] sm:$0x1]
      %v524 = vperm.slane %v522, 0
      %vm526 = vcmask 130048
      %v528 = vsel %vm526, %v488, 0
      %v531 = vsel %vm526, %v489, 0
      %v534 = vsel %vm526, %v490, 0
      %v537 = vsel %vm526, %v491, 0
      %v540 = vsel %vm526, %v492, 0
      %v543 = vsel %vm526, %v493, 0
      %v546 = vsel %vm526, %v494, 0
      %v549 = vsel %vm526, %v495, 0
      %v552 = vsel %vm526, %v496, 0
      %v555 = vsel %vm526, %v497, 0
      %v558 = vsel %vm526, %v498, 0
      %v561 = vsel %vm526, %v499, 0
      %v564 = vsel %vm526, %v500, 0
      %v567 = vsel %vm526, %v501, 0
      %v570 = vsel %vm526, %v502, 0
      %v573 = vsel %vm526, %v503, 0
      %v576 = vsel %vm526, %v504, 0
      %v579 = vsel %vm526, %v505, 0
      %v582 = vsel %vm526, %v506, 0
      %v585 = vsel %vm526, %v507, 0
      %v588 = vsel %vm526, %v508, 0
      %v591 = vsel %vm526, %v509, 0
      %v594 = vsel %vm526, %v510, 0
      %v597 = vsel %vm526, %v511, 0
      %v600 = vsel %vm526, %v512, 0
      %v603 = vsel %vm526, %v513, 0
      %v606 = vsel %vm526, %v514, 0
      %v609 = vsel %vm526, %v515, 0
      %v612 = vsel %vm526, %v516, 0
      %v615 = vsel %vm526, %v517, 0
      %v618 = vsel %vm526, %v518, 0
      %v621 = vsel %vm526, %v519, 0
      %623 = vmatpush.msra.mxu0 0.0
      %624 = vmatpush.msra.mxu0 0.0
      %625 = vmatpush.msra.mxu0 0.0
      %626 = vmatpush.msra.mxu0 0.0
      %627 = vmatpush.msra.mxu0 0.0
      %628 = vmatpush.msra.mxu0 0.0
      %629 = vmatpush.msra.mxu0 0.0
      %630 = vmatpush.msra.mxu0 0.0
      %631 = vmatpush.msra.mxu0 0.0
      %632 = vmatpush.msra.mxu0 0.0
      %633 = vmatpush.msra.mxu0 0.0
      %634 = vmatpush.msra.mxu0 0.0
      %635 = vmatpush.msra.mxu0 0.0
      %636 = vmatpush.msra.mxu0 0.0
      %637 = vmatpush.msra.mxu0 %v521
      %638 = vmatpush.msra.mxu0 %v520
      %639 = vmatmul.f32.gmra.mxu0 %v528
      %v640 = vpop.f32.mrf.mxu0
      %v641 = vadd.f32 %v524, %v640
      %642 = vmatmul.f32.gmra.mxu0 %v531
      %v643 = vpop.f32.mrf.mxu0
      %v644 = vadd.f32 %v524, %v643
      %645 = vmatmul.f32.gmra.mxu0 %v534
      %v646 = vpop.f32.mrf.mxu0
      %v647 = vadd.f32 %v524, %v646
      %648 = vmatmul.f32.gmra.mxu0 %v537
      %v649 = vpop.f32.mrf.mxu0
      %v650 = vadd.f32 %v524, %v649
      %651 = vmatmul.f32.gmra.mxu0 %v540
      %v652 = vpop.f32.mrf.mxu0
      %v653 = vadd.f32 %v524, %v652
      %654 = vmatmul.f32.gmra.mxu0 %v543
      %v655 = vpop.f32.mrf.mxu0
      %v656 = vadd.f32 %v524, %v655
      %657 = vmatmul.f32.gmra.mxu0 %v546
      %v658 = vpop.f32.mrf.mxu0
      %v659 = vadd.f32 %v524, %v658
      %660 = vmatmul.f32.gmra.mxu0 %v549
      %v661 = vpop.f32.mrf.mxu0
      %v662 = vadd.f32 %v524, %v661
      %663 = vmatmul.f32.gmra.mxu0 %v552
      %v664 = vpop.f32.mrf.mxu0
      %v665 = vadd.f32 %v524, %v664
      %666 = vmatmul.f32.gmra.mxu0 %v555
      %v667 = vpop.f32.mrf.mxu0
      %v668 = vadd.f32 %v524, %v667
      %669 = vmatmul.f32.gmra.mxu0 %v558
      %v670 = vpop.f32.mrf.mxu0
      %v671 = vadd.f32 %v524, %v670
      %672 = vmatmul.f32.gmra.mxu0 %v561
      %v673 = vpop.f32.mrf.mxu0
      %v674 = vadd.f32 %v524, %v673
      %675 = vmatmul.f32.gmra.mxu0 %v564
      %v676 = vpop.f32.mrf.mxu0
      %v677 = vadd.f32 %v524, %v676
      %678 = vmatmul.f32.gmra.mxu0 %v567
      %v679 = vpop.f32.mrf.mxu0
      %v680 = vadd.f32 %v524, %v679
      %681 = vmatmul.f32.gmra.mxu0 %v570
      %v682 = vpop.f32.mrf.mxu0
      %v683 = vadd.f32 %v524, %v682
      %684 = vmatmul.f32.gmra.mxu0 %v573
      %v685 = vpop.f32.mrf.mxu0
      %v686 = vadd.f32 %v524, %v685
      %687 = vmatmul.f32.gmra.mxu0 %v576
      %v688 = vpop.f32.mrf.mxu0
      %v689 = vadd.f32 %v524, %v688
      %690 = vmatmul.f32.gmra.mxu0 %v579
      %v691 = vpop.f32.mrf.mxu0
      %v692 = vadd.f32 %v524, %v691
      %693 = vmatmul.f32.gmra.mxu0 %v582
      %v694 = vpop.f32.mrf.mxu0
      %v695 = vadd.f32 %v524, %v694
      %696 = vmatmul.f32.gmra.mxu0 %v585
      %v697 = vpop.f32.mrf.mxu0
      %v698 = vadd.f32 %v524, %v697
      %699 = vmatmul.f32.gmra.mxu0 %v588
      %v700 = vpop.f32.mrf.mxu0
      %v701 = vadd.f32 %v524, %v700
      %702 = vmatmul.f32.gmra.mxu0 %v591
      %v703 = vpop.f32.mrf.mxu0
      %v704 = vadd.f32 %v524, %v703
      %705 = vmatmul.f32.gmra.mxu0 %v594
      %v706 = vpop.f32.mrf.mxu0
      %v707 = vadd.f32 %v524, %v706
      %708 = vmatmul.f32.gmra.mxu0 %v597
      %v709 = vpop.f32.mrf.mxu0
      %v710 = vadd.f32 %v524, %v709
      %711 = vmatmul.f32.gmra.mxu0 %v600
      %v712 = vpop.f32.mrf.mxu0
      %v713 = vadd.f32 %v524, %v712
      %714 = vmatmul.f32.gmra.mxu0 %v603
      %v715 = vpop.f32.mrf.mxu0
      %v716 = vadd.f32 %v524, %v715
      %717 = vmatmul.f32.gmra.mxu0 %v606
      %v718 = vpop.f32.mrf.mxu0
      %v719 = vadd.f32 %v524, %v718
      %720 = vmatmul.f32.gmra.mxu0 %v609
      %v721 = vpop.f32.mrf.mxu0
      %v722 = vadd.f32 %v524, %v721
      %723 = vmatmul.f32.gmra.mxu0 %v612
      %v724 = vpop.f32.mrf.mxu0
      %v725 = vadd.f32 %v524, %v724
      %726 = vmatmul.f32.gmra.mxu0 %v615
      %v727 = vpop.f32.mrf.mxu0
      %v728 = vadd.f32 %v524, %v727
      %729 = vmatmul.f32.gmra.mxu0 %v618
      %v730 = vpop.f32.mrf.mxu0
      %v731 = vadd.f32 %v524, %v730
      %732 = vmatmul.f32.gmra.mxu0 %v621
      %v733 = vpop.f32.mrf.mxu0
      %v734 = vadd.f32 %v524, %v733
      %735 = vdwg.mxu0
      %v736 = vmax.f32 %v641, 0.0
      %v737 = vmax.f32 %v644, 0.0
      %v738 = vmax.f32 %v647, 0.0
      %v739 = vmax.f32 %v650, 0.0
      %v740 = vmax.f32 %v653, 0.0
      %v741 = vmax.f32 %v656, 0.0
      %v742 = vmax.f32 %v659, 0.0
      %v743 = vmax.f32 %v662, 0.0
      %v744 = vmax.f32 %v665, 0.0
      %v745 = vmax.f32 %v668, 0.0
      %v746 = vmax.f32 %v671, 0.0
      %v747 = vmax.f32 %v674, 0.0
      %v748 = vmax.f32 %v677, 0.0
      %v749 = vmax.f32 %v680, 0.0
      %v750 = vmax.f32 %v683, 0.0
      %v751 = vmax.f32 %v686, 0.0
      %v752 = vmax.f32 %v689, 0.0
      %v753 = vmax.f32 %v692, 0.0
      %v754 = vmax.f32 %v695, 0.0
      %v755 = vmax.f32 %v698, 0.0
      %v756 = vmax.f32 %v701, 0.0
      %v757 = vmax.f32 %v704, 0.0
      %v758 = vmax.f32 %v707, 0.0
      %v759 = vmax.f32 %v710, 0.0
      %v760 = vmax.f32 %v713, 0.0
      %v761 = vmax.f32 %v716, 0.0
      %v762 = vmax.f32 %v719, 0.0
      %v763 = vmax.f32 %v722, 0.0
      %v764 = vmax.f32 %v725, 0.0
      %v765 = vmax.f32 %v728, 0.0
      %v766 = vmax.f32 %v731, 0.0
      %v767 = vmax.f32 %v734, 0.0
      %v768 = vld [vmem:[%s4] sm:$0xff]
      %v769 = vld [vmem:[%s4 + $0x8] sm:$0xff]
      %v770 = vld [vmem:[%s4 + $0x10] sm:$0xff]
      %v771 = vld [vmem:[%s4 + $0x18] sm:$0xff]
      %v772 = vld [vmem:[%s4 + $0x20] sm:$0xff]
      %v773 = vld [vmem:[%s4 + $0x28] sm:$0xff]
      %v774 = vld [vmem:[%s4 + $0x30] sm:$0xff]
      %v775 = vld [vmem:[%s4 + $0x38] sm:$0xff]
      %v776 = vld [vmem:[%s5] sm:$0x1]
      %v778 = vperm.slane %v776, 0
      %vm780 = vcmask 523264
      %v782 = vsel %vm780, %v736, 0
      %v785 = vsel %vm780, %v737, 0
      %v788 = vsel %vm780, %v738, 0
      %v791 = vsel %vm780, %v739, 0
      %v794 = vsel %vm780, %v740, 0
      %v797 = vsel %vm780, %v741, 0
      %v800 = vsel %vm780, %v742, 0
      %v803 = vsel %vm780, %v743, 0
      %v806 = vsel %vm780, %v744, 0
      %v809 = vsel %vm780, %v745, 0
      %v812 = vsel %vm780, %v746, 0
      %v815 = vsel %vm780, %v747, 0
      %v818 = vsel %vm780, %v748, 0
      %v821 = vsel %vm780, %v749, 0
      %v824 = vsel %vm780, %v750, 0
      %v827 = vsel %vm780, %v751, 0
      %v830 = vsel %vm780, %v752, 0
      %v833 = vsel %vm780, %v753, 0
      %v836 = vsel %vm780, %v754, 0
      %v839 = vsel %vm780, %v755, 0
      %v842 = vsel %vm780, %v756, 0
      %v845 = vsel %vm780, %v757, 0
      %v848 = vsel %vm780, %v758, 0
      %v851 = vsel %vm780, %v759, 0
      %v854 = vsel %vm780, %v760, 0
      %v857 = vsel %vm780, %v761, 0
      %v860 = vsel %vm780, %v762, 0
      %v863 = vsel %vm780, %v763, 0
      %v866 = vsel %vm780, %v764, 0
      %v869 = vsel %vm780, %v765, 0
      %v872 = vsel %vm780, %v766, 0
      %v875 = vsel %vm780, %v767, 0
      %877 = vmatpush.msra.mxu0 0.0
      %878 = vmatpush.msra.mxu0 0.0
      %879 = vmatpush.msra.mxu0 0.0
      %880 = vmatpush.msra.mxu0 0.0
      %881 = vmatpush.msra.mxu0 0.0
      %882 = vmatpush.msra.mxu0 0.0
      %883 = vmatpush.msra.mxu0 0.0
      %884 = vmatpush.msra.mxu0 0.0
      %885 = vmatpush.msra.mxu0 %v775
      %886 = vmatpush.msra.mxu0 %v774
      %887 = vmatpush.msra.mxu0 %v773
      %888 = vmatpush.msra.mxu0 %v772
      %889 = vmatpush.msra.mxu0 %v771
      %890 = vmatpush.msra.mxu0 %v770
      %891 = vmatpush.msra.mxu0 %v769
      %892 = vmatpush.msra.mxu0 %v768
      %893 = vmatmul.f32.gmra.mxu0 %v782
      %v894 = vpop.f32.mrf.mxu0
      %v895 = vadd.f32 %v778, %v894
      %896 = vmatmul.f32.gmra.mxu0 %v785
      %v897 = vpop.f32.mrf.mxu0
      %v898 = vadd.f32 %v778, %v897
      %899 = vmatmul.f32.gmra.mxu0 %v788
      %v900 = vpop.f32.mrf.mxu0
      %v901 = vadd.f32 %v778, %v900
      %902 = vmatmul.f32.gmra.mxu0 %v791
      %v903 = vpop.f32.mrf.mxu0
      %v904 = vadd.f32 %v778, %v903
      %905 = vmatmul.f32.gmra.mxu0 %v794
      %v906 = vpop.f32.mrf.mxu0
      %v907 = vadd.f32 %v778, %v906
      %908 = vmatmul.f32.gmra.mxu0 %v797
      %v909 = vpop.f32.mrf.mxu0
      %v910 = vadd.f32 %v778, %v909
      %911 = vmatmul.f32.gmra.mxu0 %v800
      %v912 = vpop.f32.mrf.mxu0
      %v913 = vadd.f32 %v778, %v912
      %914 = vmatmul.f32.gmra.mxu0 %v803
      %v915 = vpop.f32.mrf.mxu0
      %v916 = vadd.f32 %v778, %v915
      %917 = vmatmul.f32.gmra.mxu0 %v806
      %v918 = vpop.f32.mrf.mxu0
      %v919 = vadd.f32 %v778, %v918
      %920 = vmatmul.f32.gmra.mxu0 %v809
      %v921 = vpop.f32.mrf.mxu0
      %v922 = vadd.f32 %v778, %v921
      %923 = vmatmul.f32.gmra.mxu0 %v812
      %v924 = vpop.f32.mrf.mxu0
      %v925 = vadd.f32 %v778, %v924
      %926 = vmatmul.f32.gmra.mxu0 %v815
      %v927 = vpop.f32.mrf.mxu0
      %v928 = vadd.f32 %v778, %v927
      %929 = vmatmul.f32.gmra.mxu0 %v818
      %v930 = vpop.f32.mrf.mxu0
      %v931 = vadd.f32 %v778, %v930
      %932 = vmatmul.f32.gmra.mxu0 %v821
      %v933 = vpop.f32.mrf.mxu0
      %v934 = vadd.f32 %v778, %v933
      %935 = vmatmul.f32.gmra.mxu0 %v824
      %v936 = vpop.f32.mrf.mxu0
      %v937 = vadd.f32 %v778, %v936
      %938 = vmatmul.f32.gmra.mxu0 %v827
      %v939 = vpop.f32.mrf.mxu0
      %v940 = vadd.f32 %v778, %v939
      %941 = vmatmul.f32.gmra.mxu0 %v830
      %v942 = vpop.f32.mrf.mxu0
      %v943 = vadd.f32 %v778, %v942
      %944 = vmatmul.f32.gmra.mxu0 %v833
      %v945 = vpop.f32.mrf.mxu0
      %v946 = vadd.f32 %v778, %v945
      %947 = vmatmul.f32.gmra.mxu0 %v836
      %v948 = vpop.f32.mrf.mxu0
      %v949 = vadd.f32 %v778, %v948
      %950 = vmatmul.f32.gmra.mxu0 %v839
      %v951 = vpop.f32.mrf.mxu0
      %v952 = vadd.f32 %v778, %v951
      %953 = vmatmul.f32.gmra.mxu0 %v842
      %v954 = vpop.f32.mrf.mxu0
      %v955 = vadd.f32 %v778, %v954
      %956 = vmatmul.f32.gmra.mxu0 %v845
      %v957 = vpop.f32.mrf.mxu0
      %v958 = vadd.f32 %v778, %v957
      %959 = vmatmul.f32.gmra.mxu0 %v848
      %v960 = vpop.f32.mrf.mxu0
      %v961 = vadd.f32 %v778, %v960
      %962 = vmatmul.f32.gmra.mxu0 %v851
      %v963 = vpop.f32.mrf.mxu0
      %v964 = vadd.f32 %v778, %v963
      %965 = vmatmul.f32.gmra.mxu0 %v854
      %v966 = vpop.f32.mrf.mxu0
      %v967 = vadd.f32 %v778, %v966
      %968 = vmatmul.f32.gmra.mxu0 %v857
      %v969 = vpop.f32.mrf.mxu0
      %v970 = vadd.f32 %v778, %v969
      %971 = vmatmul.f32.gmra.mxu0 %v860
      %v972 = vpop.f32.mrf.mxu0
      %v973 = vadd.f32 %v778, %v972
      %974 = vmatmul.f32.gmra.mxu0 %v863
      %v975 = vpop.f32.mrf.mxu0
      %v976 = vadd.f32 %v778, %v975
      %977 = vmatmul.f32.gmra.mxu0 %v866
      %v978 = vpop.f32.mrf.mxu0
      %v979 = vadd.f32 %v778, %v978
      %980 = vmatmul.f32.gmra.mxu0 %v869
      %v981 = vpop.f32.mrf.mxu0
      %v982 = vadd.f32 %v778, %v981
      %983 = vmatmul.f32.gmra.mxu0 %v872
      %v984 = vpop.f32.mrf.mxu0
      %v985 = vadd.f32 %v778, %v984
      %986 = vmatmul.f32.gmra.mxu0 %v875
      %v987 = vpop.f32.mrf.mxu0
      %v988 = vadd.f32 %v778, %v987
      %989 = vdwg.mxu0
      %v990 = vmax.f32 %v895, 0.0
      %v991 = vmax.f32 %v898, 0.0
      %v992 = vmax.f32 %v901, 0.0
      %v993 = vmax.f32 %v904, 0.0
      %v994 = vmax.f32 %v907, 0.0
      %v995 = vmax.f32 %v910, 0.0
      %v996 = vmax.f32 %v913, 0.0
      %v997 = vmax.f32 %v916, 0.0
      %v998 = vmax.f32 %v919, 0.0
      %v999 = vmax.f32 %v922, 0.0
      %v1000 = vmax.f32 %v925, 0.0
      %v1001 = vmax.f32 %v928, 0.0
      %v1002 = vmax.f32 %v931, 0.0
      %v1003 = vmax.f32 %v934, 0.0
      %v1004 = vmax.f32 %v937, 0.0
      %v1005 = vmax.f32 %v940, 0.0
      %v1006 = vmax.f32 %v943, 0.0
      %v1007 = vmax.f32 %v946, 0.0
      %v1008 = vmax.f32 %v949, 0.0
      %v1009 = vmax.f32 %v952, 0.0
      %v1010 = vmax.f32 %v955, 0.0
      %v1011 = vmax.f32 %v958, 0.0
      %v1012 = vmax.f32 %v961, 0.0
      %v1013 = vmax.f32 %v964, 0.0
      %v1014 = vmax.f32 %v967, 0.0
      %v1015 = vmax.f32 %v970, 0.0
      %v1016 = vmax.f32 %v973, 0.0
      %v1017 = vmax.f32 %v976, 0.0
      %v1018 = vmax.f32 %v979, 0.0
      %v1019 = vmax.f32 %v982, 0.0
      %v1020 = vmax.f32 %v985, 0.0
      %v1021 = vmax.f32 %v988, 0.0
      %v1022 = vld [vmem:[%s6] sm:$0xff]
      %v1023 = vld [vmem:[%s6 + $0x8] sm:$0xff]
      %v1024 = vld [vmem:[%s7] sm:$0x1]
      %v1026 = vperm.slane %v1024, 0
      %v1029 = vsel %vm526, %v990, 0
      %v1032 = vsel %vm526, %v991, 0
      %v1035 = vsel %vm526, %v992, 0
      %v1038 = vsel %vm526, %v993, 0
      %v1041 = vsel %vm526, %v994, 0
      %v1044 = vsel %vm526, %v995, 0
      %v1047 = vsel %vm526, %v996, 0
      %v1050 = vsel %vm526, %v997, 0
      %v1053 = vsel %vm526, %v998, 0
      %v1056 = vsel %vm526, %v999, 0
      %v1059 = vsel %vm526, %v1000, 0
      %v1062 = vsel %vm526, %v1001, 0
      %v1065 = vsel %vm526, %v1002, 0
      %v1068 = vsel %vm526, %v1003, 0
      %v1071 = vsel %vm526, %v1004, 0
      %v1074 = vsel %vm526, %v1005, 0
      %v1077 = vsel %vm526, %v1006, 0
      %v1080 = vsel %vm526, %v1007, 0
      %v1083 = vsel %vm526, %v1008, 0
      %v1086 = vsel %vm526, %v1009, 0
      %v1089 = vsel %vm526, %v1010, 0
      %v1092 = vsel %vm526, %v1011, 0
      %v1095 = vsel %vm526, %v1012, 0
      %v1098 = vsel %vm526, %v1013, 0
      %v1101 = vsel %vm526, %v1014, 0
      %v1104 = vsel %vm526, %v1015, 0
      %v1107 = vsel %vm526, %v1016, 0
      %v1110 = vsel %vm526, %v1017, 0
      %v1113 = vsel %vm526, %v1018, 0
      %v1116 = vsel %vm526, %v1019, 0
      %v1119 = vsel %vm526, %v1020, 0
      %v1122 = vsel %vm526, %v1021, 0
      %1124 = vmatpush.msra.mxu0 0.0
      %1125 = vmatpush.msra.mxu0 0.0
      %1126 = vmatpush.msra.mxu0 0.0
      %1127 = vmatpush.msra.mxu0 0.0
      %1128 = vmatpush.msra.mxu0 0.0
      %1129 = vmatpush.msra.mxu0 0.0
      %1130 = vmatpush.msra.mxu0 0.0
      %1131 = vmatpush.msra.mxu0 0.0
      %1132 = vmatpush.msra.mxu0 0.0
      %1133 = vmatpush.msra.mxu0 0.0
      %1134 = vmatpush.msra.mxu0 0.0
      %1135 = vmatpush.msra.mxu0 0.0
      %1136 = vmatpush.msra.mxu0 0.0
      %1137 = vmatpush.msra.mxu0 0.0
      %1138 = vmatpush.msra.mxu0 %v1023
      %1139 = vmatpush.msra.mxu0 %v1022
      %1140 = vmatmul.f32.gmra.mxu0 %v1029
      %v1141 = vpop.f32.mrf.mxu0
      %v1142 = vadd.f32 %v1026, %v1141
      %1143 = vmatmul.f32.gmra.mxu0 %v1032
      %v1144 = vpop.f32.mrf.mxu0
      %v1145 = vadd.f32 %v1026, %v1144
      %1146 = vmatmul.f32.gmra.mxu0 %v1035
      %v1147 = vpop.f32.mrf.mxu0
      %v1148 = vadd.f32 %v1026, %v1147
      %1149 = vmatmul.f32.gmra.mxu0 %v1038
      %v1150 = vpop.f32.mrf.mxu0
      %v1151 = vadd.f32 %v1026, %v1150
      %1152 = vmatmul.f32.gmra.mxu0 %v1041
      %v1153 = vpop.f32.mrf.mxu0
      %v1154 = vadd.f32 %v1026, %v1153
      %1155 = vmatmul.f32.gmra.mxu0 %v1044
      %v1156 = vpop.f32.mrf.mxu0
      %v1157 = vadd.f32 %v1026, %v1156
      %1158 = vmatmul.f32.gmra.mxu0 %v1047
      %v1159 = vpop.f32.mrf.mxu0
      %v1160 = vadd.f32 %v1026, %v1159
      %1161 = vmatmul.f32.gmra.mxu0 %v1050
      %v1162 = vpop.f32.mrf.mxu0
      %v1163 = vadd.f32 %v1026, %v1162
      %1164 = vmatmul.f32.gmra.mxu0 %v1053
      %v1165 = vpop.f32.mrf.mxu0
      %v1166 = vadd.f32 %v1026, %v1165
      %1167 = vmatmul.f32.gmra.mxu0 %v1056
      %v1168 = vpop.f32.mrf.mxu0
      %v1169 = vadd.f32 %v1026, %v1168
      %1170 = vmatmul.f32.gmra.mxu0 %v1059
      %v1171 = vpop.f32.mrf.mxu0
      %v1172 = vadd.f32 %v1026, %v1171
      %1173 = vmatmul.f32.gmra.mxu0 %v1062
      %v1174 = vpop.f32.mrf.mxu0
      %v1175 = vadd.f32 %v1026, %v1174
      %1176 = vmatmul.f32.gmra.mxu0 %v1065
      %v1177 = vpop.f32.mrf.mxu0
      %v1178 = vadd.f32 %v1026, %v1177
      %1179 = vmatmul.f32.gmra.mxu0 %v1068
      %v1180 = vpop.f32.mrf.mxu0
      %v1181 = vadd.f32 %v1026, %v1180
      %1182 = vmatmul.f32.gmra.mxu0 %v1071
      %v1183 = vpop.f32.mrf.mxu0
      %v1184 = vadd.f32 %v1026, %v1183
      %1185 = vmatmul.f32.gmra.mxu0 %v1074
      %v1186 = vpop.f32.mrf.mxu0
      %v1187 = vadd.f32 %v1026, %v1186
      %1188 = vmatmul.f32.gmra.mxu0 %v1077
      %v1189 = vpop.f32.mrf.mxu0
      %v1190 = vadd.f32 %v1026, %v1189
      %1191 = vmatmul.f32.gmra.mxu0 %v1080
      %v1192 = vpop.f32.mrf.mxu0
      %v1193 = vadd.f32 %v1026, %v1192
      %1194 = vmatmul.f32.gmra.mxu0 %v1083
      %v1195 = vpop.f32.mrf.mxu0
      %v1196 = vadd.f32 %v1026, %v1195
      %1197 = vmatmul.f32.gmra.mxu0 %v1086
      %v1198 = vpop.f32.mrf.mxu0
      %v1199 = vadd.f32 %v1026, %v1198
      %1200 = vmatmul.f32.gmra.mxu0 %v1089
      %v1201 = vpop.f32.mrf.mxu0
      %v1202 = vadd.f32 %v1026, %v1201
      %1203 = vmatmul.f32.gmra.mxu0 %v1092
      %v1204 = vpop.f32.mrf.mxu0
      %v1205 = vadd.f32 %v1026, %v1204
      %1206 = vmatmul.f32.gmra.mxu0 %v1095
      %v1207 = vpop.f32.mrf.mxu0
      %v1208 = vadd.f32 %v1026, %v1207
      %1209 = vmatmul.f32.gmra.mxu0 %v1098
      %v1210 = vpop.f32.mrf.mxu0
      %v1211 = vadd.f32 %v1026, %v1210
      %1212 = vmatmul.f32.gmra.mxu0 %v1101
      %v1213 = vpop.f32.mrf.mxu0
      %v1214 = vadd.f32 %v1026, %v1213
      %1215 = vmatmul.f32.gmra.mxu0 %v1104
      %v1216 = vpop.f32.mrf.mxu0
      %v1217 = vadd.f32 %v1026, %v1216
      %1218 = vmatmul.f32.gmra.mxu0 %v1107
      %v1219 = vpop.f32.mrf.mxu0
      %v1220 = vadd.f32 %v1026, %v1219
      %1221 = vmatmul.f32.gmra.mxu0 %v1110
      %v1222 = vpop.f32.mrf.mxu0
      %v1223 = vadd.f32 %v1026, %v1222
      %1224 = vmatmul.f32.gmra.mxu0 %v1113
      %v1225 = vpop.f32.mrf.mxu0
      %v1226 = vadd.f32 %v1026, %v1225
      %1227 = vmatmul.f32.gmra.mxu0 %v1116
      %v1228 = vpop.f32.mrf.mxu0
      %v1229 = vadd.f32 %v1026, %v1228
      %1230 = vmatmul.f32.gmra.mxu0 %v1119
      %v1231 = vpop.f32.mrf.mxu0
      %v1232 = vadd.f32 %v1026, %v1231
      %1233 = vmatmul.f32.gmra.mxu0 %v1122
      %v1234 = vpop.f32.mrf.mxu0
      %v1235 = vadd.f32 %v1026, %v1234
      %1236 = vdwg.mxu0
      %v1237 = vsub.f32 0.0, %v1142
      %v1238 = vsub.f32 0.0, %v1145
      %v1239 = vsub.f32 0.0, %v1148
      %v1240 = vsub.f32 0.0, %v1151
      %v1241 = vsub.f32 0.0, %v1154
      %v1242 = vsub.f32 0.0, %v1157
      %v1243 = vsub.f32 0.0, %v1160
      %v1244 = vsub.f32 0.0, %v1163
      %v1245 = vsub.f32 0.0, %v1166
      %v1246 = vsub.f32 0.0, %v1169
      %v1247 = vsub.f32 0.0, %v1172
      %v1248 = vsub.f32 0.0, %v1175
      %v1249 = vsub.f32 0.0, %v1178
      %v1250 = vsub.f32 0.0, %v1181
      %v1251 = vsub.f32 0.0, %v1184
      %v1252 = vsub.f32 0.0, %v1187
      %v1253 = vsub.f32 0.0, %v1190
      %v1254 = vsub.f32 0.0, %v1193
      %v1255 = vsub.f32 0.0, %v1196
      %v1256 = vsub.f32 0.0, %v1199
      %v1257 = vsub.f32 0.0, %v1202
      %v1258 = vsub.f32 0.0, %v1205
      %v1259 = vsub.f32 0.0, %v1208
      %v1260 = vsub.f32 0.0, %v1211
      %v1261 = vsub.f32 0.0, %v1214
      %v1262 = vsub.f32 0.0, %v1217
      %v1263 = vsub.f32 0.0, %v1220
      %v1264 = vsub.f32 0.0, %v1223
      %v1265 = vsub.f32 0.0, %v1226
      %v1266 = vsub.f32 0.0, %v1229
      %v1267 = vsub.f32 0.0, %v1232
      %v1268 = vsub.f32 0.0, %v1235
      %v1269 = vmul.f32 %v1237, 1.442695
      %v1270 = vpow.pop %v1269
      %v1271 = vmul.f32 %v1238, 1.442695
      %v1272 = vpow.pop %v1271
      %v1273 = vmul.f32 %v1239, 1.442695
      %v1274 = vpow.pop %v1273
      %v1275 = vmul.f32 %v1240, 1.442695
      %v1276 = vpow.pop %v1275
      %v1277 = vmul.f32 %v1241, 1.442695
      %v1278 = vpow.pop %v1277
      %v1279 = vmul.f32 %v1242, 1.442695
      %v1280 = vpow.pop %v1279
      %v1281 = vmul.f32 %v1243, 1.442695
      %v1282 = vpow.pop %v1281
      %v1283 = vmul.f32 %v1244, 1.442695
      %v1284 = vpow.pop %v1283
      %v1285 = vmul.f32 %v1245, 1.442695
      %v1286 = vpow.pop %v1285
      %v1287 = vmul.f32 %v1246, 1.442695
      %v1288 = vpow.pop %v1287
      %v1289 = vmul.f32 %v1247, 1.442695
      %v1290 = vpow.pop %v1289
      %v1291 = vmul.f32 %v1248, 1.442695
      %v1292 = vpow.pop %v1291
      %v1293 = vmul.f32 %v1249, 1.442695
      %v1294 = vpow.pop %v1293
      %v1295 = vmul.f32 %v1250, 1.442695
      %v1296 = vpow.pop %v1295
      %v1297 = vmul.f32 %v1251, 1.442695
      %v1298 = vpow.pop %v1297
      %v1299 = vmul.f32 %v1252, 1.442695
      %v1300 = vpow.pop %v1299
      %v1301 = vmul.f32 %v1253, 1.442695
      %v1302 = vpow.pop %v1301
      %v1303 = vmul.f32 %v1254, 1.442695
      %v1304 = vpow.pop %v1303
      %v1305 = vmul.f32 %v1255, 1.442695
      %v1306 = vpow.pop %v1305
      %v1307 = vmul.f32 %v1256, 1.442695
      %v1308 = vpow.pop %v1307
      %v1309 = vmul.f32 %v1257, 1.442695
      %v1310 = vpow.pop %v1309
      %v1311 = vmul.f32 %v1258, 1.442695
      %v1312 = vpow.pop %v1311
      %v1313 = vmul.f32 %v1259, 1.442695
      %v1314 = vpow.pop %v1313
      %v1315 = vmul.f32 %v1260, 1.442695
      %v1316 = vpow.pop %v1315
      %v1317 = vmul.f32 %v1261, 1.442695
      %v1318 = vpow.pop %v1317
      %v1319 = vmul.f32 %v1262, 1.442695
      %v1320 = vpow.pop %v1319
      %v1321 = vmul.f32 %v1263, 1.442695
      %v1322 = vpow.pop %v1321
      %v1323 = vmul.f32 %v1264, 1.442695
      %v1324 = vpow.pop %v1323
      %v1325 = vmul.f32 %v1265, 1.442695
      %v1326 = vpow.pop %v1325
      %v1327 = vmul.f32 %v1266, 1.442695
      %v1328 = vpow.pop %v1327
      %v1329 = vmul.f32 %v1267, 1.442695
      %v1330 = vpow.pop %v1329
      %v1331 = vmul.f32 %v1268, 1.442695
      %v1332 = vpow.pop %v1331
      %v1333 = vadd.f32 %v1270, 1.0
      %v1334 = vadd.f32 %v1272, 1.0
      %v1335 = vadd.f32 %v1274, 1.0
      %v1336 = vadd.f32 %v1276, 1.0
      %v1337 = vadd.f32 %v1278, 1.0
      %v1338 = vadd.f32 %v1280, 1.0
      %v1339 = vadd.f32 %v1282, 1.0
      %v1340 = vadd.f32 %v1284, 1.0
      %v1341 = vadd.f32 %v1286, 1.0
      %v1342 = vadd.f32 %v1288, 1.0
      %v1343 = vadd.f32 %v1290, 1.0
      %v1344 = vadd.f32 %v1292, 1.0
      %v1345 = vadd.f32 %v1294, 1.0
      %v1346 = vadd.f32 %v1296, 1.0
      %v1347 = vadd.f32 %v1298, 1.0
      %v1348 = vadd.f32 %v1300, 1.0
      %v1349 = vadd.f32 %v1302, 1.0
      %v1350 = vadd.f32 %v1304, 1.0
      %v1351 = vadd.f32 %v1306, 1.0
      %v1352 = vadd.f32 %v1308, 1.0
      %v1353 = vadd.f32 %v1310, 1.0
      %v1354 = vadd.f32 %v1312, 1.0
      %v1355 = vadd.f32 %v1314, 1.0
      %v1356 = vadd.f32 %v1316, 1.0
      %v1357 = vadd.f32 %v1318, 1.0
      %v1358 = vadd.f32 %v1320, 1.0
      %v1359 = vadd.f32 %v1322, 1.0
      %v1360 = vadd.f32 %v1324, 1.0
      %v1361 = vadd.f32 %v1326, 1.0
      %v1362 = vadd.f32 %v1328, 1.0
      %v1363 = vadd.f32 %v1330, 1.0
      %v1364 = vadd.f32 %v1332, 1.0
      %v1365 = vrcp.pop %v1333
      %v1366 = vmul.f32 %v1333, %v1365
      %v1367 = vsub.f32 1.0, %v1366
      %v1368 = vmul.f32 %v1365, %v1367
      %v1369 = vadd.f32 %v1365, %v1368
      %vm1370 = vweird.f32 %v1333
      %vm1371 = vweird.f32 %v1365
      %vm1372 = vmor %vm1370, %vm1371
      %v1373 = vsel %vm1372, %v1365, %v1369
      %v1374 = vand.u32 2147483647, %v1333
      %vm1375 = vcmp.eq.f32.partialorder %v1374, 8.507059e+37
      %v1376 = vand.u32 %v1333, 2147483648
      %v1377 = vor.u32 1.1754944e-38, %v1376
      %v1378 = vsel %vm1375, %v1377, %v1373
      %v1379 = vmul.f32 1.0, %v1378
      %v1380 = vrcp.pop %v1334
      %v1381 = vmul.f32 %v1334, %v1380
      %v1382 = vsub.f32 1.0, %v1381
      %v1383 = vmul.f32 %v1380, %v1382
      %v1384 = vadd.f32 %v1380, %v1383
      %vm1385 = vweird.f32 %v1334
      %vm1386 = vweird.f32 %v1380
      %vm1387 = vmor %vm1385, %vm1386
      %v1388 = vsel %vm1387, %v1380, %v1384
      %v1389 = vand.u32 2147483647, %v1334
      %vm1390 = vcmp.eq.f32.partialorder %v1389, 8.507059e+37
      %v1391 = vand.u32 %v1334, 2147483648
      %v1392 = vor.u32 1.1754944e-38, %v1391
      %v1393 = vsel %vm1390, %v1392, %v1388
      %v1394 = vmul.f32 1.0, %v1393
      %v1395 = vrcp.pop %v1335
      %v1396 = vmul.f32 %v1335, %v1395
      %v1397 = vsub.f32 1.0, %v1396
      %v1398 = vmul.f32 %v1395, %v1397
      %v1399 = vadd.f32 %v1395, %v1398
      %vm1400 = vweird.f32 %v1335
      %vm1401 = vweird.f32 %v1395
      %vm1402 = vmor %vm1400, %vm1401
      %v1403 = vsel %vm1402, %v1395, %v1399
      %v1404 = vand.u32 2147483647, %v1335
      %vm1405 = vcmp.eq.f32.partialorder %v1404, 8.507059e+37
      %v1406 = vand.u32 %v1335, 2147483648
      %v1407 = vor.u32 1.1754944e-38, %v1406
      %v1408 = vsel %vm1405, %v1407, %v1403
      %v1409 = vmul.f32 1.0, %v1408
      %v1410 = vrcp.pop %v1336
      %v1411 = vmul.f32 %v1336, %v1410
      %v1412 = vsub.f32 1.0, %v1411
      %v1413 = vmul.f32 %v1410, %v1412
      %v1414 = vadd.f32 %v1410, %v1413
      %vm1415 = vweird.f32 %v1336
      %vm1416 = vweird.f32 %v1410
      %vm1417 = vmor %vm1415, %vm1416
      %v1418 = vsel %vm1417, %v1410, %v1414
      %v1419 = vand.u32 2147483647, %v1336
      %vm1420 = vcmp.eq.f32.partialorder %v1419, 8.507059e+37
      %v1421 = vand.u32 %v1336, 2147483648
      %v1422 = vor.u32 1.1754944e-38, %v1421
      %v1423 = vsel %vm1420, %v1422, %v1418
      %v1424 = vmul.f32 1.0, %v1423
      %v1425 = vrcp.pop %v1337
      %v1426 = vmul.f32 %v1337, %v1425
      %v1427 = vsub.f32 1.0, %v1426
      %v1428 = vmul.f32 %v1425, %v1427
      %v1429 = vadd.f32 %v1425, %v1428
      %vm1430 = vweird.f32 %v1337
      %vm1431 = vweird.f32 %v1425
      %vm1432 = vmor %vm1430, %vm1431
      %v1433 = vsel %vm1432, %v1425, %v1429
      %v1434 = vand.u32 2147483647, %v1337
      %vm1435 = vcmp.eq.f32.partialorder %v1434, 8.507059e+37
      %v1436 = vand.u32 %v1337, 2147483648
      %v1437 = vor.u32 1.1754944e-38, %v1436
      %v1438 = vsel %vm1435, %v1437, %v1433
      %v1439 = vmul.f32 1.0, %v1438
      %v1440 = vrcp.pop %v1338
      %v1441 = vmul.f32 %v1338, %v1440
      %v1442 = vsub.f32 1.0, %v1441
      %v1443 = vmul.f32 %v1440, %v1442
      %v1444 = vadd.f32 %v1440, %v1443
      %vm1445 = vweird.f32 %v1338
      %vm1446 = vweird.f32 %v1440
      %vm1447 = vmor %vm1445, %vm1446
      %v1448 = vsel %vm1447, %v1440, %v1444
      %v1449 = vand.u32 2147483647, %v1338
      %vm1450 = vcmp.eq.f32.partialorder %v1449, 8.507059e+37
      %v1451 = vand.u32 %v1338, 2147483648
      %v1452 = vor.u32 1.1754944e-38, %v1451
      %v1453 = vsel %vm1450, %v1452, %v1448
      %v1454 = vmul.f32 1.0, %v1453
      %v1455 = vrcp.pop %v1339
      %v1456 = vmul.f32 %v1339, %v1455
      %v1457 = vsub.f32 1.0, %v1456
      %v1458 = vmul.f32 %v1455, %v1457
      %v1459 = vadd.f32 %v1455, %v1458
      %vm1460 = vweird.f32 %v1339
      %vm1461 = vweird.f32 %v1455
      %vm1462 = vmor %vm1460, %vm1461
      %v1463 = vsel %vm1462, %v1455, %v1459
      %v1464 = vand.u32 2147483647, %v1339
      %vm1465 = vcmp.eq.f32.partialorder %v1464, 8.507059e+37
      %v1466 = vand.u32 %v1339, 2147483648
      %v1467 = vor.u32 1.1754944e-38, %v1466
      %v1468 = vsel %vm1465, %v1467, %v1463
      %v1469 = vmul.f32 1.0, %v1468
      %v1470 = vrcp.pop %v1340
      %v1471 = vmul.f32 %v1340, %v1470
      %v1472 = vsub.f32 1.0, %v1471
      %v1473 = vmul.f32 %v1470, %v1472
      %v1474 = vadd.f32 %v1470, %v1473
      %vm1475 = vweird.f32 %v1340
      %vm1476 = vweird.f32 %v1470
      %vm1477 = vmor %vm1475, %vm1476
      %v1478 = vsel %vm1477, %v1470, %v1474
      %v1479 = vand.u32 2147483647, %v1340
      %vm1480 = vcmp.eq.f32.partialorder %v1479, 8.507059e+37
      %v1481 = vand.u32 %v1340, 2147483648
      %v1482 = vor.u32 1.1754944e-38, %v1481
      %v1483 = vsel %vm1480, %v1482, %v1478
      %v1484 = vmul.f32 1.0, %v1483
      %v1485 = vrcp.pop %v1341
      %v1486 = vmul.f32 %v1341, %v1485
      %v1487 = vsub.f32 1.0, %v1486
      %v1488 = vmul.f32 %v1485, %v1487
      %v1489 = vadd.f32 %v1485, %v1488
      %vm1490 = vweird.f32 %v1341
      %vm1491 = vweird.f32 %v1485
      %vm1492 = vmor %vm1490, %vm1491
      %v1493 = vsel %vm1492, %v1485, %v1489
      %v1494 = vand.u32 2147483647, %v1341
      %vm1495 = vcmp.eq.f32.partialorder %v1494, 8.507059e+37
      %v1496 = vand.u32 %v1341, 2147483648
      %v1497 = vor.u32 1.1754944e-38, %v1496
      %v1498 = vsel %vm1495, %v1497, %v1493
      %v1499 = vmul.f32 1.0, %v1498
      %v1500 = vrcp.pop %v1342
      %v1501 = vmul.f32 %v1342, %v1500
      %v1502 = vsub.f32 1.0, %v1501
      %v1503 = vmul.f32 %v1500, %v1502
      %v1504 = vadd.f32 %v1500, %v1503
      %vm1505 = vweird.f32 %v1342
      %vm1506 = vweird.f32 %v1500
      %vm1507 = vmor %vm1505, %vm1506
      %v1508 = vsel %vm1507, %v1500, %v1504
      %v1509 = vand.u32 2147483647, %v1342
      %vm1510 = vcmp.eq.f32.partialorder %v1509, 8.507059e+37
      %v1511 = vand.u32 %v1342, 2147483648
      %v1512 = vor.u32 1.1754944e-38, %v1511
      %v1513 = vsel %vm1510, %v1512, %v1508
      %v1514 = vmul.f32 1.0, %v1513
      %v1515 = vrcp.pop %v1343
      %v1516 = vmul.f32 %v1343, %v1515
      %v1517 = vsub.f32 1.0, %v1516
      %v1518 = vmul.f32 %v1515, %v1517
      %v1519 = vadd.f32 %v1515, %v1518
      %vm1520 = vweird.f32 %v1343
      %vm1521 = vweird.f32 %v1515
      %vm1522 = vmor %vm1520, %vm1521
      %v1523 = vsel %vm1522, %v1515, %v1519
      %v1524 = vand.u32 2147483647, %v1343
      %vm1525 = vcmp.eq.f32.partialorder %v1524, 8.507059e+37
      %v1526 = vand.u32 %v1343, 2147483648
      %v1527 = vor.u32 1.1754944e-38, %v1526
      %v1528 = vsel %vm1525, %v1527, %v1523
      %v1529 = vmul.f32 1.0, %v1528
      %v1530 = vrcp.pop %v1344
      %v1531 = vmul.f32 %v1344, %v1530
      %v1532 = vsub.f32 1.0, %v1531
      %v1533 = vmul.f32 %v1530, %v1532
      %v1534 = vadd.f32 %v1530, %v1533
      %vm1535 = vweird.f32 %v1344
      %vm1536 = vweird.f32 %v1530
      %vm1537 = vmor %vm1535, %vm1536
      %v1538 = vsel %vm1537, %v1530, %v1534
      %v1539 = vand.u32 2147483647, %v1344
      %vm1540 = vcmp.eq.f32.partialorder %v1539, 8.507059e+37
      %v1541 = vand.u32 %v1344, 2147483648
      %v1542 = vor.u32 1.1754944e-38, %v1541
      %v1543 = vsel %vm1540, %v1542, %v1538
      %v1544 = vmul.f32 1.0, %v1543
      %v1545 = vrcp.pop %v1345
      %v1546 = vmul.f32 %v1345, %v1545
      %v1547 = vsub.f32 1.0, %v1546
      %v1548 = vmul.f32 %v1545, %v1547
      %v1549 = vadd.f32 %v1545, %v1548
      %vm1550 = vweird.f32 %v1345
      %vm1551 = vweird.f32 %v1545
      %vm1552 = vmor %vm1550, %vm1551
      %v1553 = vsel %vm1552, %v1545, %v1549
      %v1554 = vand.u32 2147483647, %v1345
      %vm1555 = vcmp.eq.f32.partialorder %v1554, 8.507059e+37
      %v1556 = vand.u32 %v1345, 2147483648
      %v1557 = vor.u32 1.1754944e-38, %v1556
      %v1558 = vsel %vm1555, %v1557, %v1553
      %v1559 = vmul.f32 1.0, %v1558
      %v1560 = vrcp.pop %v1346
      %v1561 = vmul.f32 %v1346, %v1560
      %v1562 = vsub.f32 1.0, %v1561
      %v1563 = vmul.f32 %v1560, %v1562
      %v1564 = vadd.f32 %v1560, %v1563
      %vm1565 = vweird.f32 %v1346
      %vm1566 = vweird.f32 %v1560
      %vm1567 = vmor %vm1565, %vm1566
      %v1568 = vsel %vm1567, %v1560, %v1564
      %v1569 = vand.u32 2147483647, %v1346
      %vm1570 = vcmp.eq.f32.partialorder %v1569, 8.507059e+37
      %v1571 = vand.u32 %v1346, 2147483648
      %v1572 = vor.u32 1.1754944e-38, %v1571
      %v1573 = vsel %vm1570, %v1572, %v1568
      %v1574 = vmul.f32 1.0, %v1573
      %v1575 = vrcp.pop %v1347
      %v1576 = vmul.f32 %v1347, %v1575
      %v1577 = vsub.f32 1.0, %v1576
      %v1578 = vmul.f32 %v1575, %v1577
      %v1579 = vadd.f32 %v1575, %v1578
      %vm1580 = vweird.f32 %v1347
      %vm1581 = vweird.f32 %v1575
      %vm1582 = vmor %vm1580, %vm1581
      %v1583 = vsel %vm1582, %v1575, %v1579
      %v1584 = vand.u32 2147483647, %v1347
      %vm1585 = vcmp.eq.f32.partialorder %v1584, 8.507059e+37
      %v1586 = vand.u32 %v1347, 2147483648
      %v1587 = vor.u32 1.1754944e-38, %v1586
      %v1588 = vsel %vm1585, %v1587, %v1583
      %v1589 = vmul.f32 1.0, %v1588
      %v1590 = vrcp.pop %v1348
      %v1591 = vmul.f32 %v1348, %v1590
      %v1592 = vsub.f32 1.0, %v1591
      %v1593 = vmul.f32 %v1590, %v1592
      %v1594 = vadd.f32 %v1590, %v1593
      %vm1595 = vweird.f32 %v1348
      %vm1596 = vweird.f32 %v1590
      %vm1597 = vmor %vm1595, %vm1596
      %v1598 = vsel %vm1597, %v1590, %v1594
      %v1599 = vand.u32 2147483647, %v1348
      %vm1600 = vcmp.eq.f32.partialorder %v1599, 8.507059e+37
      %v1601 = vand.u32 %v1348, 2147483648
      %v1602 = vor.u32 1.1754944e-38, %v1601
      %v1603 = vsel %vm1600, %v1602, %v1598
      %v1604 = vmul.f32 1.0, %v1603
      %v1605 = vrcp.pop %v1349
      %v1606 = vmul.f32 %v1349, %v1605
      %v1607 = vsub.f32 1.0, %v1606
      %v1608 = vmul.f32 %v1605, %v1607
      %v1609 = vadd.f32 %v1605, %v1608
      %vm1610 = vweird.f32 %v1349
      %vm1611 = vweird.f32 %v1605
      %vm1612 = vmor %vm1610, %vm1611
      %v1613 = vsel %vm1612, %v1605, %v1609
      %v1614 = vand.u32 2147483647, %v1349
      %vm1615 = vcmp.eq.f32.partialorder %v1614, 8.507059e+37
      %v1616 = vand.u32 %v1349, 2147483648
      %v1617 = vor.u32 1.1754944e-38, %v1616
      %v1618 = vsel %vm1615, %v1617, %v1613
      %v1619 = vmul.f32 1.0, %v1618
      %v1620 = vrcp.pop %v1350
      %v1621 = vmul.f32 %v1350, %v1620
      %v1622 = vsub.f32 1.0, %v1621
      %v1623 = vmul.f32 %v1620, %v1622
      %v1624 = vadd.f32 %v1620, %v1623
      %vm1625 = vweird.f32 %v1350
      %vm1626 = vweird.f32 %v1620
      %vm1627 = vmor %vm1625, %vm1626
      %v1628 = vsel %vm1627, %v1620, %v1624
      %v1629 = vand.u32 2147483647, %v1350
      %vm1630 = vcmp.eq.f32.partialorder %v1629, 8.507059e+37
      %v1631 = vand.u32 %v1350, 2147483648
      %v1632 = vor.u32 1.1754944e-38, %v1631
      %v1633 = vsel %vm1630, %v1632, %v1628
      %v1634 = vmul.f32 1.0, %v1633
      %v1635 = vrcp.pop %v1351
      %v1636 = vmul.f32 %v1351, %v1635
      %v1637 = vsub.f32 1.0, %v1636
      %v1638 = vmul.f32 %v1635, %v1637
      %v1639 = vadd.f32 %v1635, %v1638
      %vm1640 = vweird.f32 %v1351
      %vm1641 = vweird.f32 %v1635
      %vm1642 = vmor %vm1640, %vm1641
      %v1643 = vsel %vm1642, %v1635, %v1639
      %v1644 = vand.u32 2147483647, %v1351
      %vm1645 = vcmp.eq.f32.partialorder %v1644, 8.507059e+37
      %v1646 = vand.u32 %v1351, 2147483648
      %v1647 = vor.u32 1.1754944e-38, %v1646
      %v1648 = vsel %vm1645, %v1647, %v1643
      %v1649 = vmul.f32 1.0, %v1648
      %v1650 = vrcp.pop %v1352
      %v1651 = vmul.f32 %v1352, %v1650
      %v1652 = vsub.f32 1.0, %v1651
      %v1653 = vmul.f32 %v1650, %v1652
      %v1654 = vadd.f32 %v1650, %v1653
      %vm1655 = vweird.f32 %v1352
      %vm1656 = vweird.f32 %v1650
      %vm1657 = vmor %vm1655, %vm1656
      %v1658 = vsel %vm1657, %v1650, %v1654
      %v1659 = vand.u32 2147483647, %v1352
      %vm1660 = vcmp.eq.f32.partialorder %v1659, 8.507059e+37
      %v1661 = vand.u32 %v1352, 2147483648
      %v1662 = vor.u32 1.1754944e-38, %v1661
      %v1663 = vsel %vm1660, %v1662, %v1658
      %v1664 = vmul.f32 1.0, %v1663
      %v1665 = vrcp.pop %v1353
      %v1666 = vmul.f32 %v1353, %v1665
      %v1667 = vsub.f32 1.0, %v1666
      %v1668 = vmul.f32 %v1665, %v1667
      %v1669 = vadd.f32 %v1665, %v1668
      %vm1670 = vweird.f32 %v1353
      %vm1671 = vweird.f32 %v1665
      %vm1672 = vmor %vm1670, %vm1671
      %v1673 = vsel %vm1672, %v1665, %v1669
      %v1674 = vand.u32 2147483647, %v1353
      %vm1675 = vcmp.eq.f32.partialorder %v1674, 8.507059e+37
      %v1676 = vand.u32 %v1353, 2147483648
      %v1677 = vor.u32 1.1754944e-38, %v1676
      %v1678 = vsel %vm1675, %v1677, %v1673
      %v1679 = vmul.f32 1.0, %v1678
      %v1680 = vrcp.pop %v1354
      %v1681 = vmul.f32 %v1354, %v1680
      %v1682 = vsub.f32 1.0, %v1681
      %v1683 = vmul.f32 %v1680, %v1682
      %v1684 = vadd.f32 %v1680, %v1683
      %vm1685 = vweird.f32 %v1354
      %vm1686 = vweird.f32 %v1680
      %vm1687 = vmor %vm1685, %vm1686
      %v1688 = vsel %vm1687, %v1680, %v1684
      %v1689 = vand.u32 2147483647, %v1354
      %vm1690 = vcmp.eq.f32.partialorder %v1689, 8.507059e+37
      %v1691 = vand.u32 %v1354, 2147483648
      %v1692 = vor.u32 1.1754944e-38, %v1691
      %v1693 = vsel %vm1690, %v1692, %v1688
      %v1694 = vmul.f32 1.0, %v1693
      %v1695 = vrcp.pop %v1355
      %v1696 = vmul.f32 %v1355, %v1695
      %v1697 = vsub.f32 1.0, %v1696
      %v1698 = vmul.f32 %v1695, %v1697
      %v1699 = vadd.f32 %v1695, %v1698
      %vm1700 = vweird.f32 %v1355
      %vm1701 = vweird.f32 %v1695
      %vm1702 = vmor %vm1700, %vm1701
      %v1703 = vsel %vm1702, %v1695, %v1699
      %v1704 = vand.u32 2147483647, %v1355
      %vm1705 = vcmp.eq.f32.partialorder %v1704, 8.507059e+37
      %v1706 = vand.u32 %v1355, 2147483648
      %v1707 = vor.u32 1.1754944e-38, %v1706
      %v1708 = vsel %vm1705, %v1707, %v1703
      %v1709 = vmul.f32 1.0, %v1708
      %v1710 = vrcp.pop %v1356
      %v1711 = vmul.f32 %v1356, %v1710
      %v1712 = vsub.f32 1.0, %v1711
      %v1713 = vmul.f32 %v1710, %v1712
      %v1714 = vadd.f32 %v1710, %v1713
      %vm1715 = vweird.f32 %v1356
      %vm1716 = vweird.f32 %v1710
      %vm1717 = vmor %vm1715, %vm1716
      %v1718 = vsel %vm1717, %v1710, %v1714
      %v1719 = vand.u32 2147483647, %v1356
      %vm1720 = vcmp.eq.f32.partialorder %v1719, 8.507059e+37
      %v1721 = vand.u32 %v1356, 2147483648
      %v1722 = vor.u32 1.1754944e-38, %v1721
      %v1723 = vsel %vm1720, %v1722, %v1718
      %v1724 = vmul.f32 1.0, %v1723
      %v1725 = vrcp.pop %v1357
      %v1726 = vmul.f32 %v1357, %v1725
      %v1727 = vsub.f32 1.0, %v1726
      %v1728 = vmul.f32 %v1725, %v1727
      %v1729 = vadd.f32 %v1725, %v1728
      %vm1730 = vweird.f32 %v1357
      %vm1731 = vweird.f32 %v1725
      %vm1732 = vmor %vm1730, %vm1731
      %v1733 = vsel %vm1732, %v1725, %v1729
      %v1734 = vand.u32 2147483647, %v1357
      %vm1735 = vcmp.eq.f32.partialorder %v1734, 8.507059e+37
      %v1736 = vand.u32 %v1357, 2147483648
      %v1737 = vor.u32 1.1754944e-38, %v1736
      %v1738 = vsel %vm1735, %v1737, %v1733
      %v1739 = vmul.f32 1.0, %v1738
      %v1740 = vrcp.pop %v1358
      %v1741 = vmul.f32 %v1358, %v1740
      %v1742 = vsub.f32 1.0, %v1741
      %v1743 = vmul.f32 %v1740, %v1742
      %v1744 = vadd.f32 %v1740, %v1743
      %vm1745 = vweird.f32 %v1358
      %vm1746 = vweird.f32 %v1740
      %vm1747 = vmor %vm1745, %vm1746
      %v1748 = vsel %vm1747, %v1740, %v1744
      %v1749 = vand.u32 2147483647, %v1358
      %vm1750 = vcmp.eq.f32.partialorder %v1749, 8.507059e+37
      %v1751 = vand.u32 %v1358, 2147483648
      %v1752 = vor.u32 1.1754944e-38, %v1751
      %v1753 = vsel %vm1750, %v1752, %v1748
      %v1754 = vmul.f32 1.0, %v1753
      %v1755 = vrcp.pop %v1359
      %v1756 = vmul.f32 %v1359, %v1755
      %v1757 = vsub.f32 1.0, %v1756
      %v1758 = vmul.f32 %v1755, %v1757
      %v1759 = vadd.f32 %v1755, %v1758
      %vm1760 = vweird.f32 %v1359
      %vm1761 = vweird.f32 %v1755
      %vm1762 = vmor %vm1760, %vm1761
      %v1763 = vsel %vm1762, %v1755, %v1759
      %v1764 = vand.u32 2147483647, %v1359
      %vm1765 = vcmp.eq.f32.partialorder %v1764, 8.507059e+37
      %v1766 = vand.u32 %v1359, 2147483648
      %v1767 = vor.u32 1.1754944e-38, %v1766
      %v1768 = vsel %vm1765, %v1767, %v1763
      %v1769 = vmul.f32 1.0, %v1768
      %v1770 = vrcp.pop %v1360
      %v1771 = vmul.f32 %v1360, %v1770
      %v1772 = vsub.f32 1.0, %v1771
      %v1773 = vmul.f32 %v1770, %v1772
      %v1774 = vadd.f32 %v1770, %v1773
      %vm1775 = vweird.f32 %v1360
      %vm1776 = vweird.f32 %v1770
      %vm1777 = vmor %vm1775, %vm1776
      %v1778 = vsel %vm1777, %v1770, %v1774
      %v1779 = vand.u32 2147483647, %v1360
      %vm1780 = vcmp.eq.f32.partialorder %v1779, 8.507059e+37
      %v1781 = vand.u32 %v1360, 2147483648
      %v1782 = vor.u32 1.1754944e-38, %v1781
      %v1783 = vsel %vm1780, %v1782, %v1778
      %v1784 = vmul.f32 1.0, %v1783
      %v1785 = vrcp.pop %v1361
      %v1786 = vmul.f32 %v1361, %v1785
      %v1787 = vsub.f32 1.0, %v1786
      %v1788 = vmul.f32 %v1785, %v1787
      %v1789 = vadd.f32 %v1785, %v1788
      %vm1790 = vweird.f32 %v1361
      %vm1791 = vweird.f32 %v1785
      %vm1792 = vmor %vm1790, %vm1791
      %v1793 = vsel %vm1792, %v1785, %v1789
      %v1794 = vand.u32 2147483647, %v1361
      %vm1795 = vcmp.eq.f32.partialorder %v1794, 8.507059e+37
      %v1796 = vand.u32 %v1361, 2147483648
      %v1797 = vor.u32 1.1754944e-38, %v1796
      %v1798 = vsel %vm1795, %v1797, %v1793
      %v1799 = vmul.f32 1.0, %v1798
      %v1800 = vrcp.pop %v1362
      %v1801 = vmul.f32 %v1362, %v1800
      %v1802 = vsub.f32 1.0, %v1801
      %v1803 = vmul.f32 %v1800, %v1802
      %v1804 = vadd.f32 %v1800, %v1803
      %vm1805 = vweird.f32 %v1362
      %vm1806 = vweird.f32 %v1800
      %vm1807 = vmor %vm1805, %vm1806
      %v1808 = vsel %vm1807, %v1800, %v1804
      %v1809 = vand.u32 2147483647, %v1362
      %vm1810 = vcmp.eq.f32.partialorder %v1809, 8.507059e+37
      %v1811 = vand.u32 %v1362, 2147483648
      %v1812 = vor.u32 1.1754944e-38, %v1811
      %v1813 = vsel %vm1810, %v1812, %v1808
      %v1814 = vmul.f32 1.0, %v1813
      %v1815 = vrcp.pop %v1363
      %v1816 = vmul.f32 %v1363, %v1815
      %v1817 = vsub.f32 1.0, %v1816
      %v1818 = vmul.f32 %v1815, %v1817
      %v1819 = vadd.f32 %v1815, %v1818
      %vm1820 = vweird.f32 %v1363
      %vm1821 = vweird.f32 %v1815
      %vm1822 = vmor %vm1820, %vm1821
      %v1823 = vsel %vm1822, %v1815, %v1819
      %v1824 = vand.u32 2147483647, %v1363
      %vm1825 = vcmp.eq.f32.partialorder %v1824, 8.507059e+37
      %v1826 = vand.u32 %v1363, 2147483648
      %v1827 = vor.u32 1.1754944e-38, %v1826
      %v1828 = vsel %vm1825, %v1827, %v1823
      %v1829 = vmul.f32 1.0, %v1828
      %v1830 = vrcp.pop %v1364
      %v1831 = vmul.f32 %v1364, %v1830
      %v1832 = vsub.f32 1.0, %v1831
      %v1833 = vmul.f32 %v1830, %v1832
      %v1834 = vadd.f32 %v1830, %v1833
      %vm1835 = vweird.f32 %v1364
      %vm1836 = vweird.f32 %v1830
      %vm1837 = vmor %vm1835, %vm1836
      %v1838 = vsel %vm1837, %v1830, %v1834
      %v1839 = vand.u32 2147483647, %v1364
      %vm1840 = vcmp.eq.f32.partialorder %v1839, 8.507059e+37
      %v1841 = vand.u32 %v1364, 2147483648
      %v1842 = vor.u32 1.1754944e-38, %v1841
      %v1843 = vsel %vm1840, %v1842, %v1838
      %v1844 = vmul.f32 1.0, %v1843
      %v1845 = vld [vmem:[%s482] sm:$0xff]
      %v1846 = vld [vmem:[%s482 + $0x8] sm:$0xff]
      %v1847 = vld [vmem:[%s482 + $0x10] sm:$0xff]
      %v1848 = vld [vmem:[%s482 + $0x18] sm:$0xff]
      %v1849 = vld [vmem:[%s482 + $0x20] sm:$0xff]
      %v1850 = vld [vmem:[%s482 + $0x28] sm:$0xff]
      %v1851 = vld [vmem:[%s482 + $0x30] sm:$0xff]
      %v1852 = vld [vmem:[%s482 + $0x38] sm:$0xff]
      %v1853 = vld [vmem:[%s482 + $0x40] sm:$0xff]
      %v1854 = vld [vmem:[%s482 + $0x48] sm:$0xff]
      %v1855 = vld [vmem:[%s482 + $0x50] sm:$0xff]
      %v1856 = vld [vmem:[%s482 + $0x58] sm:$0xff]
      %v1857 = vld [vmem:[%s482 + $0x60] sm:$0xff]
      %v1858 = vld [vmem:[%s482 + $0x68] sm:$0xff]
      %v1859 = vld [vmem:[%s482 + $0x70] sm:$0xff]
      %v1860 = vld [vmem:[%s482 + $0x78] sm:$0xff]
      %v1861 = vld [vmem:[%s482 + $0x80] sm:$0xff]
      %v1862 = vld [vmem:[%s482 + $0x88] sm:$0xff]
      %v1863 = vld [vmem:[%s482 + $0x90] sm:$0xff]
      %v1864 = vld [vmem:[%s482 + $0x98] sm:$0xff]
      %v1865 = vld [vmem:[%s482 + $0xa0] sm:$0xff]
      %v1866 = vld [vmem:[%s482 + $0xa8] sm:$0xff]
      %v1867 = vld [vmem:[%s482 + $0xb0] sm:$0xff]
      %v1868 = vld [vmem:[%s482 + $0xb8] sm:$0xff]
      %v1869 = vld [vmem:[%s482 + $0xc0] sm:$0xff]
      %v1870 = vld [vmem:[%s482 + $0xc8] sm:$0xff]
      %v1871 = vld [vmem:[%s482 + $0xd0] sm:$0xff]
      %v1872 = vld [vmem:[%s482 + $0xd8] sm:$0xff]
      %v1873 = vld [vmem:[%s482 + $0xe0] sm:$0xff]
      %v1874 = vld [vmem:[%s482 + $0xe8] sm:$0xff]
      %v1875 = vld [vmem:[%s482 + $0xf0] sm:$0xff]
      %v1876 = vld [vmem:[%s482 + $0xf8] sm:$0xff]
      %v1877 = vld [vmem:[%s8] sm:$0xff]
      %v1878 = vld [vmem:[%s8 + $0x8] sm:$0xff]
      %v1879 = vld [vmem:[%s8 + $0x10] sm:$0xff]
      %v1880 = vld [vmem:[%s8 + $0x18] sm:$0xff]
      %v1881 = vld [vmem:[%s8 + $0x20] sm:$0xff]
      %v1882 = vld [vmem:[%s8 + $0x28] sm:$0xff]
      %v1883 = vld [vmem:[%s8 + $0x30] sm:$0xff]
      %v1884 = vld [vmem:[%s8 + $0x38] sm:$0xff]
      %v1885 = vld [vmem:[%s9] sm:$0x1]
      %v1887 = vperm.slane %v1885, 0
      %v1890 = vsel %vm780, %v1845, 0
      %v1893 = vsel %vm780, %v1846, 0
      %v1896 = vsel %vm780, %v1847, 0
      %v1899 = vsel %vm780, %v1848, 0
      %v1902 = vsel %vm780, %v1849, 0
      %v1905 = vsel %vm780, %v1850, 0
      %v1908 = vsel %vm780, %v1851, 0
      %v1911 = vsel %vm780, %v1852, 0
      %v1914 = vsel %vm780, %v1853, 0
      %v1917 = vsel %vm780, %v1854, 0
      %v1920 = vsel %vm780, %v1855, 0
      %v1923 = vsel %vm780, %v1856, 0
      %v1926 = vsel %vm780, %v1857, 0
      %v1929 = vsel %vm780, %v1858, 0
      %v1932 = vsel %vm780, %v1859, 0
      %v1935 = vsel %vm780, %v1860, 0
      %v1938 = vsel %vm780, %v1861, 0
      %v1941 = vsel %vm780, %v1862, 0
      %v1944 = vsel %vm780, %v1863, 0
      %v1947 = vsel %vm780, %v1864, 0
      %v1950 = vsel %vm780, %v1865, 0
      %v1953 = vsel %vm780, %v1866, 0
      %v1956 = vsel %vm780, %v1867, 0
      %v1959 = vsel %vm780, %v1868, 0
      %v1962 = vsel %vm780, %v1869, 0
      %v1965 = vsel %vm780, %v1870, 0
      %v1968 = vsel %vm780, %v1871, 0
      %v1971 = vsel %vm780, %v1872, 0
      %v1974 = vsel %vm780, %v1873, 0
      %v1977 = vsel %vm780, %v1874, 0
      %v1980 = vsel %vm780, %v1875, 0
      %v1983 = vsel %vm780, %v1876, 0
      %1985 = vmatpush.msra.mxu0 0.0
      %1986 = vmatpush.msra.mxu0 0.0
      %1987 = vmatpush.msra.mxu0 0.0
      %1988 = vmatpush.msra.mxu0 0.0
      %1989 = vmatpush.msra.mxu0 0.0
      %1990 = vmatpush.msra.mxu0 0.0
      %1991 = vmatpush.msra.mxu0 0.0
      %1992 = vmatpush.msra.mxu0 0.0
      %1993 = vmatpush.msra.mxu0 %v1884
      %1994 = vmatpush.msra.mxu0 %v1883
      %1995 = vmatpush.msra.mxu0 %v1882
      %1996 = vmatpush.msra.mxu0 %v1881
      %1997 = vmatpush.msra.mxu0 %v1880
      %1998 = vmatpush.msra.mxu0 %v1879
      %1999 = vmatpush.msra.mxu0 %v1878
      %2000 = vmatpush.msra.mxu0 %v1877
      %2001 = vmatmul.f32.gmra.mxu0 %v1890
      %v2002 = vpop.f32.mrf.mxu0
      %v2003 = vadd.f32 %v1887, %v2002
      %2004 = vmatmul.f32.gmra.mxu0 %v1893
      %v2005 = vpop.f32.mrf.mxu0
      %v2006 = vadd.f32 %v1887, %v2005
      %2007 = vmatmul.f32.gmra.mxu0 %v1896
      %v2008 = vpop.f32.mrf.mxu0
      %v2009 = vadd.f32 %v1887, %v2008
      %2010 = vmatmul.f32.gmra.mxu0 %v1899
      %v2011 = vpop.f32.mrf.mxu0
      %v2012 = vadd.f32 %v1887, %v2011
      %2013 = vmatmul.f32.gmra.mxu0 %v1902
      %v2014 = vpop.f32.mrf.mxu0
      %v2015 = vadd.f32 %v1887, %v2014
      %2016 = vmatmul.f32.gmra.mxu0 %v1905
      %v2017 = vpop.f32.mrf.mxu0
      %v2018 = vadd.f32 %v1887, %v2017
      %2019 = vmatmul.f32.gmra.mxu0 %v1908
      %v2020 = vpop.f32.mrf.mxu0
      %v2021 = vadd.f32 %v1887, %v2020
      %2022 = vmatmul.f32.gmra.mxu0 %v1911
      %v2023 = vpop.f32.mrf.mxu0
      %v2024 = vadd.f32 %v1887, %v2023
      %2025 = vmatmul.f32.gmra.mxu0 %v1914
      %v2026 = vpop.f32.mrf.mxu0
      %v2027 = vadd.f32 %v1887, %v2026
      %2028 = vmatmul.f32.gmra.mxu0 %v1917
      %v2029 = vpop.f32.mrf.mxu0
      %v2030 = vadd.f32 %v1887, %v2029
      %2031 = vmatmul.f32.gmra.mxu0 %v1920
      %v2032 = vpop.f32.mrf.mxu0
      %v2033 = vadd.f32 %v1887, %v2032
      %2034 = vmatmul.f32.gmra.mxu0 %v1923
      %v2035 = vpop.f32.mrf.mxu0
      %v2036 = vadd.f32 %v1887, %v2035
      %2037 = vmatmul.f32.gmra.mxu0 %v1926
      %v2038 = vpop.f32.mrf.mxu0
      %v2039 = vadd.f32 %v1887, %v2038
      %2040 = vmatmul.f32.gmra.mxu0 %v1929
      %v2041 = vpop.f32.mrf.mxu0
      %v2042 = vadd.f32 %v1887, %v2041
      %2043 = vmatmul.f32.gmra.mxu0 %v1932
      %v2044 = vpop.f32.mrf.mxu0
      %v2045 = vadd.f32 %v1887, %v2044
      %2046 = vmatmul.f32.gmra.mxu0 %v1935
      %v2047 = vpop.f32.mrf.mxu0
      %v2048 = vadd.f32 %v1887, %v2047
      %2049 = vmatmul.f32.gmra.mxu0 %v1938
      %v2050 = vpop.f32.mrf.mxu0
      %v2051 = vadd.f32 %v1887, %v2050
      %2052 = vmatmul.f32.gmra.mxu0 %v1941
      %v2053 = vpop.f32.mrf.mxu0
      %v2054 = vadd.f32 %v1887, %v2053
      %2055 = vmatmul.f32.gmra.mxu0 %v1944
      %v2056 = vpop.f32.mrf.mxu0
      %v2057 = vadd.f32 %v1887, %v2056
      %2058 = vmatmul.f32.gmra.mxu0 %v1947
      %v2059 = vpop.f32.mrf.mxu0
      %v2060 = vadd.f32 %v1887, %v2059
      %2061 = vmatmul.f32.gmra.mxu0 %v1950
      %v2062 = vpop.f32.mrf.mxu0
      %v2063 = vadd.f32 %v1887, %v2062
      %2064 = vmatmul.f32.gmra.mxu0 %v1953
      %v2065 = vpop.f32.mrf.mxu0
      %v2066 = vadd.f32 %v1887, %v2065
      %2067 = vmatmul.f32.gmra.mxu0 %v1956
      %v2068 = vpop.f32.mrf.mxu0
      %v2069 = vadd.f32 %v1887, %v2068
      %2070 = vmatmul.f32.gmra.mxu0 %v1959
      %v2071 = vpop.f32.mrf.mxu0
      %v2072 = vadd.f32 %v1887, %v2071
      %2073 = vmatmul.f32.gmra.mxu0 %v1962
      %v2074 = vpop.f32.mrf.mxu0
      %v2075 = vadd.f32 %v1887, %v2074
      %2076 = vmatmul.f32.gmra.mxu0 %v1965
      %v2077 = vpop.f32.mrf.mxu0
      %v2078 = vadd.f32 %v1887, %v2077
      %2079 = vmatmul.f32.gmra.mxu0 %v1968
      %v2080 = vpop.f32.mrf.mxu0
      %v2081 = vadd.f32 %v1887, %v2080
      %2082 = vmatmul.f32.gmra.mxu0 %v1971
      %v2083 = vpop.f32.mrf.mxu0
      %v2084 = vadd.f32 %v1887, %v2083
      %2085 = vmatmul.f32.gmra.mxu0 %v1974
      %v2086 = vpop.f32.mrf.mxu0
      %v2087 = vadd.f32 %v1887, %v2086
      %2088 = vmatmul.f32.gmra.mxu0 %v1977
      %v2089 = vpop.f32.mrf.mxu0
      %v2090 = vadd.f32 %v1887, %v2089
      %2091 = vmatmul.f32.gmra.mxu0 %v1980
      %v2092 = vpop.f32.mrf.mxu0
      %v2093 = vadd.f32 %v1887, %v2092
      %2094 = vmatmul.f32.gmra.mxu0 %v1983
      %v2095 = vpop.f32.mrf.mxu0
      %v2096 = vadd.f32 %v1887, %v2095
      %2097 = vdwg.mxu0
      %v2098 = vmax.f32 %v2003, 0.0
      %v2099 = vmax.f32 %v2006, 0.0
      %v2100 = vmax.f32 %v2009, 0.0
      %v2101 = vmax.f32 %v2012, 0.0
      %v2102 = vmax.f32 %v2015, 0.0
      %v2103 = vmax.f32 %v2018, 0.0
      %v2104 = vmax.f32 %v2021, 0.0
      %v2105 = vmax.f32 %v2024, 0.0
      %v2106 = vmax.f32 %v2027, 0.0
      %v2107 = vmax.f32 %v2030, 0.0
      %v2108 = vmax.f32 %v2033, 0.0
      %v2109 = vmax.f32 %v2036, 0.0
      %v2110 = vmax.f32 %v2039, 0.0
      %v2111 = vmax.f32 %v2042, 0.0
      %v2112 = vmax.f32 %v2045, 0.0
      %v2113 = vmax.f32 %v2048, 0.0
      %v2114 = vmax.f32 %v2051, 0.0
      %v2115 = vmax.f32 %v2054, 0.0
      %v2116 = vmax.f32 %v2057, 0.0
      %v2117 = vmax.f32 %v2060, 0.0
      %v2118 = vmax.f32 %v2063, 0.0
      %v2119 = vmax.f32 %v2066, 0.0
      %v2120 = vmax.f32 %v2069, 0.0
      %v2121 = vmax.f32 %v2072, 0.0
      %v2122 = vmax.f32 %v2075, 0.0
      %v2123 = vmax.f32 %v2078, 0.0
      %v2124 = vmax.f32 %v2081, 0.0
      %v2125 = vmax.f32 %v2084, 0.0
      %v2126 = vmax.f32 %v2087, 0.0
      %v2127 = vmax.f32 %v2090, 0.0
      %v2128 = vmax.f32 %v2093, 0.0
      %v2129 = vmax.f32 %v2096, 0.0
      %v2130 = vld [vmem:[%s10] sm:$0xff]
      %v2131 = vld [vmem:[%s10 + $0x8] sm:$0xff]
      %v2132 = vld [vmem:[%s11] sm:$0x1]
      %v2134 = vperm.slane %v2132, 0
      %v2137 = vsel %vm526, %v2098, 0
      %v2140 = vsel %vm526, %v2099, 0
      %v2143 = vsel %vm526, %v2100, 0
      %v2146 = vsel %vm526, %v2101, 0
      %v2149 = vsel %vm526, %v2102, 0
      %v2152 = vsel %vm526, %v2103, 0
      %v2155 = vsel %vm526, %v2104, 0
      %v2158 = vsel %vm526, %v2105, 0
      %v2161 = vsel %vm526, %v2106, 0
      %v2164 = vsel %vm526, %v2107, 0
      %v2167 = vsel %vm526, %v2108, 0
      %v2170 = vsel %vm526, %v2109, 0
      %v2173 = vsel %vm526, %v2110, 0
      %v2176 = vsel %vm526, %v2111, 0
      %v2179 = vsel %vm526, %v2112, 0
      %v2182 = vsel %vm526, %v2113, 0
      %v2185 = vsel %vm526, %v2114, 0
      %v2188 = vsel %vm526, %v2115, 0
      %v2191 = vsel %vm526, %v2116, 0
      %v2194 = vsel %vm526, %v2117, 0
      %v2197 = vsel %vm526, %v2118, 0
      %v2200 = vsel %vm526, %v2119, 0
      %v2203 = vsel %vm526, %v2120, 0
      %v2206 = vsel %vm526, %v2121, 0
      %v2209 = vsel %vm526, %v2122, 0
      %v2212 = vsel %vm526, %v2123, 0
      %v2215 = vsel %vm526, %v2124, 0
      %v2218 = vsel %vm526, %v2125, 0
      %v2221 = vsel %vm526, %v2126, 0
      %v2224 = vsel %vm526, %v2127, 0
      %v2227 = vsel %vm526, %v2128, 0
      %v2230 = vsel %vm526, %v2129, 0
      %2232 = vmatpush.msra.mxu0 0.0
      %2233 = vmatpush.msra.mxu0 0.0
      %2234 = vmatpush.msra.mxu0 0.0
      %2235 = vmatpush.msra.mxu0 0.0
      %2236 = vmatpush.msra.mxu0 0.0
      %2237 = vmatpush.msra.mxu0 0.0
      %2238 = vmatpush.msra.mxu0 0.0
      %2239 = vmatpush.msra.mxu0 0.0
      %2240 = vmatpush.msra.mxu0 0.0
      %2241 = vmatpush.msra.mxu0 0.0
      %2242 = vmatpush.msra.mxu0 0.0
      %2243 = vmatpush.msra.mxu0 0.0
      %2244 = vmatpush.msra.mxu0 0.0
      %2245 = vmatpush.msra.mxu0 0.0
      %2246 = vmatpush.msra.mxu0 %v2131
      %2247 = vmatpush.msra.mxu0 %v2130
      %2248 = vmatmul.f32.gmra.mxu0 %v2137
      %v2249 = vpop.f32.mrf.mxu0
      %v2250 = vadd.f32 %v2134, %v2249
      %2251 = vmatmul.f32.gmra.mxu0 %v2140
      %v2252 = vpop.f32.mrf.mxu0
      %v2253 = vadd.f32 %v2134, %v2252
      %2254 = vmatmul.f32.gmra.mxu0 %v2143
      %v2255 = vpop.f32.mrf.mxu0
      %v2256 = vadd.f32 %v2134, %v2255
      %2257 = vmatmul.f32.gmra.mxu0 %v2146
      %v2258 = vpop.f32.mrf.mxu0
      %v2259 = vadd.f32 %v2134, %v2258
      %2260 = vmatmul.f32.gmra.mxu0 %v2149
      %v2261 = vpop.f32.mrf.mxu0
      %v2262 = vadd.f32 %v2134, %v2261
      %2263 = vmatmul.f32.gmra.mxu0 %v2152
      %v2264 = vpop.f32.mrf.mxu0
      %v2265 = vadd.f32 %v2134, %v2264
      %2266 = vmatmul.f32.gmra.mxu0 %v2155
      %v2267 = vpop.f32.mrf.mxu0
      %v2268 = vadd.f32 %v2134, %v2267
      %2269 = vmatmul.f32.gmra.mxu0 %v2158
      %v2270 = vpop.f32.mrf.mxu0
      %v2271 = vadd.f32 %v2134, %v2270
      %2272 = vmatmul.f32.gmra.mxu0 %v2161
      %v2273 = vpop.f32.mrf.mxu0
      %v2274 = vadd.f32 %v2134, %v2273
      %2275 = vmatmul.f32.gmra.mxu0 %v2164
      %v2276 = vpop.f32.mrf.mxu0
      %v2277 = vadd.f32 %v2134, %v2276
      %2278 = vmatmul.f32.gmra.mxu0 %v2167
      %v2279 = vpop.f32.mrf.mxu0
      %v2280 = vadd.f32 %v2134, %v2279
      %2281 = vmatmul.f32.gmra.mxu0 %v2170
      %v2282 = vpop.f32.mrf.mxu0
      %v2283 = vadd.f32 %v2134, %v2282
      %2284 = vmatmul.f32.gmra.mxu0 %v2173
      %v2285 = vpop.f32.mrf.mxu0
      %v2286 = vadd.f32 %v2134, %v2285
      %2287 = vmatmul.f32.gmra.mxu0 %v2176
      %v2288 = vpop.f32.mrf.mxu0
      %v2289 = vadd.f32 %v2134, %v2288
      %2290 = vmatmul.f32.gmra.mxu0 %v2179
      %v2291 = vpop.f32.mrf.mxu0
      %v2292 = vadd.f32 %v2134, %v2291
      %2293 = vmatmul.f32.gmra.mxu0 %v2182
      %v2294 = vpop.f32.mrf.mxu0
      %v2295 = vadd.f32 %v2134, %v2294
      %2296 = vmatmul.f32.gmra.mxu0 %v2185
      %v2297 = vpop.f32.mrf.mxu0
      %v2298 = vadd.f32 %v2134, %v2297
      %2299 = vmatmul.f32.gmra.mxu0 %v2188
      %v2300 = vpop.f32.mrf.mxu0
      %v2301 = vadd.f32 %v2134, %v2300
      %2302 = vmatmul.f32.gmra.mxu0 %v2191
      %v2303 = vpop.f32.mrf.mxu0
      %v2304 = vadd.f32 %v2134, %v2303
      %2305 = vmatmul.f32.gmra.mxu0 %v2194
      %v2306 = vpop.f32.mrf.mxu0
      %v2307 = vadd.f32 %v2134, %v2306
      %2308 = vmatmul.f32.gmra.mxu0 %v2197
      %v2309 = vpop.f32.mrf.mxu0
      %v2310 = vadd.f32 %v2134, %v2309
      %2311 = vmatmul.f32.gmra.mxu0 %v2200
      %v2312 = vpop.f32.mrf.mxu0
      %v2313 = vadd.f32 %v2134, %v2312
      %2314 = vmatmul.f32.gmra.mxu0 %v2203
      %v2315 = vpop.f32.mrf.mxu0
      %v2316 = vadd.f32 %v2134, %v2315
      %2317 = vmatmul.f32.gmra.mxu0 %v2206
      %v2318 = vpop.f32.mrf.mxu0
      %v2319 = vadd.f32 %v2134, %v2318
      %2320 = vmatmul.f32.gmra.mxu0 %v2209
      %v2321 = vpop.f32.mrf.mxu0
      %v2322 = vadd.f32 %v2134, %v2321
      %2323 = vmatmul.f32.gmra.mxu0 %v2212
      %v2324 = vpop.f32.mrf.mxu0
      %v2325 = vadd.f32 %v2134, %v2324
      %2326 = vmatmul.f32.gmra.mxu0 %v2215
      %v2327 = vpop.f32.mrf.mxu0
      %v2328 = vadd.f32 %v2134, %v2327
      %2329 = vmatmul.f32.gmra.mxu0 %v2218
      %v2330 = vpop.f32.mrf.mxu0
      %v2331 = vadd.f32 %v2134, %v2330
      %2332 = vmatmul.f32.gmra.mxu0 %v2221
      %v2333 = vpop.f32.mrf.mxu0
      %v2334 = vadd.f32 %v2134, %v2333
      %2335 = vmatmul.f32.gmra.mxu0 %v2224
      %v2336 = vpop.f32.mrf.mxu0
      %v2337 = vadd.f32 %v2134, %v2336
      %2338 = vmatmul.f32.gmra.mxu0 %v2227
      %v2339 = vpop.f32.mrf.mxu0
      %v2340 = vadd.f32 %v2134, %v2339
      %2341 = vmatmul.f32.gmra.mxu0 %v2230
      %v2342 = vpop.f32.mrf.mxu0
      %v2343 = vadd.f32 %v2134, %v2342
      %2344 = vdwg.mxu0
      %v2345 = vsub.f32 0.0, %v2250
      %v2346 = vsub.f32 0.0, %v2253
      %v2347 = vsub.f32 0.0, %v2256
      %v2348 = vsub.f32 0.0, %v2259
      %v2349 = vsub.f32 0.0, %v2262
      %v2350 = vsub.f32 0.0, %v2265
      %v2351 = vsub.f32 0.0, %v2268
      %v2352 = vsub.f32 0.0, %v2271
      %v2353 = vsub.f32 0.0, %v2274
      %v2354 = vsub.f32 0.0, %v2277
      %v2355 = vsub.f32 0.0, %v2280
      %v2356 = vsub.f32 0.0, %v2283
      %v2357 = vsub.f32 0.0, %v2286
      %v2358 = vsub.f32 0.0, %v2289
      %v2359 = vsub.f32 0.0, %v2292
      %v2360 = vsub.f32 0.0, %v2295
      %v2361 = vsub.f32 0.0, %v2298
      %v2362 = vsub.f32 0.0, %v2301
      %v2363 = vsub.f32 0.0, %v2304
      %v2364 = vsub.f32 0.0, %v2307
      %v2365 = vsub.f32 0.0, %v2310
      %v2366 = vsub.f32 0.0, %v2313
      %v2367 = vsub.f32 0.0, %v2316
      %v2368 = vsub.f32 0.0, %v2319
      %v2369 = vsub.f32 0.0, %v2322
      %v2370 = vsub.f32 0.0, %v2325
      %v2371 = vsub.f32 0.0, %v2328
      %v2372 = vsub.f32 0.0, %v2331
      %v2373 = vsub.f32 0.0, %v2334
      %v2374 = vsub.f32 0.0, %v2337
      %v2375 = vsub.f32 0.0, %v2340
      %v2376 = vsub.f32 0.0, %v2343
      %v2377 = vmul.f32 %v2345, 1.442695
      %v2378 = vpow.pop %v2377
      %v2379 = vmul.f32 %v2346, 1.442695
      %v2380 = vpow.pop %v2379
      %v2381 = vmul.f32 %v2347, 1.442695
      %v2382 = vpow.pop %v2381
      %v2383 = vmul.f32 %v2348, 1.442695
      %v2384 = vpow.pop %v2383
      %v2385 = vmul.f32 %v2349, 1.442695
      %v2386 = vpow.pop %v2385
      %v2387 = vmul.f32 %v2350, 1.442695
      %v2388 = vpow.pop %v2387
      %v2389 = vmul.f32 %v2351, 1.442695
      %v2390 = vpow.pop %v2389
      %v2391 = vmul.f32 %v2352, 1.442695
      %v2392 = vpow.pop %v2391
      %v2393 = vmul.f32 %v2353, 1.442695
      %v2394 = vpow.pop %v2393
      %v2395 = vmul.f32 %v2354, 1.442695
      %v2396 = vpow.pop %v2395
      %v2397 = vmul.f32 %v2355, 1.442695
      %v2398 = vpow.pop %v2397
      %v2399 = vmul.f32 %v2356, 1.442695
      %v2400 = vpow.pop %v2399
      %v2401 = vmul.f32 %v2357, 1.442695
      %v2402 = vpow.pop %v2401
      %v2403 = vmul.f32 %v2358, 1.442695
      %v2404 = vpow.pop %v2403
      %v2405 = vmul.f32 %v2359, 1.442695
      %v2406 = vpow.pop %v2405
      %v2407 = vmul.f32 %v2360, 1.442695
      %v2408 = vpow.pop %v2407
      %v2409 = vmul.f32 %v2361, 1.442695
      %v2410 = vpow.pop %v2409
      %v2411 = vmul.f32 %v2362, 1.442695
      %v2412 = vpow.pop %v2411
      %v2413 = vmul.f32 %v2363, 1.442695
      %v2414 = vpow.pop %v2413
      %v2415 = vmul.f32 %v2364, 1.442695
      %v2416 = vpow.pop %v2415
      %v2417 = vmul.f32 %v2365, 1.442695
      %v2418 = vpow.pop %v2417
      %v2419 = vmul.f32 %v2366, 1.442695
      %v2420 = vpow.pop %v2419
      %v2421 = vmul.f32 %v2367, 1.442695
      %v2422 = vpow.pop %v2421
      %v2423 = vmul.f32 %v2368, 1.442695
      %v2424 = vpow.pop %v2423
      %v2425 = vmul.f32 %v2369, 1.442695
      %v2426 = vpow.pop %v2425
      %v2427 = vmul.f32 %v2370, 1.442695
      %v2428 = vpow.pop %v2427
      %v2429 = vmul.f32 %v2371, 1.442695
      %v2430 = vpow.pop %v2429
      %v2431 = vmul.f32 %v2372, 1.442695
      %v2432 = vpow.pop %v2431
      %v2433 = vmul.f32 %v2373, 1.442695
      %v2434 = vpow.pop %v2433
      %v2435 = vmul.f32 %v2374, 1.442695
      %v2436 = vpow.pop %v2435
      %v2437 = vmul.f32 %v2375, 1.442695
      %v2438 = vpow.pop %v2437
      %v2439 = vmul.f32 %v2376, 1.442695
      %v2440 = vpow.pop %v2439
      %v2441 = vadd.f32 %v2378, 1.0
      %v2442 = vadd.f32 %v2380, 1.0
      %v2443 = vadd.f32 %v2382, 1.0
      %v2444 = vadd.f32 %v2384, 1.0
      %v2445 = vadd.f32 %v2386, 1.0
      %v2446 = vadd.f32 %v2388, 1.0
      %v2447 = vadd.f32 %v2390, 1.0
      %v2448 = vadd.f32 %v2392, 1.0
      %v2449 = vadd.f32 %v2394, 1.0
      %v2450 = vadd.f32 %v2396, 1.0
      %v2451 = vadd.f32 %v2398, 1.0
      %v2452 = vadd.f32 %v2400, 1.0
      %v2453 = vadd.f32 %v2402, 1.0
      %v2454 = vadd.f32 %v2404, 1.0
      %v2455 = vadd.f32 %v2406, 1.0
      %v2456 = vadd.f32 %v2408, 1.0
      %v2457 = vadd.f32 %v2410, 1.0
      %v2458 = vadd.f32 %v2412, 1.0
      %v2459 = vadd.f32 %v2414, 1.0
      %v2460 = vadd.f32 %v2416, 1.0
      %v2461 = vadd.f32 %v2418, 1.0
      %v2462 = vadd.f32 %v2420, 1.0
      %v2463 = vadd.f32 %v2422, 1.0
      %v2464 = vadd.f32 %v2424, 1.0
      %v2465 = vadd.f32 %v2426, 1.0
      %v2466 = vadd.f32 %v2428, 1.0
      %v2467 = vadd.f32 %v2430, 1.0
      %v2468 = vadd.f32 %v2432, 1.0
      %v2469 = vadd.f32 %v2434, 1.0
      %v2470 = vadd.f32 %v2436, 1.0
      %v2471 = vadd.f32 %v2438, 1.0
      %v2472 = vadd.f32 %v2440, 1.0
      %v2473 = vrcp.pop %v2441
      %v2474 = vmul.f32 %v2441, %v2473
      %v2475 = vsub.f32 1.0, %v2474
      %v2476 = vmul.f32 %v2473, %v2475
      %v2477 = vadd.f32 %v2473, %v2476
      %vm2478 = vweird.f32 %v2441
      %vm2479 = vweird.f32 %v2473
      %vm2480 = vmor %vm2478, %vm2479
      %v2481 = vsel %vm2480, %v2473, %v2477
      %v2482 = vand.u32 2147483647, %v2441
      %vm2483 = vcmp.eq.f32.partialorder %v2482, 8.507059e+37
      %v2484 = vand.u32 %v2441, 2147483648
      %v2485 = vor.u32 1.1754944e-38, %v2484
      %v2486 = vsel %vm2483, %v2485, %v2481
      %v2487 = vmul.f32 1.0, %v2486
      %v2488 = vrcp.pop %v2442
      %v2489 = vmul.f32 %v2442, %v2488
      %v2490 = vsub.f32 1.0, %v2489
      %v2491 = vmul.f32 %v2488, %v2490
      %v2492 = vadd.f32 %v2488, %v2491
      %vm2493 = vweird.f32 %v2442
      %vm2494 = vweird.f32 %v2488
      %vm2495 = vmor %vm2493, %vm2494
      %v2496 = vsel %vm2495, %v2488, %v2492
      %v2497 = vand.u32 2147483647, %v2442
      %vm2498 = vcmp.eq.f32.partialorder %v2497, 8.507059e+37
      %v2499 = vand.u32 %v2442, 2147483648
      %v2500 = vor.u32 1.1754944e-38, %v2499
      %v2501 = vsel %vm2498, %v2500, %v2496
      %v2502 = vmul.f32 1.0, %v2501
      %v2503 = vrcp.pop %v2443
      %v2504 = vmul.f32 %v2443, %v2503
      %v2505 = vsub.f32 1.0, %v2504
      %v2506 = vmul.f32 %v2503, %v2505
      %v2507 = vadd.f32 %v2503, %v2506
      %vm2508 = vweird.f32 %v2443
      %vm2509 = vweird.f32 %v2503
      %vm2510 = vmor %vm2508, %vm2509
      %v2511 = vsel %vm2510, %v2503, %v2507
      %v2512 = vand.u32 2147483647, %v2443
      %vm2513 = vcmp.eq.f32.partialorder %v2512, 8.507059e+37
      %v2514 = vand.u32 %v2443, 2147483648
      %v2515 = vor.u32 1.1754944e-38, %v2514
      %v2516 = vsel %vm2513, %v2515, %v2511
      %v2517 = vmul.f32 1.0, %v2516
      %v2518 = vrcp.pop %v2444
      %v2519 = vmul.f32 %v2444, %v2518
      %v2520 = vsub.f32 1.0, %v2519
      %v2521 = vmul.f32 %v2518, %v2520
      %v2522 = vadd.f32 %v2518, %v2521
      %vm2523 = vweird.f32 %v2444
      %vm2524 = vweird.f32 %v2518
      %vm2525 = vmor %vm2523, %vm2524
      %v2526 = vsel %vm2525, %v2518, %v2522
      %v2527 = vand.u32 2147483647, %v2444
      %vm2528 = vcmp.eq.f32.partialorder %v2527, 8.507059e+37
      %v2529 = vand.u32 %v2444, 2147483648
      %v2530 = vor.u32 1.1754944e-38, %v2529
      %v2531 = vsel %vm2528, %v2530, %v2526
      %v2532 = vmul.f32 1.0, %v2531
      %v2533 = vrcp.pop %v2445
      %v2534 = vmul.f32 %v2445, %v2533
      %v2535 = vsub.f32 1.0, %v2534
      %v2536 = vmul.f32 %v2533, %v2535
      %v2537 = vadd.f32 %v2533, %v2536
      %vm2538 = vweird.f32 %v2445
      %vm2539 = vweird.f32 %v2533
      %vm2540 = vmor %vm2538, %vm2539
      %v2541 = vsel %vm2540, %v2533, %v2537
      %v2542 = vand.u32 2147483647, %v2445
      %vm2543 = vcmp.eq.f32.partialorder %v2542, 8.507059e+37
      %v2544 = vand.u32 %v2445, 2147483648
      %v2545 = vor.u32 1.1754944e-38, %v2544
      %v2546 = vsel %vm2543, %v2545, %v2541
      %v2547 = vmul.f32 1.0, %v2546
      %v2548 = vrcp.pop %v2446
      %v2549 = vmul.f32 %v2446, %v2548
      %v2550 = vsub.f32 1.0, %v2549
      %v2551 = vmul.f32 %v2548, %v2550
      %v2552 = vadd.f32 %v2548, %v2551
      %vm2553 = vweird.f32 %v2446
      %vm2554 = vweird.f32 %v2548
      %vm2555 = vmor %vm2553, %vm2554
      %v2556 = vsel %vm2555, %v2548, %v2552
      %v2557 = vand.u32 2147483647, %v2446
      %vm2558 = vcmp.eq.f32.partialorder %v2557, 8.507059e+37
      %v2559 = vand.u32 %v2446, 2147483648
      %v2560 = vor.u32 1.1754944e-38, %v2559
      %v2561 = vsel %vm2558, %v2560, %v2556
      %v2562 = vmul.f32 1.0, %v2561
      %v2563 = vrcp.pop %v2447
      %v2564 = vmul.f32 %v2447, %v2563
      %v2565 = vsub.f32 1.0, %v2564
      %v2566 = vmul.f32 %v2563, %v2565
      %v2567 = vadd.f32 %v2563, %v2566
      %vm2568 = vweird.f32 %v2447
      %vm2569 = vweird.f32 %v2563
      %vm2570 = vmor %vm2568, %vm2569
      %v2571 = vsel %vm2570, %v2563, %v2567
      %v2572 = vand.u32 2147483647, %v2447
      %vm2573 = vcmp.eq.f32.partialorder %v2572, 8.507059e+37
      %v2574 = vand.u32 %v2447, 2147483648
      %v2575 = vor.u32 1.1754944e-38, %v2574
      %v2576 = vsel %vm2573, %v2575, %v2571
      %v2577 = vmul.f32 1.0, %v2576
      %v2578 = vrcp.pop %v2448
      %v2579 = vmul.f32 %v2448, %v2578
      %v2580 = vsub.f32 1.0, %v2579
      %v2581 = vmul.f32 %v2578, %v2580
      %v2582 = vadd.f32 %v2578, %v2581
      %vm2583 = vweird.f32 %v2448
      %vm2584 = vweird.f32 %v2578
      %vm2585 = vmor %vm2583, %vm2584
      %v2586 = vsel %vm2585, %v2578, %v2582
      %v2587 = vand.u32 2147483647, %v2448
      %vm2588 = vcmp.eq.f32.partialorder %v2587, 8.507059e+37
      %v2589 = vand.u32 %v2448, 2147483648
      %v2590 = vor.u32 1.1754944e-38, %v2589
      %v2591 = vsel %vm2588, %v2590, %v2586
      %v2592 = vmul.f32 1.0, %v2591
      %v2593 = vrcp.pop %v2449
      %v2594 = vmul.f32 %v2449, %v2593
      %v2595 = vsub.f32 1.0, %v2594
      %v2596 = vmul.f32 %v2593, %v2595
      %v2597 = vadd.f32 %v2593, %v2596
      %vm2598 = vweird.f32 %v2449
      %vm2599 = vweird.f32 %v2593
      %vm2600 = vmor %vm2598, %vm2599
      %v2601 = vsel %vm2600, %v2593, %v2597
      %v2602 = vand.u32 2147483647, %v2449
      %vm2603 = vcmp.eq.f32.partialorder %v2602, 8.507059e+37
      %v2604 = vand.u32 %v2449, 2147483648
      %v2605 = vor.u32 1.1754944e-38, %v2604
      %v2606 = vsel %vm2603, %v2605, %v2601
      %v2607 = vmul.f32 1.0, %v2606
      %v2608 = vrcp.pop %v2450
      %v2609 = vmul.f32 %v2450, %v2608
      %v2610 = vsub.f32 1.0, %v2609
      %v2611 = vmul.f32 %v2608, %v2610
      %v2612 = vadd.f32 %v2608, %v2611
      %vm2613 = vweird.f32 %v2450
      %vm2614 = vweird.f32 %v2608
      %vm2615 = vmor %vm2613, %vm2614
      %v2616 = vsel %vm2615, %v2608, %v2612
      %v2617 = vand.u32 2147483647, %v2450
      %vm2618 = vcmp.eq.f32.partialorder %v2617, 8.507059e+37
      %v2619 = vand.u32 %v2450, 2147483648
      %v2620 = vor.u32 1.1754944e-38, %v2619
      %v2621 = vsel %vm2618, %v2620, %v2616
      %v2622 = vmul.f32 1.0, %v2621
      %v2623 = vrcp.pop %v2451
      %v2624 = vmul.f32 %v2451, %v2623
      %v2625 = vsub.f32 1.0, %v2624
      %v2626 = vmul.f32 %v2623, %v2625
      %v2627 = vadd.f32 %v2623, %v2626
      %vm2628 = vweird.f32 %v2451
      %vm2629 = vweird.f32 %v2623
      %vm2630 = vmor %vm2628, %vm2629
      %v2631 = vsel %vm2630, %v2623, %v2627
      %v2632 = vand.u32 2147483647, %v2451
      %vm2633 = vcmp.eq.f32.partialorder %v2632, 8.507059e+37
      %v2634 = vand.u32 %v2451, 2147483648
      %v2635 = vor.u32 1.1754944e-38, %v2634
      %v2636 = vsel %vm2633, %v2635, %v2631
      %v2637 = vmul.f32 1.0, %v2636
      %v2638 = vrcp.pop %v2452
      %v2639 = vmul.f32 %v2452, %v2638
      %v2640 = vsub.f32 1.0, %v2639
      %v2641 = vmul.f32 %v2638, %v2640
      %v2642 = vadd.f32 %v2638, %v2641
      %vm2643 = vweird.f32 %v2452
      %vm2644 = vweird.f32 %v2638
      %vm2645 = vmor %vm2643, %vm2644
      %v2646 = vsel %vm2645, %v2638, %v2642
      %v2647 = vand.u32 2147483647, %v2452
      %vm2648 = vcmp.eq.f32.partialorder %v2647, 8.507059e+37
      %v2649 = vand.u32 %v2452, 2147483648
      %v2650 = vor.u32 1.1754944e-38, %v2649
      %v2651 = vsel %vm2648, %v2650, %v2646
      %v2652 = vmul.f32 1.0, %v2651
      %v2653 = vrcp.pop %v2453
      %v2654 = vmul.f32 %v2453, %v2653
      %v2655 = vsub.f32 1.0, %v2654
      %v2656 = vmul.f32 %v2653, %v2655
      %v2657 = vadd.f32 %v2653, %v2656
      %vm2658 = vweird.f32 %v2453
      %vm2659 = vweird.f32 %v2653
      %vm2660 = vmor %vm2658, %vm2659
      %v2661 = vsel %vm2660, %v2653, %v2657
      %v2662 = vand.u32 2147483647, %v2453
      %vm2663 = vcmp.eq.f32.partialorder %v2662, 8.507059e+37
      %v2664 = vand.u32 %v2453, 2147483648
      %v2665 = vor.u32 1.1754944e-38, %v2664
      %v2666 = vsel %vm2663, %v2665, %v2661
      %v2667 = vmul.f32 1.0, %v2666
      %v2668 = vrcp.pop %v2454
      %v2669 = vmul.f32 %v2454, %v2668
      %v2670 = vsub.f32 1.0, %v2669
      %v2671 = vmul.f32 %v2668, %v2670
      %v2672 = vadd.f32 %v2668, %v2671
      %vm2673 = vweird.f32 %v2454
      %vm2674 = vweird.f32 %v2668
      %vm2675 = vmor %vm2673, %vm2674
      %v2676 = vsel %vm2675, %v2668, %v2672
      %v2677 = vand.u32 2147483647, %v2454
      %vm2678 = vcmp.eq.f32.partialorder %v2677, 8.507059e+37
      %v2679 = vand.u32 %v2454, 2147483648
      %v2680 = vor.u32 1.1754944e-38, %v2679
      %v2681 = vsel %vm2678, %v2680, %v2676
      %v2682 = vmul.f32 1.0, %v2681
      %v2683 = vrcp.pop %v2455
      %v2684 = vmul.f32 %v2455, %v2683
      %v2685 = vsub.f32 1.0, %v2684
      %v2686 = vmul.f32 %v2683, %v2685
      %v2687 = vadd.f32 %v2683, %v2686
      %vm2688 = vweird.f32 %v2455
      %vm2689 = vweird.f32 %v2683
      %vm2690 = vmor %vm2688, %vm2689
      %v2691 = vsel %vm2690, %v2683, %v2687
      %v2692 = vand.u32 2147483647, %v2455
      %vm2693 = vcmp.eq.f32.partialorder %v2692, 8.507059e+37
      %v2694 = vand.u32 %v2455, 2147483648
      %v2695 = vor.u32 1.1754944e-38, %v2694
      %v2696 = vsel %vm2693, %v2695, %v2691
      %v2697 = vmul.f32 1.0, %v2696
      %v2698 = vrcp.pop %v2456
      %v2699 = vmul.f32 %v2456, %v2698
      %v2700 = vsub.f32 1.0, %v2699
      %v2701 = vmul.f32 %v2698, %v2700
      %v2702 = vadd.f32 %v2698, %v2701
      %vm2703 = vweird.f32 %v2456
      %vm2704 = vweird.f32 %v2698
      %vm2705 = vmor %vm2703, %vm2704
      %v2706 = vsel %vm2705, %v2698, %v2702
      %v2707 = vand.u32 2147483647, %v2456
      %vm2708 = vcmp.eq.f32.partialorder %v2707, 8.507059e+37
      %v2709 = vand.u32 %v2456, 2147483648
      %v2710 = vor.u32 1.1754944e-38, %v2709
      %v2711 = vsel %vm2708, %v2710, %v2706
      %v2712 = vmul.f32 1.0, %v2711
      %v2713 = vrcp.pop %v2457
      %v2714 = vmul.f32 %v2457, %v2713
      %v2715 = vsub.f32 1.0, %v2714
      %v2716 = vmul.f32 %v2713, %v2715
      %v2717 = vadd.f32 %v2713, %v2716
      %vm2718 = vweird.f32 %v2457
      %vm2719 = vweird.f32 %v2713
      %vm2720 = vmor %vm2718, %vm2719
      %v2721 = vsel %vm2720, %v2713, %v2717
      %v2722 = vand.u32 2147483647, %v2457
      %vm2723 = vcmp.eq.f32.partialorder %v2722, 8.507059e+37
      %v2724 = vand.u32 %v2457, 2147483648
      %v2725 = vor.u32 1.1754944e-38, %v2724
      %v2726 = vsel %vm2723, %v2725, %v2721
      %v2727 = vmul.f32 1.0, %v2726
      %v2728 = vrcp.pop %v2458
      %v2729 = vmul.f32 %v2458, %v2728
      %v2730 = vsub.f32 1.0, %v2729
      %v2731 = vmul.f32 %v2728, %v2730
      %v2732 = vadd.f32 %v2728, %v2731
      %vm2733 = vweird.f32 %v2458
      %vm2734 = vweird.f32 %v2728
      %vm2735 = vmor %vm2733, %vm2734
      %v2736 = vsel %vm2735, %v2728, %v2732
      %v2737 = vand.u32 2147483647, %v2458
      %vm2738 = vcmp.eq.f32.partialorder %v2737, 8.507059e+37
      %v2739 = vand.u32 %v2458, 2147483648
      %v2740 = vor.u32 1.1754944e-38, %v2739
      %v2741 = vsel %vm2738, %v2740, %v2736
      %v2742 = vmul.f32 1.0, %v2741
      %v2743 = vrcp.pop %v2459
      %v2744 = vmul.f32 %v2459, %v2743
      %v2745 = vsub.f32 1.0, %v2744
      %v2746 = vmul.f32 %v2743, %v2745
      %v2747 = vadd.f32 %v2743, %v2746
      %vm2748 = vweird.f32 %v2459
      %vm2749 = vweird.f32 %v2743
      %vm2750 = vmor %vm2748, %vm2749
      %v2751 = vsel %vm2750, %v2743, %v2747
      %v2752 = vand.u32 2147483647, %v2459
      %vm2753 = vcmp.eq.f32.partialorder %v2752, 8.507059e+37
      %v2754 = vand.u32 %v2459, 2147483648
      %v2755 = vor.u32 1.1754944e-38, %v2754
      %v2756 = vsel %vm2753, %v2755, %v2751
      %v2757 = vmul.f32 1.0, %v2756
      %v2758 = vrcp.pop %v2460
      %v2759 = vmul.f32 %v2460, %v2758
      %v2760 = vsub.f32 1.0, %v2759
      %v2761 = vmul.f32 %v2758, %v2760
      %v2762 = vadd.f32 %v2758, %v2761
      %vm2763 = vweird.f32 %v2460
      %vm2764 = vweird.f32 %v2758
      %vm2765 = vmor %vm2763, %vm2764
      %v2766 = vsel %vm2765, %v2758, %v2762
      %v2767 = vand.u32 2147483647, %v2460
      %vm2768 = vcmp.eq.f32.partialorder %v2767, 8.507059e+37
      %v2769 = vand.u32 %v2460, 2147483648
      %v2770 = vor.u32 1.1754944e-38, %v2769
      %v2771 = vsel %vm2768, %v2770, %v2766
      %v2772 = vmul.f32 1.0, %v2771
      %v2773 = vrcp.pop %v2461
      %v2774 = vmul.f32 %v2461, %v2773
      %v2775 = vsub.f32 1.0, %v2774
      %v2776 = vmul.f32 %v2773, %v2775
      %v2777 = vadd.f32 %v2773, %v2776
      %vm2778 = vweird.f32 %v2461
      %vm2779 = vweird.f32 %v2773
      %vm2780 = vmor %vm2778, %vm2779
      %v2781 = vsel %vm2780, %v2773, %v2777
      %v2782 = vand.u32 2147483647, %v2461
      %vm2783 = vcmp.eq.f32.partialorder %v2782, 8.507059e+37
      %v2784 = vand.u32 %v2461, 2147483648
      %v2785 = vor.u32 1.1754944e-38, %v2784
      %v2786 = vsel %vm2783, %v2785, %v2781
      %v2787 = vmul.f32 1.0, %v2786
      %v2788 = vrcp.pop %v2462
      %v2789 = vmul.f32 %v2462, %v2788
      %v2790 = vsub.f32 1.0, %v2789
      %v2791 = vmul.f32 %v2788, %v2790
      %v2792 = vadd.f32 %v2788, %v2791
      %vm2793 = vweird.f32 %v2462
      %vm2794 = vweird.f32 %v2788
      %vm2795 = vmor %vm2793, %vm2794
      %v2796 = vsel %vm2795, %v2788, %v2792
      %v2797 = vand.u32 2147483647, %v2462
      %vm2798 = vcmp.eq.f32.partialorder %v2797, 8.507059e+37
      %v2799 = vand.u32 %v2462, 2147483648
      %v2800 = vor.u32 1.1754944e-38, %v2799
      %v2801 = vsel %vm2798, %v2800, %v2796
      %v2802 = vmul.f32 1.0, %v2801
      %v2803 = vrcp.pop %v2463
      %v2804 = vmul.f32 %v2463, %v2803
      %v2805 = vsub.f32 1.0, %v2804
      %v2806 = vmul.f32 %v2803, %v2805
      %v2807 = vadd.f32 %v2803, %v2806
      %vm2808 = vweird.f32 %v2463
      %vm2809 = vweird.f32 %v2803
      %vm2810 = vmor %vm2808, %vm2809
      %v2811 = vsel %vm2810, %v2803, %v2807
      %v2812 = vand.u32 2147483647, %v2463
      %vm2813 = vcmp.eq.f32.partialorder %v2812, 8.507059e+37
      %v2814 = vand.u32 %v2463, 2147483648
      %v2815 = vor.u32 1.1754944e-38, %v2814
      %v2816 = vsel %vm2813, %v2815, %v2811
      %v2817 = vmul.f32 1.0, %v2816
      %v2818 = vrcp.pop %v2464
      %v2819 = vmul.f32 %v2464, %v2818
      %v2820 = vsub.f32 1.0, %v2819
      %v2821 = vmul.f32 %v2818, %v2820
      %v2822 = vadd.f32 %v2818, %v2821
      %vm2823 = vweird.f32 %v2464
      %vm2824 = vweird.f32 %v2818
      %vm2825 = vmor %vm2823, %vm2824
      %v2826 = vsel %vm2825, %v2818, %v2822
      %v2827 = vand.u32 2147483647, %v2464
      %vm2828 = vcmp.eq.f32.partialorder %v2827, 8.507059e+37
      %v2829 = vand.u32 %v2464, 2147483648
      %v2830 = vor.u32 1.1754944e-38, %v2829
      %v2831 = vsel %vm2828, %v2830, %v2826
      %v2832 = vmul.f32 1.0, %v2831
      %v2833 = vrcp.pop %v2465
      %v2834 = vmul.f32 %v2465, %v2833
      %v2835 = vsub.f32 1.0, %v2834
      %v2836 = vmul.f32 %v2833, %v2835
      %v2837 = vadd.f32 %v2833, %v2836
      %vm2838 = vweird.f32 %v2465
      %vm2839 = vweird.f32 %v2833
      %vm2840 = vmor %vm2838, %vm2839
      %v2841 = vsel %vm2840, %v2833, %v2837
      %v2842 = vand.u32 2147483647, %v2465
      %vm2843 = vcmp.eq.f32.partialorder %v2842, 8.507059e+37
      %v2844 = vand.u32 %v2465, 2147483648
      %v2845 = vor.u32 1.1754944e-38, %v2844
      %v2846 = vsel %vm2843, %v2845, %v2841
      %v2847 = vmul.f32 1.0, %v2846
      %v2848 = vrcp.pop %v2466
      %v2849 = vmul.f32 %v2466, %v2848
      %v2850 = vsub.f32 1.0, %v2849
      %v2851 = vmul.f32 %v2848, %v2850
      %v2852 = vadd.f32 %v2848, %v2851
      %vm2853 = vweird.f32 %v2466
      %vm2854 = vweird.f32 %v2848
      %vm2855 = vmor %vm2853, %vm2854
      %v2856 = vsel %vm2855, %v2848, %v2852
      %v2857 = vand.u32 2147483647, %v2466
      %vm2858 = vcmp.eq.f32.partialorder %v2857, 8.507059e+37
      %v2859 = vand.u32 %v2466, 2147483648
      %v2860 = vor.u32 1.1754944e-38, %v2859
      %v2861 = vsel %vm2858, %v2860, %v2856
      %v2862 = vmul.f32 1.0, %v2861
      %v2863 = vrcp.pop %v2467
      %v2864 = vmul.f32 %v2467, %v2863
      %v2865 = vsub.f32 1.0, %v2864
      %v2866 = vmul.f32 %v2863, %v2865
      %v2867 = vadd.f32 %v2863, %v2866
      %vm2868 = vweird.f32 %v2467
      %vm2869 = vweird.f32 %v2863
      %vm2870 = vmor %vm2868, %vm2869
      %v2871 = vsel %vm2870, %v2863, %v2867
      %v2872 = vand.u32 2147483647, %v2467
      %vm2873 = vcmp.eq.f32.partialorder %v2872, 8.507059e+37
      %v2874 = vand.u32 %v2467, 2147483648
      %v2875 = vor.u32 1.1754944e-38, %v2874
      %v2876 = vsel %vm2873, %v2875, %v2871
      %v2877 = vmul.f32 1.0, %v2876
      %v2878 = vrcp.pop %v2468
      %v2879 = vmul.f32 %v2468, %v2878
      %v2880 = vsub.f32 1.0, %v2879
      %v2881 = vmul.f32 %v2878, %v2880
      %v2882 = vadd.f32 %v2878, %v2881
      %vm2883 = vweird.f32 %v2468
      %vm2884 = vweird.f32 %v2878
      %vm2885 = vmor %vm2883, %vm2884
      %v2886 = vsel %vm2885, %v2878, %v2882
      %v2887 = vand.u32 2147483647, %v2468
      %vm2888 = vcmp.eq.f32.partialorder %v2887, 8.507059e+37
      %v2889 = vand.u32 %v2468, 2147483648
      %v2890 = vor.u32 1.1754944e-38, %v2889
      %v2891 = vsel %vm2888, %v2890, %v2886
      %v2892 = vmul.f32 1.0, %v2891
      %v2893 = vrcp.pop %v2469
      %v2894 = vmul.f32 %v2469, %v2893
      %v2895 = vsub.f32 1.0, %v2894
      %v2896 = vmul.f32 %v2893, %v2895
      %v2897 = vadd.f32 %v2893, %v2896
      %vm2898 = vweird.f32 %v2469
      %vm2899 = vweird.f32 %v2893
      %vm2900 = vmor %vm2898, %vm2899
      %v2901 = vsel %vm2900, %v2893, %v2897
      %v2902 = vand.u32 2147483647, %v2469
      %vm2903 = vcmp.eq.f32.partialorder %v2902, 8.507059e+37
      %v2904 = vand.u32 %v2469, 2147483648
      %v2905 = vor.u32 1.1754944e-38, %v2904
      %v2906 = vsel %vm2903, %v2905, %v2901
      %v2907 = vmul.f32 1.0, %v2906
      %v2908 = vrcp.pop %v2470
      %v2909 = vmul.f32 %v2470, %v2908
      %v2910 = vsub.f32 1.0, %v2909
      %v2911 = vmul.f32 %v2908, %v2910
      %v2912 = vadd.f32 %v2908, %v2911
      %vm2913 = vweird.f32 %v2470
      %vm2914 = vweird.f32 %v2908
      %vm2915 = vmor %vm2913, %vm2914
      %v2916 = vsel %vm2915, %v2908, %v2912
      %v2917 = vand.u32 2147483647, %v2470
      %vm2918 = vcmp.eq.f32.partialorder %v2917, 8.507059e+37
      %v2919 = vand.u32 %v2470, 2147483648
      %v2920 = vor.u32 1.1754944e-38, %v2919
      %v2921 = vsel %vm2918, %v2920, %v2916
      %v2922 = vmul.f32 1.0, %v2921
      %v2923 = vrcp.pop %v2471
      %v2924 = vmul.f32 %v2471, %v2923
      %v2925 = vsub.f32 1.0, %v2924
      %v2926 = vmul.f32 %v2923, %v2925
      %v2927 = vadd.f32 %v2923, %v2926
      %vm2928 = vweird.f32 %v2471
      %vm2929 = vweird.f32 %v2923
      %vm2930 = vmor %vm2928, %vm2929
      %v2931 = vsel %vm2930, %v2923, %v2927
      %v2932 = vand.u32 2147483647, %v2471
      %vm2933 = vcmp.eq.f32.partialorder %v2932, 8.507059e+37
      %v2934 = vand.u32 %v2471, 2147483648
      %v2935 = vor.u32 1.1754944e-38, %v2934
      %v2936 = vsel %vm2933, %v2935, %v2931
      %v2937 = vmul.f32 1.0, %v2936
      %v2938 = vrcp.pop %v2472
      %v2939 = vmul.f32 %v2472, %v2938
      %v2940 = vsub.f32 1.0, %v2939
      %v2941 = vmul.f32 %v2938, %v2940
      %v2942 = vadd.f32 %v2938, %v2941
      %vm2943 = vweird.f32 %v2472
      %vm2944 = vweird.f32 %v2938
      %vm2945 = vmor %vm2943, %vm2944
      %v2946 = vsel %vm2945, %v2938, %v2942
      %v2947 = vand.u32 2147483647, %v2472
      %vm2948 = vcmp.eq.f32.partialorder %v2947, 8.507059e+37
      %v2949 = vand.u32 %v2472, 2147483648
      %v2950 = vor.u32 1.1754944e-38, %v2949
      %v2951 = vsel %vm2948, %v2950, %v2946
      %v2952 = vmul.f32 1.0, %v2951
      %v2953 = vmul.f32 %v1845, %v1379
      %v2954 = vmul.f32 %v1846, %v1394
      %v2955 = vmul.f32 %v1847, %v1409
      %v2956 = vmul.f32 %v1848, %v1424
      %v2957 = vmul.f32 %v1849, %v1439
      %v2958 = vmul.f32 %v1850, %v1454
      %v2959 = vmul.f32 %v1851, %v1469
      %v2960 = vmul.f32 %v1852, %v1484
      %v2961 = vmul.f32 %v1853, %v1499
      %v2962 = vmul.f32 %v1854, %v1514
      %v2963 = vmul.f32 %v1855, %v1529
      %v2964 = vmul.f32 %v1856, %v1544
      %v2965 = vmul.f32 %v1857, %v1559
      %v2966 = vmul.f32 %v1858, %v1574
      %v2967 = vmul.f32 %v1859, %v1589
      %v2968 = vmul.f32 %v1860, %v1604
      %v2969 = vmul.f32 %v1861, %v1619
      %v2970 = vmul.f32 %v1862, %v1634
      %v2971 = vmul.f32 %v1863, %v1649
      %v2972 = vmul.f32 %v1864, %v1664
      %v2973 = vmul.f32 %v1865, %v1679
      %v2974 = vmul.f32 %v1866, %v1694
      %v2975 = vmul.f32 %v1867, %v1709
      %v2976 = vmul.f32 %v1868, %v1724
      %v2977 = vmul.f32 %v1869, %v1739
      %v2978 = vmul.f32 %v1870, %v1754
      %v2979 = vmul.f32 %v1871, %v1769
      %v2980 = vmul.f32 %v1872, %v1784
      %v2981 = vmul.f32 %v1873, %v1799
      %v2982 = vmul.f32 %v1874, %v1814
      %v2983 = vmul.f32 %v1875, %v1829
      %v2984 = vmul.f32 %v1876, %v1844
      %v2985 = vmul.f32 %v736, %v2487
      %v2986 = vmul.f32 %v737, %v2502
      %v2987 = vmul.f32 %v738, %v2517
      %v2988 = vmul.f32 %v739, %v2532
      %v2989 = vmul.f32 %v740, %v2547
      %v2990 = vmul.f32 %v741, %v2562
      %v2991 = vmul.f32 %v742, %v2577
      %v2992 = vmul.f32 %v743, %v2592
      %v2993 = vmul.f32 %v744, %v2607
      %v2994 = vmul.f32 %v745, %v2622
      %v2995 = vmul.f32 %v746, %v2637
      %v2996 = vmul.f32 %v747, %v2652
      %v2997 = vmul.f32 %v748, %v2667
      %v2998 = vmul.f32 %v749, %v2682
      %v2999 = vmul.f32 %v750, %v2697
      %v3000 = vmul.f32 %v751, %v2712
      %v3001 = vmul.f32 %v752, %v2727
      %v3002 = vmul.f32 %v753, %v2742
      %v3003 = vmul.f32 %v754, %v2757
      %v3004 = vmul.f32 %v755, %v2772
      %v3005 = vmul.f32 %v756, %v2787
      %v3006 = vmul.f32 %v757, %v2802
      %v3007 = vmul.f32 %v758, %v2817
      %v3008 = vmul.f32 %v759, %v2832
      %v3009 = vmul.f32 %v760, %v2847
      %v3010 = vmul.f32 %v761, %v2862
      %v3011 = vmul.f32 %v762, %v2877
      %v3012 = vmul.f32 %v763, %v2892
      %v3013 = vmul.f32 %v764, %v2907
      %v3014 = vmul.f32 %v765, %v2922
      %v3015 = vmul.f32 %v766, %v2937
      %v3016 = vmul.f32 %v767, %v2952
      %v3017 = vadd.f32 %v2953, %v2985
      %v3018 = vadd.f32 %v2954, %v2986
      %v3019 = vadd.f32 %v2955, %v2987
      %v3020 = vadd.f32 %v2956, %v2988
      %v3021 = vadd.f32 %v2957, %v2989
      %v3022 = vadd.f32 %v2958, %v2990
      %v3023 = vadd.f32 %v2959, %v2991
      %v3024 = vadd.f32 %v2960, %v2992
      %v3025 = vadd.f32 %v2961, %v2993
      %v3026 = vadd.f32 %v2962, %v2994
      %v3027 = vadd.f32 %v2963, %v2995
      %v3028 = vadd.f32 %v2964, %v2996
      %v3029 = vadd.f32 %v2965, %v2997
      %v3030 = vadd.f32 %v2966, %v2998
      %v3031 = vadd.f32 %v2967, %v2999
      %v3032 = vadd.f32 %v2968, %v3000
      %v3033 = vadd.f32 %v2969, %v3001
      %v3034 = vadd.f32 %v2970, %v3002
      %v3035 = vadd.f32 %v2971, %v3003
      %v3036 = vadd.f32 %v2972, %v3004
      %v3037 = vadd.f32 %v2973, %v3005
      %v3038 = vadd.f32 %v2974, %v3006
      %v3039 = vadd.f32 %v2975, %v3007
      %v3040 = vadd.f32 %v2976, %v3008
      %v3041 = vadd.f32 %v2977, %v3009
      %v3042 = vadd.f32 %v2978, %v3010
      %v3043 = vadd.f32 %v2979, %v3011
      %v3044 = vadd.f32 %v2980, %v3012
      %v3045 = vadd.f32 %v2981, %v3013
      %v3046 = vadd.f32 %v2982, %v3014
      %v3047 = vadd.f32 %v2983, %v3015
      %v3048 = vadd.f32 %v2984, %v3016
      %v3049 = vlaneseq
      %v3050 = vshrl.u32 %v3049, 7
      %v3051 = vadd.s32 %v3050, 8
      %v3052 = vadd.s32 %v3050, 16
      %v3053 = vadd.s32 %v3050, 24
      %v3054 = vadd.s32 %v3050, 32
      %v3055 = vadd.s32 %v3050, 40
      %v3056 = vadd.s32 %v3050, 48
      %v3057 = vadd.s32 %v3050, 56
      %v3058 = vadd.s32 %v3050, 64
      %v3059 = vadd.s32 %v3050, 72
      %v3060 = vadd.s32 %v3050, 80
      %v3061 = vadd.s32 %v3050, 88
      %v3062 = vadd.s32 %v3050, 96
      %v3063 = vadd.s32 %v3050, 104
      %v3064 = vadd.s32 %v3050, 112
      %v3065 = vadd.s32 %v3050, 120
      %v3066 = vadd.s32 %v3050, 128
      %v3067 = vadd.s32 %v3050, 136
      %v3068 = vadd.s32 %v3050, 144
      %v3069 = vadd.s32 %v3050, 152
      %v3070 = vadd.s32 %v3050, 160
      %v3071 = vadd.s32 %v3050, 168
      %v3072 = vadd.s32 %v3050, 176
      %v3073 = vadd.s32 %v3050, 184
      %v3074 = vadd.s32 %v3050, 192
      %v3075 = vadd.s32 %v3050, 200
      %v3076 = vadd.s32 %v3050, 208
      %v3077 = vadd.s32 %v3050, 216
      %v3078 = vadd.s32 %v3050, 224
      %v3079 = vadd.s32 %v3050, 232
      %v3080 = vadd.s32 %v3050, 240
      %v3081 = vadd.s32 %v3050, 248
      %vm3082 = vcmp.lt.s32.totalorder %v3050, 0
      %v3083 = vsub.s32 0, %v3050
      %v3084 = vsel %vm3082, %v3083, %v3050
      %v3085 = vshrl.u32 %v3084, 4
      %v3086 = vand.u32 %v3084, 15
      %v3087 = vsub.s32 0, %v3086
      %v3088 = vsel %vm3082, %v3087, %v3086
      %vm3089 = vcmp.lt.s32.totalorder %v3051, 0
      %v3090 = vsub.s32 0, %v3051
      %v3091 = vsel %vm3089, %v3090, %v3051
      %v3092 = vshrl.u32 %v3091, 4
      %v3093 = vand.u32 %v3091, 15
      %v3094 = vsub.s32 0, %v3093
      %v3095 = vsel %vm3089, %v3094, %v3093
      %vm3096 = vcmp.lt.s32.totalorder %v3052, 0
      %v3097 = vsub.s32 0, %v3052
      %v3098 = vsel %vm3096, %v3097, %v3052
      %v3099 = vshrl.u32 %v3098, 4
      %v3100 = vand.u32 %v3098, 15
      %v3101 = vsub.s32 0, %v3100
      %v3102 = vsel %vm3096, %v3101, %v3100
      %vm3103 = vcmp.lt.s32.totalorder %v3053, 0
      %v3104 = vsub.s32 0, %v3053
      %v3105 = vsel %vm3103, %v3104, %v3053
      %v3106 = vshrl.u32 %v3105, 4
      %v3107 = vand.u32 %v3105, 15
      %v3108 = vsub.s32 0, %v3107
      %v3109 = vsel %vm3103, %v3108, %v3107
      %vm3110 = vcmp.lt.s32.totalorder %v3054, 0
      %v3111 = vsub.s32 0, %v3054
      %v3112 = vsel %vm3110, %v3111, %v3054
      %v3113 = vshrl.u32 %v3112, 4
      %v3114 = vand.u32 %v3112, 15
      %v3115 = vsub.s32 0, %v3114
      %v3116 = vsel %vm3110, %v3115, %v3114
      %vm3117 = vcmp.lt.s32.totalorder %v3055, 0
      %v3118 = vsub.s32 0, %v3055
      %v3119 = vsel %vm3117, %v3118, %v3055
      %v3120 = vshrl.u32 %v3119, 4
      %v3121 = vand.u32 %v3119, 15
      %v3122 = vsub.s32 0, %v3121
      %v3123 = vsel %vm3117, %v3122, %v3121
      %vm3124 = vcmp.lt.s32.totalorder %v3056, 0
      %v3125 = vsub.s32 0, %v3056
      %v3126 = vsel %vm3124, %v3125, %v3056
      %v3127 = vshrl.u32 %v3126, 4
      %v3128 = vand.u32 %v3126, 15
      %v3129 = vsub.s32 0, %v3128
      %v3130 = vsel %vm3124, %v3129, %v3128
      %vm3131 = vcmp.lt.s32.totalorder %v3057, 0
      %v3132 = vsub.s32 0, %v3057
      %v3133 = vsel %vm3131, %v3132, %v3057
      %v3134 = vshrl.u32 %v3133, 4
      %v3135 = vand.u32 %v3133, 15
      %v3136 = vsub.s32 0, %v3135
      %v3137 = vsel %vm3131, %v3136, %v3135
      %vm3138 = vcmp.lt.s32.totalorder %v3058, 0
      %v3139 = vsub.s32 0, %v3058
      %v3140 = vsel %vm3138, %v3139, %v3058
      %v3141 = vshrl.u32 %v3140, 4
      %v3142 = vand.u32 %v3140, 15
      %v3143 = vsub.s32 0, %v3142
      %v3144 = vsel %vm3138, %v3143, %v3142
      %vm3145 = vcmp.lt.s32.totalorder %v3059, 0
      %v3146 = vsub.s32 0, %v3059
      %v3147 = vsel %vm3145, %v3146, %v3059
      %v3148 = vshrl.u32 %v3147, 4
      %v3149 = vand.u32 %v3147, 15
      %v3150 = vsub.s32 0, %v3149
      %v3151 = vsel %vm3145, %v3150, %v3149
      %vm3152 = vcmp.lt.s32.totalorder %v3060, 0
      %v3153 = vsub.s32 0, %v3060
      %v3154 = vsel %vm3152, %v3153, %v3060
      %v3155 = vshrl.u32 %v3154, 4
      %v3156 = vand.u32 %v3154, 15
      %v3157 = vsub.s32 0, %v3156
      %v3158 = vsel %vm3152, %v3157, %v3156
      %vm3159 = vcmp.lt.s32.totalorder %v3061, 0
      %v3160 = vsub.s32 0, %v3061
      %v3161 = vsel %vm3159, %v3160, %v3061
      %v3162 = vshrl.u32 %v3161, 4
      %v3163 = vand.u32 %v3161, 15
      %v3164 = vsub.s32 0, %v3163
      %v3165 = vsel %vm3159, %v3164, %v3163
      %vm3166 = vcmp.lt.s32.totalorder %v3062, 0
      %v3167 = vsub.s32 0, %v3062
      %v3168 = vsel %vm3166, %v3167, %v3062
      %v3169 = vshrl.u32 %v3168, 4
      %v3170 = vand.u32 %v3168, 15
      %v3171 = vsub.s32 0, %v3170
      %v3172 = vsel %vm3166, %v3171, %v3170
      %vm3173 = vcmp.lt.s32.totalorder %v3063, 0
      %v3174 = vsub.s32 0, %v3063
      %v3175 = vsel %vm3173, %v3174, %v3063
      %v3176 = vshrl.u32 %v3175, 4
      %v3177 = vand.u32 %v3175, 15
      %v3178 = vsub.s32 0, %v3177
      %v3179 = vsel %vm3173, %v3178, %v3177
      %vm3180 = vcmp.lt.s32.totalorder %v3064, 0
      %v3181 = vsub.s32 0, %v3064
      %v3182 = vsel %vm3180, %v3181, %v3064
      %v3183 = vshrl.u32 %v3182, 4
      %v3184 = vand.u32 %v3182, 15
      %v3185 = vsub.s32 0, %v3184
      %v3186 = vsel %vm3180, %v3185, %v3184
      %vm3187 = vcmp.lt.s32.totalorder %v3065, 0
      %v3188 = vsub.s32 0, %v3065
      %v3189 = vsel %vm3187, %v3188, %v3065
      %v3190 = vshrl.u32 %v3189, 4
      %v3191 = vand.u32 %v3189, 15
      %v3192 = vsub.s32 0, %v3191
      %v3193 = vsel %vm3187, %v3192, %v3191
      %vm3194 = vcmp.lt.s32.totalorder %v3066, 0
      %v3195 = vsub.s32 0, %v3066
      %v3196 = vsel %vm3194, %v3195, %v3066
      %v3197 = vshrl.u32 %v3196, 4
      %v3198 = vand.u32 %v3196, 15
      %v3199 = vsub.s32 0, %v3198
      %v3200 = vsel %vm3194, %v3199, %v3198
      %vm3201 = vcmp.lt.s32.totalorder %v3067, 0
      %v3202 = vsub.s32 0, %v3067
      %v3203 = vsel %vm3201, %v3202, %v3067
      %v3204 = vshrl.u32 %v3203, 4
      %v3205 = vand.u32 %v3203, 15
      %v3206 = vsub.s32 0, %v3205
      %v3207 = vsel %vm3201, %v3206, %v3205
      %vm3208 = vcmp.lt.s32.totalorder %v3068, 0
      %v3209 = vsub.s32 0, %v3068
      %v3210 = vsel %vm3208, %v3209, %v3068
      %v3211 = vshrl.u32 %v3210, 4
      %v3212 = vand.u32 %v3210, 15
      %v3213 = vsub.s32 0, %v3212
      %v3214 = vsel %vm3208, %v3213, %v3212
      %vm3215 = vcmp.lt.s32.totalorder %v3069, 0
      %v3216 = vsub.s32 0, %v3069
      %v3217 = vsel %vm3215, %v3216, %v3069
      %v3218 = vshrl.u32 %v3217, 4
      %v3219 = vand.u32 %v3217, 15
      %v3220 = vsub.s32 0, %v3219
      %v3221 = vsel %vm3215, %v3220, %v3219
      %vm3222 = vcmp.lt.s32.totalorder %v3070, 0
      %v3223 = vsub.s32 0, %v3070
      %v3224 = vsel %vm3222, %v3223, %v3070
      %v3225 = vshrl.u32 %v3224, 4
      %v3226 = vand.u32 %v3224, 15
      %v3227 = vsub.s32 0, %v3226
      %v3228 = vsel %vm3222, %v3227, %v3226
      %vm3229 = vcmp.lt.s32.totalorder %v3071, 0
      %v3230 = vsub.s32 0, %v3071
      %v3231 = vsel %vm3229, %v3230, %v3071
      %v3232 = vshrl.u32 %v3231, 4
      %v3233 = vand.u32 %v3231, 15
      %v3234 = vsub.s32 0, %v3233
      %v3235 = vsel %vm3229, %v3234, %v3233
      %vm3236 = vcmp.lt.s32.totalorder %v3072, 0
      %v3237 = vsub.s32 0, %v3072
      %v3238 = vsel %vm3236, %v3237, %v3072
      %v3239 = vshrl.u32 %v3238, 4
      %v3240 = vand.u32 %v3238, 15
      %v3241 = vsub.s32 0, %v3240
      %v3242 = vsel %vm3236, %v3241, %v3240
      %vm3243 = vcmp.lt.s32.totalorder %v3073, 0
      %v3244 = vsub.s32 0, %v3073
      %v3245 = vsel %vm3243, %v3244, %v3073
      %v3246 = vshrl.u32 %v3245, 4
      %v3247 = vand.u32 %v3245, 15
      %v3248 = vsub.s32 0, %v3247
      %v3249 = vsel %vm3243, %v3248, %v3247
      %vm3250 = vcmp.lt.s32.totalorder %v3074, 0
      %v3251 = vsub.s32 0, %v3074
      %v3252 = vsel %vm3250, %v3251, %v3074
      %v3253 = vshrl.u32 %v3252, 4
      %v3254 = vand.u32 %v3252, 15
      %v3255 = vsub.s32 0, %v3254
      %v3256 = vsel %vm3250, %v3255, %v3254
      %vm3257 = vcmp.lt.s32.totalorder %v3075, 0
      %v3258 = vsub.s32 0, %v3075
      %v3259 = vsel %vm3257, %v3258, %v3075
      %v3260 = vshrl.u32 %v3259, 4
      %v3261 = vand.u32 %v3259, 15
      %v3262 = vsub.s32 0, %v3261
      %v3263 = vsel %vm3257, %v3262, %v3261
      %vm3264 = vcmp.lt.s32.totalorder %v3076, 0
      %v3265 = vsub.s32 0, %v3076
      %v3266 = vsel %vm3264, %v3265, %v3076
      %v3267 = vshrl.u32 %v3266, 4
      %v3268 = vand.u32 %v3266, 15
      %v3269 = vsub.s32 0, %v3268
      %v3270 = vsel %vm3264, %v3269, %v3268
      %vm3271 = vcmp.lt.s32.totalorder %v3077, 0
      %v3272 = vsub.s32 0, %v3077
      %v3273 = vsel %vm3271, %v3272, %v3077
      %v3274 = vshrl.u32 %v3273, 4
      %v3275 = vand.u32 %v3273, 15
      %v3276 = vsub.s32 0, %v3275
      %v3277 = vsel %vm3271, %v3276, %v3275
      %vm3278 = vcmp.lt.s32.totalorder %v3078, 0
      %v3279 = vsub.s32 0, %v3078
      %v3280 = vsel %vm3278, %v3279, %v3078
      %v3281 = vshrl.u32 %v3280, 4
      %v3282 = vand.u32 %v3280, 15
      %v3283 = vsub.s32 0, %v3282
      %v3284 = vsel %vm3278, %v3283, %v3282
      %vm3285 = vcmp.lt.s32.totalorder %v3079, 0
      %v3286 = vsub.s32 0, %v3079
      %v3287 = vsel %vm3285, %v3286, %v3079
      %v3288 = vshrl.u32 %v3287, 4
      %v3289 = vand.u32 %v3287, 15
      %v3290 = vsub.s32 0, %v3289
      %v3291 = vsel %vm3285, %v3290, %v3289
      %vm3292 = vcmp.lt.s32.totalorder %v3080, 0
      %v3293 = vsub.s32 0, %v3080
      %v3294 = vsel %vm3292, %v3293, %v3080
      %v3295 = vshrl.u32 %v3294, 4
      %v3296 = vand.u32 %v3294, 15
      %v3297 = vsub.s32 0, %v3296
      %v3298 = vsel %vm3292, %v3297, %v3296
      %vm3299 = vcmp.lt.s32.totalorder %v3081, 0
      %v3300 = vsub.s32 0, %v3081
      %v3301 = vsel %vm3299, %v3300, %v3081
      %v3302 = vshrl.u32 %v3301, 4
      %v3303 = vand.u32 %v3301, 15
      %v3304 = vsub.s32 0, %v3303
      %v3305 = vsel %vm3299, %v3304, %v3303
      %vm3306 = vcmp.ne.s32.totalorder %v3088, 0
      %vm3307 = vcmp.ne.s32.totalorder %v3095, 0
      %vm3308 = vcmp.ne.s32.totalorder %v3102, 0
      %vm3309 = vcmp.ne.s32.totalorder %v3109, 0
      %vm3310 = vcmp.ne.s32.totalorder %v3116, 0
      %vm3311 = vcmp.ne.s32.totalorder %v3123, 0
      %vm3312 = vcmp.ne.s32.totalorder %v3130, 0
      %vm3313 = vcmp.ne.s32.totalorder %v3137, 0
      %vm3314 = vcmp.ne.s32.totalorder %v3144, 0
      %vm3315 = vcmp.ne.s32.totalorder %v3151, 0
      %vm3316 = vcmp.ne.s32.totalorder %v3158, 0
      %vm3317 = vcmp.ne.s32.totalorder %v3165, 0
      %vm3318 = vcmp.ne.s32.totalorder %v3172, 0
      %vm3319 = vcmp.ne.s32.totalorder %v3179, 0
      %vm3320 = vcmp.ne.s32.totalorder %v3186, 0
      %vm3321 = vcmp.ne.s32.totalorder %v3193, 0
      %vm3322 = vcmp.ne.s32.totalorder %v3200, 0
      %vm3323 = vcmp.ne.s32.totalorder %v3207, 0
      %vm3324 = vcmp.ne.s32.totalorder %v3214, 0
      %vm3325 = vcmp.ne.s32.totalorder %v3221, 0
      %vm3326 = vcmp.ne.s32.totalorder %v3228, 0
      %vm3327 = vcmp.ne.s32.totalorder %v3235, 0
      %vm3328 = vcmp.ne.s32.totalorder %v3242, 0
      %vm3329 = vcmp.ne.s32.totalorder %v3249, 0
      %vm3330 = vcmp.ne.s32.totalorder %v3256, 0
      %vm3331 = vcmp.ne.s32.totalorder %v3263, 0
      %vm3332 = vcmp.ne.s32.totalorder %v3270, 0
      %vm3333 = vcmp.ne.s32.totalorder %v3277, 0
      %vm3334 = vcmp.ne.s32.totalorder %v3284, 0
      %vm3335 = vcmp.ne.s32.totalorder %v3291, 0
      %vm3336 = vcmp.ne.s32.totalorder %v3298, 0
      %vm3337 = vcmp.ne.s32.totalorder %v3305, 0
      %vm3338 = vcmp.lt.s32.totalorder %v3088, 0
      %vm3339 = vcmp.lt.s32.totalorder %v3095, 0
      %vm3340 = vcmp.lt.s32.totalorder %v3102, 0
      %vm3341 = vcmp.lt.s32.totalorder %v3109, 0
      %vm3342 = vcmp.lt.s32.totalorder %v3116, 0
      %vm3343 = vcmp.lt.s32.totalorder %v3123, 0
      %vm3344 = vcmp.lt.s32.totalorder %v3130, 0
      %vm3345 = vcmp.lt.s32.totalorder %v3137, 0
      %vm3346 = vcmp.lt.s32.totalorder %v3144, 0
      %vm3347 = vcmp.lt.s32.totalorder %v3151, 0
      %vm3348 = vcmp.lt.s32.totalorder %v3158, 0
      %vm3349 = vcmp.lt.s32.totalorder %v3165, 0
      %vm3350 = vcmp.lt.s32.totalorder %v3172, 0
      %vm3351 = vcmp.lt.s32.totalorder %v3179, 0
      %vm3352 = vcmp.lt.s32.totalorder %v3186, 0
      %vm3353 = vcmp.lt.s32.totalorder %v3193, 0
      %vm3354 = vcmp.lt.s32.totalorder %v3200, 0
      %vm3355 = vcmp.lt.s32.totalorder %v3207, 0
      %vm3356 = vcmp.lt.s32.totalorder %v3214, 0
      %vm3357 = vcmp.lt.s32.totalorder %v3221, 0
      %vm3358 = vcmp.lt.s32.totalorder %v3228, 0
      %vm3359 = vcmp.lt.s32.totalorder %v3235, 0
      %vm3360 = vcmp.lt.s32.totalorder %v3242, 0
      %vm3361 = vcmp.lt.s32.totalorder %v3249, 0
      %vm3362 = vcmp.lt.s32.totalorder %v3256, 0
      %vm3363 = vcmp.lt.s32.totalorder %v3263, 0
      %vm3364 = vcmp.lt.s32.totalorder %v3270, 0
      %vm3365 = vcmp.lt.s32.totalorder %v3277, 0
      %vm3366 = vcmp.lt.s32.totalorder %v3284, 0
      %vm3367 = vcmp.lt.s32.totalorder %v3291, 0
      %vm3368 = vcmp.lt.s32.totalorder %v3298, 0
      %vm3369 = vcmp.lt.s32.totalorder %v3305, 0
      %vm3370 = vmand %vm3338, %vm3306
      %vm3371 = vmand %vm3339, %vm3307
      %vm3372 = vmand %vm3340, %vm3308
      %vm3373 = vmand %vm3341, %vm3309
      %vm3374 = vmand %vm3342, %vm3310
      %vm3375 = vmand %vm3343, %vm3311
      %vm3376 = vmand %vm3344, %vm3312
      %vm3377 = vmand %vm3345, %vm3313
      %vm3378 = vmand %vm3346, %vm3314
      %vm3379 = vmand %vm3347, %vm3315
      %vm3380 = vmand %vm3348, %vm3316
      %vm3381 = vmand %vm3349, %vm3317
      %vm3382 = vmand %vm3350, %vm3318
      %vm3383 = vmand %vm3351, %vm3319
      %vm3384 = vmand %vm3352, %vm3320
      %vm3385 = vmand %vm3353, %vm3321
      %vm3386 = vmand %vm3354, %vm3322
      %vm3387 = vmand %vm3355, %vm3323
      %vm3388 = vmand %vm3356, %vm3324
      %vm3389 = vmand %vm3357, %vm3325
      %vm3390 = vmand %vm3358, %vm3326
      %vm3391 = vmand %vm3359, %vm3327
      %vm3392 = vmand %vm3360, %vm3328
      %vm3393 = vmand %vm3361, %vm3329
      %vm3394 = vmand %vm3362, %vm3330
      %vm3395 = vmand %vm3363, %vm3331
      %vm3396 = vmand %vm3364, %vm3332
      %vm3397 = vmand %vm3365, %vm3333
      %vm3398 = vmand %vm3366, %vm3334
      %vm3399 = vmand %vm3367, %vm3335
      %vm3400 = vmand %vm3368, %vm3336
      %vm3401 = vmand %vm3369, %vm3337
      %v3402 = vadd.s32 %v3088, 16
      %v3403 = vadd.s32 %v3095, 16
      %v3404 = vadd.s32 %v3102, 16
      %v3405 = vadd.s32 %v3109, 16
      %v3406 = vadd.s32 %v3116, 16
      %v3407 = vadd.s32 %v3123, 16
      %v3408 = vadd.s32 %v3130, 16
      %v3409 = vadd.s32 %v3137, 16
      %v3410 = vadd.s32 %v3144, 16
      %v3411 = vadd.s32 %v3151, 16
      %v3412 = vadd.s32 %v3158, 16
      %v3413 = vadd.s32 %v3165, 16
      %v3414 = vadd.s32 %v3172, 16
      %v3415 = vadd.s32 %v3179, 16
      %v3416 = vadd.s32 %v3186, 16
      %v3417 = vadd.s32 %v3193, 16
      %v3418 = vadd.s32 %v3200, 16
      %v3419 = vadd.s32 %v3207, 16
      %v3420 = vadd.s32 %v3214, 16
      %v3421 = vadd.s32 %v3221, 16
      %v3422 = vadd.s32 %v3228, 16
      %v3423 = vadd.s32 %v3235, 16
      %v3424 = vadd.s32 %v3242, 16
      %v3425 = vadd.s32 %v3249, 16
      %v3426 = vadd.s32 %v3256, 16
      %v3427 = vadd.s32 %v3263, 16
      %v3428 = vadd.s32 %v3270, 16
      %v3429 = vadd.s32 %v3277, 16
      %v3430 = vadd.s32 %v3284, 16
      %v3431 = vadd.s32 %v3291, 16
      %v3432 = vadd.s32 %v3298, 16
      %v3433 = vadd.s32 %v3305, 16
      %v3434 = vsel %vm3370, %v3402, %v3088
      %v3435 = vsel %vm3371, %v3403, %v3095
      %v3436 = vsel %vm3372, %v3404, %v3102
      %v3437 = vsel %vm3373, %v3405, %v3109
      %v3438 = vsel %vm3374, %v3406, %v3116
      %v3439 = vsel %vm3375, %v3407, %v3123
      %v3440 = vsel %vm3376, %v3408, %v3130
      %v3441 = vsel %vm3377, %v3409, %v3137
      %v3442 = vsel %vm3378, %v3410, %v3144
      %v3443 = vsel %vm3379, %v3411, %v3151
      %v3444 = vsel %vm3380, %v3412, %v3158
      %v3445 = vsel %vm3381, %v3413, %v3165
      %v3446 = vsel %vm3382, %v3414, %v3172
      %v3447 = vsel %vm3383, %v3415, %v3179
      %v3448 = vsel %vm3384, %v3416, %v3186
      %v3449 = vsel %vm3385, %v3417, %v3193
      %v3450 = vsel %vm3386, %v3418, %v3200
      %v3451 = vsel %vm3387, %v3419, %v3207
      %v3452 = vsel %vm3388, %v3420, %v3214
      %v3453 = vsel %vm3389, %v3421, %v3221
      %v3454 = vsel %vm3390, %v3422, %v3228
      %v3455 = vsel %vm3391, %v3423, %v3235
      %v3456 = vsel %vm3392, %v3424, %v3242
      %v3457 = vsel %vm3393, %v3425, %v3249
      %v3458 = vsel %vm3394, %v3426, %v3256
      %v3459 = vsel %vm3395, %v3427, %v3263
      %v3460 = vsel %vm3396, %v3428, %v3270
      %v3461 = vsel %vm3397, %v3429, %v3277
      %v3462 = vsel %vm3398, %v3430, %v3284
      %v3463 = vsel %vm3399, %v3431, %v3291
      %v3464 = vsel %vm3400, %v3432, %v3298
      %v3465 = vsel %vm3401, %v3433, %v3305
      %vm3466 = vcmp.ge.s32.totalorder %v3434, 1
      %vm3467 = vcmp.ge.s32.totalorder %v3435, 1
      %vm3468 = vcmp.ge.s32.totalorder %v3436, 1
      %vm3469 = vcmp.ge.s32.totalorder %v3437, 1
      %vm3470 = vcmp.ge.s32.totalorder %v3438, 1
      %vm3471 = vcmp.ge.s32.totalorder %v3439, 1
      %vm3472 = vcmp.ge.s32.totalorder %v3440, 1
      %vm3473 = vcmp.ge.s32.totalorder %v3441, 1
      %vm3474 = vcmp.ge.s32.totalorder %v3442, 1
      %vm3475 = vcmp.ge.s32.totalorder %v3443, 1
      %vm3476 = vcmp.ge.s32.totalorder %v3444, 1
      %vm3477 = vcmp.ge.s32.totalorder %v3445, 1
      %vm3478 = vcmp.ge.s32.totalorder %v3446, 1
      %vm3479 = vcmp.ge.s32.totalorder %v3447, 1
      %vm3480 = vcmp.ge.s32.totalorder %v3448, 1
      %vm3481 = vcmp.ge.s32.totalorder %v3449, 1
      %vm3482 = vcmp.ge.s32.totalorder %v3450, 1
      %vm3483 = vcmp.ge.s32.totalorder %v3451, 1
      %vm3484 = vcmp.ge.s32.totalorder %v3452, 1
      %vm3485 = vcmp.ge.s32.totalorder %v3453, 1
      %vm3486 = vcmp.ge.s32.totalorder %v3454, 1
      %vm3487 = vcmp.ge.s32.totalorder %v3455, 1
      %vm3488 = vcmp.ge.s32.totalorder %v3456, 1
      %vm3489 = vcmp.ge.s32.totalorder %v3457, 1
      %vm3490 = vcmp.ge.s32.totalorder %v3458, 1
      %vm3491 = vcmp.ge.s32.totalorder %v3459, 1
      %vm3492 = vcmp.ge.s32.totalorder %v3460, 1
      %vm3493 = vcmp.ge.s32.totalorder %v3461, 1
      %vm3494 = vcmp.ge.s32.totalorder %v3462, 1
      %vm3495 = vcmp.ge.s32.totalorder %v3463, 1
      %vm3496 = vcmp.ge.s32.totalorder %v3464, 1
      %vm3497 = vcmp.ge.s32.totalorder %v3465, 1
      %v3498 = vrot.slane %v3017, 7
      %v3499 = vrot.slane %v3018, 7
      %v3500 = vrot.slane %v3019, 7
      %v3501 = vrot.slane %v3020, 7
      %v3502 = vrot.slane %v3021, 7
      %v3503 = vrot.slane %v3022, 7
      %v3504 = vrot.slane %v3023, 7
      %v3505 = vrot.slane %v3024, 7
      %v3506 = vrot.slane %v3025, 7
      %v3507 = vrot.slane %v3026, 7
      %v3508 = vrot.slane %v3027, 7
      %v3509 = vrot.slane %v3028, 7
      %v3510 = vrot.slane %v3029, 7
      %v3511 = vrot.slane %v3030, 7
      %v3512 = vrot.slane %v3031, 7
      %v3513 = vrot.slane %v3032, 7
      %v3514 = vrot.slane %v3033, 7
      %v3515 = vrot.slane %v3034, 7
      %v3516 = vrot.slane %v3035, 7
      %v3517 = vrot.slane %v3036, 7
      %v3518 = vrot.slane %v3037, 7
      %v3519 = vrot.slane %v3038, 7
      %v3520 = vrot.slane %v3039, 7
      %v3521 = vrot.slane %v3040, 7
      %v3522 = vrot.slane %v3041, 7
      %v3523 = vrot.slane %v3042, 7
      %v3524 = vrot.slane %v3043, 7
      %v3525 = vrot.slane %v3044, 7
      %v3526 = vrot.slane %v3045, 7
      %v3527 = vrot.slane %v3046, 7
      %v3528 = vrot.slane %v3047, 7
      %v3529 = vrot.slane %v3048, 7
      %vm3530 = vcmp.lt.s32.totalorder %v3050, 1
      %v3531 = vsel %vm3530, %v3528, %v3529
      %v3532 = vsel %vm3530, %v3527, %v3528
      %v3533 = vsel %vm3530, %v3526, %v3527
      %v3534 = vsel %vm3530, %v3525, %v3526
      %v3535 = vsel %vm3530, %v3524, %v3525
      %v3536 = vsel %vm3530, %v3523, %v3524
      %v3537 = vsel %vm3530, %v3522, %v3523
      %v3538 = vsel %vm3530, %v3521, %v3522
      %v3539 = vsel %vm3530, %v3520, %v3521
      %v3540 = vsel %vm3530, %v3519, %v3520
      %v3541 = vsel %vm3530, %v3518, %v3519
      %v3542 = vsel %vm3530, %v3517, %v3518
      %v3543 = vsel %vm3530, %v3516, %v3517
      %v3544 = vsel %vm3530, %v3515, %v3516
      %v3545 = vsel %vm3530, %v3514, %v3515
      %v3546 = vsel %vm3530, %v3513, %v3514
      %v3547 = vsel %vm3530, %v3512, %v3513
      %v3548 = vsel %vm3530, %v3511, %v3512
      %v3549 = vsel %vm3530, %v3510, %v3511
      %v3550 = vsel %vm3530, %v3509, %v3510
      %v3551 = vsel %vm3530, %v3508, %v3509
      %v3552 = vsel %vm3530, %v3507, %v3508
      %v3553 = vsel %vm3530, %v3506, %v3507
      %v3554 = vsel %vm3530, %v3505, %v3506
      %v3555 = vsel %vm3530, %v3504, %v3505
      %v3556 = vsel %vm3530, %v3503, %v3504
      %v3557 = vsel %vm3530, %v3502, %v3503
      %v3558 = vsel %vm3530, %v3501, %v3502
      %v3559 = vsel %vm3530, %v3500, %v3501
      %v3560 = vsel %vm3530, %v3499, %v3500
      %v3561 = vsel %vm3530, %v3498, %v3499
      %v3562 = vsel %vm3530, %v3529, %v3498
      %v3563 = vsel %vm3466, %v3562, 0.0
      %v3564 = vsel %vm3467, %v3561, 0.0
      %v3565 = vsel %vm3468, %v3560, 0.0
      %v3566 = vsel %vm3469, %v3559, 0.0
      %v3567 = vsel %vm3470, %v3558, 0.0
      %v3568 = vsel %vm3471, %v3557, 0.0
      %v3569 = vsel %vm3472, %v3556, 0.0
      %v3570 = vsel %vm3473, %v3555, 0.0
      %v3571 = vsel %vm3474, %v3554, 0.0
      %v3572 = vsel %vm3475, %v3553, 0.0
      %v3573 = vsel %vm3476, %v3552, 0.0
      %v3574 = vsel %vm3477, %v3551, 0.0
      %v3575 = vsel %vm3478, %v3550, 0.0
      %v3576 = vsel %vm3479, %v3549, 0.0
      %v3577 = vsel %vm3480, %v3548, 0.0
      %v3578 = vsel %vm3481, %v3547, 0.0
      %v3579 = vsel %vm3482, %v3546, 0.0
      %v3580 = vsel %vm3483, %v3545, 0.0
      %v3581 = vsel %vm3484, %v3544, 0.0
      %v3582 = vsel %vm3485, %v3543, 0.0
      %v3583 = vsel %vm3486, %v3542, 0.0
      %v3584 = vsel %vm3487, %v3541, 0.0
      %v3585 = vsel %vm3488, %v3540, 0.0
      %v3586 = vsel %vm3489, %v3539, 0.0
      %v3587 = vsel %vm3490, %v3538, 0.0
      %v3588 = vsel %vm3491, %v3537, 0.0
      %v3589 = vsel %vm3492, %v3536, 0.0
      %v3590 = vsel %vm3493, %v3535, 0.0
      %v3591 = vsel %vm3494, %v3534, 0.0
      %v3592 = vsel %vm3495, %v3533, 0.0
      %v3593 = vsel %vm3496, %v3532, 0.0
      %v3594 = vsel %vm3497, %v3531, 0.0
      %vm3595 = vcmp.le.s32.totalorder %v3434, 14
      %vm3596 = vcmp.le.s32.totalorder %v3435, 14
      %vm3597 = vcmp.le.s32.totalorder %v3436, 14
      %vm3598 = vcmp.le.s32.totalorder %v3437, 14
      %vm3599 = vcmp.le.s32.totalorder %v3438, 14
      %vm3600 = vcmp.le.s32.totalorder %v3439, 14
      %vm3601 = vcmp.le.s32.totalorder %v3440, 14
      %vm3602 = vcmp.le.s32.totalorder %v3441, 14
      %vm3603 = vcmp.le.s32.totalorder %v3442, 14
      %vm3604 = vcmp.le.s32.totalorder %v3443, 14
      %vm3605 = vcmp.le.s32.totalorder %v3444, 14
      %vm3606 = vcmp.le.s32.totalorder %v3445, 14
      %vm3607 = vcmp.le.s32.totalorder %v3446, 14
      %vm3608 = vcmp.le.s32.totalorder %v3447, 14
      %vm3609 = vcmp.le.s32.totalorder %v3448, 14
      %vm3610 = vcmp.le.s32.totalorder %v3449, 14
      %vm3611 = vcmp.le.s32.totalorder %v3450, 14
      %vm3612 = vcmp.le.s32.totalorder %v3451, 14
      %vm3613 = vcmp.le.s32.totalorder %v3452, 14
      %vm3614 = vcmp.le.s32.totalorder %v3453, 14
      %vm3615 = vcmp.le.s32.totalorder %v3454, 14
      %vm3616 = vcmp.le.s32.totalorder %v3455, 14
      %vm3617 = vcmp.le.s32.totalorder %v3456, 14
      %vm3618 = vcmp.le.s32.totalorder %v3457, 14
      %vm3619 = vcmp.le.s32.totalorder %v3458, 14
      %vm3620 = vcmp.le.s32.totalorder %v3459, 14
      %vm3621 = vcmp.le.s32.totalorder %v3460, 14
      %vm3622 = vcmp.le.s32.totalorder %v3461, 14
      %vm3623 = vcmp.le.s32.totalorder %v3462, 14
      %vm3624 = vcmp.le.s32.totalorder %v3463, 14
      %vm3625 = vcmp.le.s32.totalorder %v3464, 14
      %vm3626 = vcmp.le.s32.totalorder %v3465, 14
      %v3627 = vrot.slane %v3017, 1
      %v3628 = vrot.slane %v3018, 1
      %v3629 = vrot.slane %v3019, 1
      %v3630 = vrot.slane %v3020, 1
      %v3631 = vrot.slane %v3021, 1
      %v3632 = vrot.slane %v3022, 1
      %v3633 = vrot.slane %v3023, 1
      %v3634 = vrot.slane %v3024, 1
      %v3635 = vrot.slane %v3025, 1
      %v3636 = vrot.slane %v3026, 1
      %v3637 = vrot.slane %v3027, 1
      %v3638 = vrot.slane %v3028, 1
      %v3639 = vrot.slane %v3029, 1
      %v3640 = vrot.slane %v3030, 1
      %v3641 = vrot.slane %v3031, 1
      %v3642 = vrot.slane %v3032, 1
      %v3643 = vrot.slane %v3033, 1
      %v3644 = vrot.slane %v3034, 1
      %v3645 = vrot.slane %v3035, 1
      %v3646 = vrot.slane %v3036, 1
      %v3647 = vrot.slane %v3037, 1
      %v3648 = vrot.slane %v3038, 1
      %v3649 = vrot.slane %v3039, 1
      %v3650 = vrot.slane %v3040, 1
      %v3651 = vrot.slane %v3041, 1
      %v3652 = vrot.slane %v3042, 1
      %v3653 = vrot.slane %v3043, 1
      %v3654 = vrot.slane %v3044, 1
      %v3655 = vrot.slane %v3045, 1
      %v3656 = vrot.slane %v3046, 1
      %v3657 = vrot.slane %v3047, 1
      %v3658 = vrot.slane %v3048, 1
      %vm3659 = vcmp.lt.s32.totalorder %v3050, 7
      %v3660 = vsel %vm3659, %v3657, %v3658
      %v3661 = vsel %vm3659, %v3656, %v3657
      %v3662 = vsel %vm3659, %v3655, %v3656
      %v3663 = vsel %vm3659, %v3654, %v3655
      %v3664 = vsel %vm3659, %v3653, %v3654
      %v3665 = vsel %vm3659, %v3652, %v3653
      %v3666 = vsel %vm3659, %v3651, %v3652
      %v3667 = vsel %vm3659, %v3650, %v3651
      %v3668 = vsel %vm3659, %v3649, %v3650
      %v3669 = vsel %vm3659, %v3648, %v3649
      %v3670 = vsel %vm3659, %v3647, %v3648
      %v3671 = vsel %vm3659, %v3646, %v3647
      %v3672 = vsel %vm3659, %v3645, %v3646
      %v3673 = vsel %vm3659, %v3644, %v3645
      %v3674 = vsel %vm3659, %v3643, %v3644
      %v3675 = vsel %vm3659, %v3642, %v3643
      %v3676 = vsel %vm3659, %v3641, %v3642
      %v3677 = vsel %vm3659, %v3640, %v3641
      %v3678 = vsel %vm3659, %v3639, %v3640
      %v3679 = vsel %vm3659, %v3638, %v3639
      %v3680 = vsel %vm3659, %v3637, %v3638
      %v3681 = vsel %vm3659, %v3636, %v3637
      %v3682 = vsel %vm3659, %v3635, %v3636
      %v3683 = vsel %vm3659, %v3634, %v3635
      %v3684 = vsel %vm3659, %v3633, %v3634
      %v3685 = vsel %vm3659, %v3632, %v3633
      %v3686 = vsel %vm3659, %v3631, %v3632
      %v3687 = vsel %vm3659, %v3630, %v3631
      %v3688 = vsel %vm3659, %v3629, %v3630
      %v3689 = vsel %vm3659, %v3628, %v3629
      %v3690 = vsel %vm3659, %v3627, %v3628
      %v3691 = vsel %vm3659, %v3658, %v3627
      %v3692 = vsel %vm3595, %v3690, 0.0
      %v3693 = vsel %vm3596, %v3689, 0.0
      %v3694 = vsel %vm3597, %v3688, 0.0
      %v3695 = vsel %vm3598, %v3687, 0.0
      %v3696 = vsel %vm3599, %v3686, 0.0
      %v3697 = vsel %vm3600, %v3685, 0.0
      %v3698 = vsel %vm3601, %v3684, 0.0
      %v3699 = vsel %vm3602, %v3683, 0.0
      %v3700 = vsel %vm3603, %v3682, 0.0
      %v3701 = vsel %vm3604, %v3681, 0.0
      %v3702 = vsel %vm3605, %v3680, 0.0
      %v3703 = vsel %vm3606, %v3679, 0.0
      %v3704 = vsel %vm3607, %v3678, 0.0
      %v3705 = vsel %vm3608, %v3677, 0.0
      %v3706 = vsel %vm3609, %v3676, 0.0
      %v3707 = vsel %vm3610, %v3675, 0.0
      %v3708 = vsel %vm3611, %v3674, 0.0
      %v3709 = vsel %vm3612, %v3673, 0.0
      %v3710 = vsel %vm3613, %v3672, 0.0
      %v3711 = vsel %vm3614, %v3671, 0.0
      %v3712 = vsel %vm3615, %v3670, 0.0
      %v3713 = vsel %vm3616, %v3669, 0.0
      %v3714 = vsel %vm3617, %v3668, 0.0
      %v3715 = vsel %vm3618, %v3667, 0.0
      %v3716 = vsel %vm3619, %v3666, 0.0
      %v3717 = vsel %vm3620, %v3665, 0.0
      %v3718 = vsel %vm3621, %v3664, 0.0
      %v3719 = vsel %vm3622, %v3663, 0.0
      %v3720 = vsel %vm3623, %v3662, 0.0
      %v3721 = vsel %vm3624, %v3661, 0.0
      %v3722 = vsel %vm3625, %v3660, 0.0
      %v3723 = vsel %vm3626, %v3691, 0.0
      %3756 = vrot.lane.b32.xlu0 %v3017, 64
      %v3757 = vpop.permute.xlu0 %3756
      %3758 = vrot.lane.b32.xlu0 %v3018, 64
      %v3759 = vpop.permute.xlu0 %3758
      %3760 = vrot.lane.b32.xlu0 %v3019, 64
      %v3761 = vpop.permute.xlu0 %3760
      %3762 = vrot.lane.b32.xlu0 %v3020, 64
      %v3763 = vpop.permute.xlu0 %3762
      %3764 = vrot.lane.b32.xlu0 %v3021, 64
      %v3765 = vpop.permute.xlu0 %3764
      %3766 = vrot.lane.b32.xlu0 %v3022, 64
      %v3767 = vpop.permute.xlu0 %3766
      %3768 = vrot.lane.b32.xlu0 %v3023, 64
      %v3769 = vpop.permute.xlu0 %3768
      %3770 = vrot.lane.b32.xlu0 %v3024, 64
      %v3771 = vpop.permute.xlu0 %3770
      %3772 = vrot.lane.b32.xlu0 %v3025, 64
      %v3773 = vpop.permute.xlu0 %3772
      %3774 = vrot.lane.b32.xlu0 %v3026, 64
      %v3775 = vpop.permute.xlu0 %3774
      %3776 = vrot.lane.b32.xlu0 %v3027, 64
      %v3777 = vpop.permute.xlu0 %3776
      %3778 = vrot.lane.b32.xlu0 %v3028, 64
      %v3779 = vpop.permute.xlu0 %3778
      %3780 = vrot.lane.b32.xlu0 %v3029, 64
      %v3781 = vpop.permute.xlu0 %3780
      %3782 = vrot.lane.b32.xlu0 %v3030, 64
      %v3783 = vpop.permute.xlu0 %3782
      %3784 = vrot.lane.b32.xlu0 %v3031, 64
      %v3785 = vpop.permute.xlu0 %3784
      %3786 = vrot.lane.b32.xlu0 %v3032, 64
      %v3787 = vpop.permute.xlu0 %3786
      %3788 = vrot.lane.b32.xlu0 %v3033, 64
      %v3789 = vpop.permute.xlu0 %3788
      %3790 = vrot.lane.b32.xlu0 %v3034, 64
      %v3791 = vpop.permute.xlu0 %3790
      %3792 = vrot.lane.b32.xlu0 %v3035, 64
      %v3793 = vpop.permute.xlu0 %3792
      %3794 = vrot.lane.b32.xlu0 %v3036, 64
      %v3795 = vpop.permute.xlu0 %3794
      %3796 = vrot.lane.b32.xlu0 %v3037, 64
      %v3797 = vpop.permute.xlu0 %3796
      %3798 = vrot.lane.b32.xlu0 %v3038, 64
      %v3799 = vpop.permute.xlu0 %3798
      %3800 = vrot.lane.b32.xlu0 %v3039, 64
      %v3801 = vpop.permute.xlu0 %3800
      %3802 = vrot.lane.b32.xlu0 %v3040, 64
      %v3803 = vpop.permute.xlu0 %3802
      %3804 = vrot.lane.b32.xlu0 %v3041, 64
      %v3805 = vpop.permute.xlu0 %3804
      %3806 = vrot.lane.b32.xlu0 %v3042, 64
      %v3807 = vpop.permute.xlu0 %3806
      %3808 = vrot.lane.b32.xlu0 %v3043, 64
      %v3809 = vpop.permute.xlu0 %3808
      %3810 = vrot.lane.b32.xlu0 %v3044, 64
      %v3811 = vpop.permute.xlu0 %3810
      %3812 = vrot.lane.b32.xlu0 %v3045, 64
      %v3813 = vpop.permute.xlu0 %3812
      %3814 = vrot.lane.b32.xlu0 %v3046, 64
      %v3815 = vpop.permute.xlu0 %3814
      %3816 = vrot.lane.b32.xlu0 %v3047, 64
      %v3817 = vpop.permute.xlu0 %3816
      %3818 = vrot.lane.b32.xlu0 %v3048, 64
      %v3819 = vpop.permute.xlu0 %3818
      %v3852 = vsel %vm780, %v3563, %v3757
      %v3853 = vsel %vm780, %v3564, %v3759
      %v3854 = vsel %vm780, %v3565, %v3761
      %v3855 = vsel %vm780, %v3566, %v3763
      %v3856 = vsel %vm780, %v3567, %v3765
      %v3857 = vsel %vm780, %v3568, %v3767
      %v3858 = vsel %vm780, %v3569, %v3769
      %v3859 = vsel %vm780, %v3570, %v3771
      %v3860 = vsel %vm780, %v3571, %v3773
      %v3861 = vsel %vm780, %v3572, %v3775
      %v3862 = vsel %vm780, %v3573, %v3777
      %v3863 = vsel %vm780, %v3574, %v3779
      %v3864 = vsel %vm780, %v3575, %v3781
      %v3865 = vsel %vm780, %v3576, %v3783
      %v3866 = vsel %vm780, %v3577, %v3785
      %v3867 = vsel %vm780, %v3578, %v3787
      %v3868 = vsel %vm780, %v3579, %v3789
      %v3869 = vsel %vm780, %v3580, %v3791
      %v3870 = vsel %vm780, %v3581, %v3793
      %v3871 = vsel %vm780, %v3582, %v3795
      %v3872 = vsel %vm780, %v3583, %v3797
      %v3873 = vsel %vm780, %v3584, %v3799
      %v3874 = vsel %vm780, %v3585, %v3801
      %v3875 = vsel %vm780, %v3586, %v3803
      %v3876 = vsel %vm780, %v3587, %v3805
      %v3877 = vsel %vm780, %v3588, %v3807
      %v3878 = vsel %vm780, %v3589, %v3809
      %v3879 = vsel %vm780, %v3590, %v3811
      %v3880 = vsel %vm780, %v3591, %v3813
      %v3881 = vsel %vm780, %v3592, %v3815
      %v3882 = vsel %vm780, %v3593, %v3817
      %v3883 = vsel %vm780, %v3594, %v3819
      %v3884 = vld [vmem:[%s12] sm:$0xff]
      %v3885 = vld [vmem:[%s12 + $0x8] sm:$0xff]
      %v3886 = vld [vmem:[%s12 + $0x10] sm:$0xff]
      %v3887 = vld [vmem:[%s12 + $0x18] sm:$0xff]
      %v3888 = vld [vmem:[%s12 + $0x20] sm:$0xff]
      %v3889 = vld [vmem:[%s12 + $0x28] sm:$0xff]
      %v3890 = vld [vmem:[%s12 + $0x30] sm:$0xff]
      %v3891 = vld [vmem:[%s12 + $0x38] sm:$0xff]
      %v3892 = vld [vmem:[%s12 + $0x40] sm:$0xff]
      %v3893 = vld [vmem:[%s12 + $0x48] sm:$0xff]
      %v3894 = vld [vmem:[%s12 + $0x50] sm:$0xff]
      %v3895 = vld [vmem:[%s12 + $0x58] sm:$0xff]
      %v3896 = vld [vmem:[%s12 + $0x60] sm:$0xff]
      %v3897 = vld [vmem:[%s12 + $0x68] sm:$0xff]
      %v3898 = vld [vmem:[%s12 + $0x70] sm:$0xff]
      %v3899 = vld [vmem:[%s12 + $0x78] sm:$0xff]
      %v3900 = vld [vmem:[%s12 + $0x80] sm:$0xff]
      %v3901 = vld [vmem:[%s12 + $0x88] sm:$0xff]
      %v3902 = vld [vmem:[%s12 + $0x90] sm:$0xff]
      %v3903 = vld [vmem:[%s12 + $0x98] sm:$0xff]
      %v3904 = vld [vmem:[%s12 + $0xa0] sm:$0xff]
      %v3905 = vld [vmem:[%s12 + $0xa8] sm:$0xff]
      %v3906 = vld [vmem:[%s12 + $0xb0] sm:$0xff]
      %v3907 = vld [vmem:[%s12 + $0xb8] sm:$0xff]
      %s3908 = scalar_lea.vmem %s12, 192
      %v3909 = vld [vmem:[%s3908] sm:$0xff]
      %v3910 = vld [vmem:[%s3908 + $0x8] sm:$0xff]
      %v3911 = vld [vmem:[%s3908 + $0x10] sm:$0xff]
      %v3912 = vld [vmem:[%s3908 + $0x18] sm:$0xff]
      %v3913 = vld [vmem:[%s3908 + $0x20] sm:$0xff]
      %v3914 = vld [vmem:[%s3908 + $0x28] sm:$0xff]
      %v3915 = vld [vmem:[%s3908 + $0x30] sm:$0xff]
      %v3916 = vld [vmem:[%s3908 + $0x38] sm:$0xff]
      %v3917 = vld [vmem:[%s3908 + $0x40] sm:$0xff]
      %v3918 = vld [vmem:[%s3908 + $0x48] sm:$0xff]
      %v3919 = vld [vmem:[%s3908 + $0x50] sm:$0xff]
      %v3920 = vld [vmem:[%s3908 + $0x58] sm:$0xff]
      %v3921 = vld [vmem:[%s3908 + $0x60] sm:$0xff]
      %v3922 = vld [vmem:[%s3908 + $0x68] sm:$0xff]
      %v3923 = vld [vmem:[%s3908 + $0x70] sm:$0xff]
      %v3924 = vld [vmem:[%s3908 + $0x78] sm:$0xff]
      %v3925 = vld [vmem:[%s3908 + $0x80] sm:$0xff]
      %v3926 = vld [vmem:[%s3908 + $0x88] sm:$0xff]
      %v3927 = vld [vmem:[%s3908 + $0x90] sm:$0xff]
      %v3928 = vld [vmem:[%s3908 + $0x98] sm:$0xff]
      %v3929 = vld [vmem:[%s3908 + $0xa0] sm:$0xff]
      %v3930 = vld [vmem:[%s3908 + $0xa8] sm:$0xff]
      %v3931 = vld [vmem:[%s3908 + $0xb0] sm:$0xff]
      %v3932 = vld [vmem:[%s3908 + $0xb8] sm:$0xff]
      %v3934 = vsel %vm780, %v3692, 0
      %v3937 = vsel %vm780, %v3693, 0
      %v3940 = vsel %vm780, %v3694, 0
      %v3943 = vsel %vm780, %v3695, 0
      %v3946 = vsel %vm780, %v3696, 0
      %v3949 = vsel %vm780, %v3697, 0
      %v3952 = vsel %vm780, %v3698, 0
      %v3955 = vsel %vm780, %v3699, 0
      %v3958 = vsel %vm780, %v3700, 0
      %v3961 = vsel %vm780, %v3701, 0
      %v3964 = vsel %vm780, %v3702, 0
      %v3967 = vsel %vm780, %v3703, 0
      %v3970 = vsel %vm780, %v3704, 0
      %v3973 = vsel %vm780, %v3705, 0
      %v3976 = vsel %vm780, %v3706, 0
      %v3979 = vsel %vm780, %v3707, 0
      %v3982 = vsel %vm780, %v3708, 0
      %v3985 = vsel %vm780, %v3709, 0
      %v3988 = vsel %vm780, %v3710, 0
      %v3991 = vsel %vm780, %v3711, 0
      %v3994 = vsel %vm780, %v3712, 0
      %v3997 = vsel %vm780, %v3713, 0
      %v4000 = vsel %vm780, %v3714, 0
      %v4003 = vsel %vm780, %v3715, 0
      %v4006 = vsel %vm780, %v3716, 0
      %v4009 = vsel %vm780, %v3717, 0
      %v4012 = vsel %vm780, %v3718, 0
      %v4015 = vsel %vm780, %v3719, 0
      %v4018 = vsel %vm780, %v3720, 0
      %v4021 = vsel %vm780, %v3721, 0
      %v4024 = vsel %vm780, %v3722, 0
      %v4027 = vsel %vm780, %v3723, 0
      %4029 = vmatpush.msra.mxu0 %v3924
      %4030 = vmatpush.msra.mxu0 %v3923
      %4031 = vmatpush.msra.mxu0 %v3922
      %4032 = vmatpush.msra.mxu0 %v3921
      %4033 = vmatpush.msra.mxu0 %v3920
      %4034 = vmatpush.msra.mxu0 %v3919
      %4035 = vmatpush.msra.mxu0 %v3918
      %4036 = vmatpush.msra.mxu0 %v3917
      %4037 = vmatpush.msra.mxu0 %v3916
      %4038 = vmatpush.msra.mxu0 %v3915
      %4039 = vmatpush.msra.mxu0 %v3914
      %4040 = vmatpush.msra.mxu0 %v3913
      %4041 = vmatpush.msra.mxu0 %v3912
      %4042 = vmatpush.msra.mxu0 %v3911
      %4043 = vmatpush.msra.mxu0 %v3910
      %4044 = vmatpush.msra.mxu0 %v3909
      %4045 = vmatmul.f32.gmra.mxu0 %v3852
      %v4046 = vpop.f32.mrf.mxu0
      %v4047 = vadd.f32 0.0, %v4046
      %4048 = vmatmul.f32.gmra.mxu0 %v3853
      %v4049 = vpop.f32.mrf.mxu0
      %v4050 = vadd.f32 0.0, %v4049
      %4051 = vmatmul.f32.gmra.mxu0 %v3854
      %v4052 = vpop.f32.mrf.mxu0
      %v4053 = vadd.f32 0.0, %v4052
      %4054 = vmatmul.f32.gmra.mxu0 %v3855
      %v4055 = vpop.f32.mrf.mxu0
      %v4056 = vadd.f32 0.0, %v4055
      %4057 = vmatmul.f32.gmra.mxu0 %v3856
      %v4058 = vpop.f32.mrf.mxu0
      %v4059 = vadd.f32 0.0, %v4058
      %4060 = vmatmul.f32.gmra.mxu0 %v3857
      %v4061 = vpop.f32.mrf.mxu0
      %v4062 = vadd.f32 0.0, %v4061
      %4063 = vmatmul.f32.gmra.mxu0 %v3858
      %v4064 = vpop.f32.mrf.mxu0
      %v4065 = vadd.f32 0.0, %v4064
      %4066 = vmatmul.f32.gmra.mxu0 %v3859
      %v4067 = vpop.f32.mrf.mxu0
      %v4068 = vadd.f32 0.0, %v4067
      %4069 = vmatmul.f32.gmra.mxu0 %v3860
      %v4070 = vpop.f32.mrf.mxu0
      %v4071 = vadd.f32 0.0, %v4070
      %4072 = vmatmul.f32.gmra.mxu0 %v3861
      %v4073 = vpop.f32.mrf.mxu0
      %v4074 = vadd.f32 0.0, %v4073
      %4075 = vmatmul.f32.gmra.mxu0 %v3862
      %v4076 = vpop.f32.mrf.mxu0
      %v4077 = vadd.f32 0.0, %v4076
      %4078 = vmatmul.f32.gmra.mxu0 %v3863
      %v4079 = vpop.f32.mrf.mxu0
      %v4080 = vadd.f32 0.0, %v4079
      %4081 = vmatmul.f32.gmra.mxu0 %v3864
      %v4082 = vpop.f32.mrf.mxu0
      %v4083 = vadd.f32 0.0, %v4082
      %4084 = vmatmul.f32.gmra.mxu0 %v3865
      %v4085 = vpop.f32.mrf.mxu0
      %v4086 = vadd.f32 0.0, %v4085
      %4087 = vmatmul.f32.gmra.mxu0 %v3866
      %v4088 = vpop.f32.mrf.mxu0
      %v4089 = vadd.f32 0.0, %v4088
      %4090 = vmatmul.f32.gmra.mxu0 %v3867
      %v4091 = vpop.f32.mrf.mxu0
      %v4092 = vadd.f32 0.0, %v4091
      %4093 = vmatmul.f32.gmra.mxu0 %v3868
      %v4094 = vpop.f32.mrf.mxu0
      %v4095 = vadd.f32 0.0, %v4094
      %4096 = vmatmul.f32.gmra.mxu0 %v3869
      %v4097 = vpop.f32.mrf.mxu0
      %v4098 = vadd.f32 0.0, %v4097
      %4099 = vmatmul.f32.gmra.mxu0 %v3870
      %v4100 = vpop.f32.mrf.mxu0
      %v4101 = vadd.f32 0.0, %v4100
      %4102 = vmatmul.f32.gmra.mxu0 %v3871
      %v4103 = vpop.f32.mrf.mxu0
      %v4104 = vadd.f32 0.0, %v4103
      %4105 = vmatmul.f32.gmra.mxu0 %v3872
      %v4106 = vpop.f32.mrf.mxu0
      %v4107 = vadd.f32 0.0, %v4106
      %4108 = vmatmul.f32.gmra.mxu0 %v3873
      %v4109 = vpop.f32.mrf.mxu0
      %v4110 = vadd.f32 0.0, %v4109
      %4111 = vmatmul.f32.gmra.mxu0 %v3874
      %v4112 = vpop.f32.mrf.mxu0
      %v4113 = vadd.f32 0.0, %v4112
      %4114 = vmatmul.f32.gmra.mxu0 %v3875
      %v4115 = vpop.f32.mrf.mxu0
      %v4116 = vadd.f32 0.0, %v4115
      %4117 = vmatmul.f32.gmra.mxu0 %v3876
      %v4118 = vpop.f32.mrf.mxu0
      %v4119 = vadd.f32 0.0, %v4118
      %4120 = vmatmul.f32.gmra.mxu0 %v3877
      %v4121 = vpop.f32.mrf.mxu0
      %v4122 = vadd.f32 0.0, %v4121
      %4123 = vmatmul.f32.gmra.mxu0 %v3878
      %v4124 = vpop.f32.mrf.mxu0
      %v4125 = vadd.f32 0.0, %v4124
      %4126 = vmatmul.f32.gmra.mxu0 %v3879
      %v4127 = vpop.f32.mrf.mxu0
      %v4128 = vadd.f32 0.0, %v4127
      %4129 = vmatmul.f32.gmra.mxu0 %v3880
      %v4130 = vpop.f32.mrf.mxu0
      %v4131 = vadd.f32 0.0, %v4130
      %4132 = vmatmul.f32.gmra.mxu0 %v3881
      %v4133 = vpop.f32.mrf.mxu0
      %v4134 = vadd.f32 0.0, %v4133
      %4135 = vmatmul.f32.gmra.mxu0 %v3882
      %v4136 = vpop.f32.mrf.mxu0
      %v4137 = vadd.f32 0.0, %v4136
      %4138 = vmatmul.f32.gmra.mxu0 %v3883
      %v4139 = vpop.f32.mrf.mxu0
      %v4140 = vadd.f32 0.0, %v4139
      %4141 = vdwg.mxu0
      %4142 = vmatpush.msra.mxu0 0.0
      %4143 = vmatpush.msra.mxu0 0.0
      %4144 = vmatpush.msra.mxu0 0.0
      %4145 = vmatpush.msra.mxu0 0.0
      %4146 = vmatpush.msra.mxu0 0.0
      %4147 = vmatpush.msra.mxu0 0.0
      %4148 = vmatpush.msra.mxu0 0.0
      %4149 = vmatpush.msra.mxu0 0.0
      %4150 = vmatpush.msra.mxu0 %v3932
      %4151 = vmatpush.msra.mxu0 %v3931
      %4152 = vmatpush.msra.mxu0 %v3930
      %4153 = vmatpush.msra.mxu0 %v3929
      %4154 = vmatpush.msra.mxu0 %v3928
      %4155 = vmatpush.msra.mxu0 %v3927
      %4156 = vmatpush.msra.mxu0 %v3926
      %4157 = vmatpush.msra.mxu0 %v3925
      %4158 = vmatmul.f32.gmra.mxu0 %v3934
      %v4159 = vpop.f32.mrf.mxu0
      %v4160 = vadd.f32 %v4047, %v4159
      %4161 = vmatmul.f32.gmra.mxu0 %v3937
      %v4162 = vpop.f32.mrf.mxu0
      %v4163 = vadd.f32 %v4050, %v4162
      %4164 = vmatmul.f32.gmra.mxu0 %v3940
      %v4165 = vpop.f32.mrf.mxu0
      %v4166 = vadd.f32 %v4053, %v4165
      %4167 = vmatmul.f32.gmra.mxu0 %v3943
      %v4168 = vpop.f32.mrf.mxu0
      %v4169 = vadd.f32 %v4056, %v4168
      %4170 = vmatmul.f32.gmra.mxu0 %v3946
      %v4171 = vpop.f32.mrf.mxu0
      %v4172 = vadd.f32 %v4059, %v4171
      %4173 = vmatmul.f32.gmra.mxu0 %v3949
      %v4174 = vpop.f32.mrf.mxu0
      %v4175 = vadd.f32 %v4062, %v4174
      %4176 = vmatmul.f32.gmra.mxu0 %v3952
      %v4177 = vpop.f32.mrf.mxu0
      %v4178 = vadd.f32 %v4065, %v4177
      %4179 = vmatmul.f32.gmra.mxu0 %v3955
      %v4180 = vpop.f32.mrf.mxu0
      %v4181 = vadd.f32 %v4068, %v4180
      %4182 = vmatmul.f32.gmra.mxu0 %v3958
      %v4183 = vpop.f32.mrf.mxu0
      %v4184 = vadd.f32 %v4071, %v4183
      %4185 = vmatmul.f32.gmra.mxu0 %v3961
      %v4186 = vpop.f32.mrf.mxu0
      %v4187 = vadd.f32 %v4074, %v4186
      %4188 = vmatmul.f32.gmra.mxu0 %v3964
      %v4189 = vpop.f32.mrf.mxu0
      %v4190 = vadd.f32 %v4077, %v4189
      %4191 = vmatmul.f32.gmra.mxu0 %v3967
      %v4192 = vpop.f32.mrf.mxu0
      %v4193 = vadd.f32 %v4080, %v4192
      %4194 = vmatmul.f32.gmra.mxu0 %v3970
      %v4195 = vpop.f32.mrf.mxu0
      %v4196 = vadd.f32 %v4083, %v4195
      %4197 = vmatmul.f32.gmra.mxu0 %v3973
      %v4198 = vpop.f32.mrf.mxu0
      %v4199 = vadd.f32 %v4086, %v4198
      %4200 = vmatmul.f32.gmra.mxu0 %v3976
      %v4201 = vpop.f32.mrf.mxu0
      %v4202 = vadd.f32 %v4089, %v4201
      %4203 = vmatmul.f32.gmra.mxu0 %v3979
      %v4204 = vpop.f32.mrf.mxu0
      %v4205 = vadd.f32 %v4092, %v4204
      %4206 = vmatmul.f32.gmra.mxu0 %v3982
      %v4207 = vpop.f32.mrf.mxu0
      %v4208 = vadd.f32 %v4095, %v4207
      %4209 = vmatmul.f32.gmra.mxu0 %v3985
      %v4210 = vpop.f32.mrf.mxu0
      %v4211 = vadd.f32 %v4098, %v4210
      %4212 = vmatmul.f32.gmra.mxu0 %v3988
      %v4213 = vpop.f32.mrf.mxu0
      %v4214 = vadd.f32 %v4101, %v4213
      %4215 = vmatmul.f32.gmra.mxu0 %v3991
      %v4216 = vpop.f32.mrf.mxu0
      %v4217 = vadd.f32 %v4104, %v4216
      %4218 = vmatmul.f32.gmra.mxu0 %v3994
      %v4219 = vpop.f32.mrf.mxu0
      %v4220 = vadd.f32 %v4107, %v4219
      %4221 = vmatmul.f32.gmra.mxu0 %v3997
      %v4222 = vpop.f32.mrf.mxu0
      %v4223 = vadd.f32 %v4110, %v4222
      %4224 = vmatmul.f32.gmra.mxu0 %v4000
      %v4225 = vpop.f32.mrf.mxu0
      %v4226 = vadd.f32 %v4113, %v4225
      %4227 = vmatmul.f32.gmra.mxu0 %v4003
      %v4228 = vpop.f32.mrf.mxu0
      %v4229 = vadd.f32 %v4116, %v4228
      %4230 = vmatmul.f32.gmra.mxu0 %v4006
      %v4231 = vpop.f32.mrf.mxu0
      %v4232 = vadd.f32 %v4119, %v4231
      %4233 = vmatmul.f32.gmra.mxu0 %v4009
      %v4234 = vpop.f32.mrf.mxu0
      %v4235 = vadd.f32 %v4122, %v4234
      %4236 = vmatmul.f32.gmra.mxu0 %v4012
      %v4237 = vpop.f32.mrf.mxu0
      %v4238 = vadd.f32 %v4125, %v4237
      %4239 = vmatmul.f32.gmra.mxu0 %v4015
      %v4240 = vpop.f32.mrf.mxu0
      %v4241 = vadd.f32 %v4128, %v4240
      %4242 = vmatmul.f32.gmra.mxu0 %v4018
      %v4243 = vpop.f32.mrf.mxu0
      %v4244 = vadd.f32 %v4131, %v4243
      %4245 = vmatmul.f32.gmra.mxu0 %v4021
      %v4246 = vpop.f32.mrf.mxu0
      %v4247 = vadd.f32 %v4134, %v4246
      %4248 = vmatmul.f32.gmra.mxu0 %v4024
      %v4249 = vpop.f32.mrf.mxu0
      %v4250 = vadd.f32 %v4137, %v4249
      %4251 = vmatmul.f32.gmra.mxu0 %v4027
      %v4252 = vpop.f32.mrf.mxu0
      %v4253 = vadd.f32 %v4140, %v4252
      %4254 = vdwg.mxu0
      %v4256 = vsel %vm780, 0.0, 0
      %4258 = vmatpush.msra.mxu0 %v3899
      %4259 = vmatpush.msra.mxu0 %v3898
      %4260 = vmatpush.msra.mxu0 %v3897
      %4261 = vmatpush.msra.mxu0 %v3896
      %4262 = vmatpush.msra.mxu0 %v3895
      %4263 = vmatpush.msra.mxu0 %v3894
      %4264 = vmatpush.msra.mxu0 %v3893
      %4265 = vmatpush.msra.mxu0 %v3892
      %4266 = vmatpush.msra.mxu0 %v3891
      %4267 = vmatpush.msra.mxu0 %v3890
      %4268 = vmatpush.msra.mxu0 %v3889
      %4269 = vmatpush.msra.mxu0 %v3888
      %4270 = vmatpush.msra.mxu0 %v3887
      %4271 = vmatpush.msra.mxu0 %v3886
      %4272 = vmatpush.msra.mxu0 %v3885
      %4273 = vmatpush.msra.mxu0 %v3884
      %4274 = vmatmul.f32.gmra.mxu0 0.0
      %v4275 = vpop.f32.mrf.mxu0
      %v4276 = vadd.f32 %v4160, %v4275
      %4277 = vmatmul.f32.gmra.mxu0 0.0
      %v4278 = vpop.f32.mrf.mxu0
      %v4279 = vadd.f32 %v4163, %v4278
      %4280 = vmatmul.f32.gmra.mxu0 %v3852
      %v4281 = vpop.f32.mrf.mxu0
      %v4282 = vadd.f32 %v4166, %v4281
      %4283 = vmatmul.f32.gmra.mxu0 %v3853
      %v4284 = vpop.f32.mrf.mxu0
      %v4285 = vadd.f32 %v4169, %v4284
      %4286 = vmatmul.f32.gmra.mxu0 %v3854
      %v4287 = vpop.f32.mrf.mxu0
      %v4288 = vadd.f32 %v4172, %v4287
      %4289 = vmatmul.f32.gmra.mxu0 %v3855
      %v4290 = vpop.f32.mrf.mxu0
      %v4291 = vadd.f32 %v4175, %v4290
      %4292 = vmatmul.f32.gmra.mxu0 %v3856
      %v4293 = vpop.f32.mrf.mxu0
      %v4294 = vadd.f32 %v4178, %v4293
      %4295 = vmatmul.f32.gmra.mxu0 %v3857
      %v4296 = vpop.f32.mrf.mxu0
      %v4297 = vadd.f32 %v4181, %v4296
      %4298 = vmatmul.f32.gmra.mxu0 %v3858
      %v4299 = vpop.f32.mrf.mxu0
      %v4300 = vadd.f32 %v4184, %v4299
      %4301 = vmatmul.f32.gmra.mxu0 %v3859
      %v4302 = vpop.f32.mrf.mxu0
      %v4303 = vadd.f32 %v4187, %v4302
      %4304 = vmatmul.f32.gmra.mxu0 %v3860
      %v4305 = vpop.f32.mrf.mxu0
      %v4306 = vadd.f32 %v4190, %v4305
      %4307 = vmatmul.f32.gmra.mxu0 %v3861
      %v4308 = vpop.f32.mrf.mxu0
      %v4309 = vadd.f32 %v4193, %v4308
      %4310 = vmatmul.f32.gmra.mxu0 %v3862
      %v4311 = vpop.f32.mrf.mxu0
      %v4312 = vadd.f32 %v4196, %v4311
      %4313 = vmatmul.f32.gmra.mxu0 %v3863
      %v4314 = vpop.f32.mrf.mxu0
      %v4315 = vadd.f32 %v4199, %v4314
      %4316 = vmatmul.f32.gmra.mxu0 %v3864
      %v4317 = vpop.f32.mrf.mxu0
      %v4318 = vadd.f32 %v4202, %v4317
      %4319 = vmatmul.f32.gmra.mxu0 %v3865
      %v4320 = vpop.f32.mrf.mxu0
      %v4321 = vadd.f32 %v4205, %v4320
      %4322 = vmatmul.f32.gmra.mxu0 %v3866
      %v4323 = vpop.f32.mrf.mxu0
      %v4324 = vadd.f32 %v4208, %v4323
      %4325 = vmatmul.f32.gmra.mxu0 %v3867
      %v4326 = vpop.f32.mrf.mxu0
      %v4327 = vadd.f32 %v4211, %v4326
      %4328 = vmatmul.f32.gmra.mxu0 %v3868
      %v4329 = vpop.f32.mrf.mxu0
      %v4330 = vadd.f32 %v4214, %v4329
      %4331 = vmatmul.f32.gmra.mxu0 %v3869
      %v4332 = vpop.f32.mrf.mxu0
      %v4333 = vadd.f32 %v4217, %v4332
      %4334 = vmatmul.f32.gmra.mxu0 %v3870
      %v4335 = vpop.f32.mrf.mxu0
      %v4336 = vadd.f32 %v4220, %v4335
      %4337 = vmatmul.f32.gmra.mxu0 %v3871
      %v4338 = vpop.f32.mrf.mxu0
      %v4339 = vadd.f32 %v4223, %v4338
      %4340 = vmatmul.f32.gmra.mxu0 %v3872
      %v4341 = vpop.f32.mrf.mxu0
      %v4342 = vadd.f32 %v4226, %v4341
      %4343 = vmatmul.f32.gmra.mxu0 %v3873
      %v4344 = vpop.f32.mrf.mxu0
      %v4345 = vadd.f32 %v4229, %v4344
      %4346 = vmatmul.f32.gmra.mxu0 %v3874
      %v4347 = vpop.f32.mrf.mxu0
      %v4348 = vadd.f32 %v4232, %v4347
      %4349 = vmatmul.f32.gmra.mxu0 %v3875
      %v4350 = vpop.f32.mrf.mxu0
      %v4351 = vadd.f32 %v4235, %v4350
      %4352 = vmatmul.f32.gmra.mxu0 %v3876
      %v4353 = vpop.f32.mrf.mxu0
      %v4354 = vadd.f32 %v4238, %v4353
      %4355 = vmatmul.f32.gmra.mxu0 %v3877
      %v4356 = vpop.f32.mrf.mxu0
      %v4357 = vadd.f32 %v4241, %v4356
      %4358 = vmatmul.f32.gmra.mxu0 %v3878
      %v4359 = vpop.f32.mrf.mxu0
      %v4360 = vadd.f32 %v4244, %v4359
      %4361 = vmatmul.f32.gmra.mxu0 %v3879
      %v4362 = vpop.f32.mrf.mxu0
      %v4363 = vadd.f32 %v4247, %v4362
      %4364 = vmatmul.f32.gmra.mxu0 %v3880
      %v4365 = vpop.f32.mrf.mxu0
      %v4366 = vadd.f32 %v4250, %v4365
      %4367 = vmatmul.f32.gmra.mxu0 %v3881
      %v4368 = vpop.f32.mrf.mxu0
      %v4369 = vadd.f32 %v4253, %v4368
      %4370 = vdwg.mxu0
      %4371 = vmatpush.msra.mxu0 0.0
      %4372 = vmatpush.msra.mxu0 0.0
      %4373 = vmatpush.msra.mxu0 0.0
      %4374 = vmatpush.msra.mxu0 0.0
      %4375 = vmatpush.msra.mxu0 0.0
      %4376 = vmatpush.msra.mxu0 0.0
      %4377 = vmatpush.msra.mxu0 0.0
      %4378 = vmatpush.msra.mxu0 0.0
      %4379 = vmatpush.msra.mxu0 %v3907
      %4380 = vmatpush.msra.mxu0 %v3906
      %4381 = vmatpush.msra.mxu0 %v3905
      %4382 = vmatpush.msra.mxu0 %v3904
      %4383 = vmatpush.msra.mxu0 %v3903
      %4384 = vmatpush.msra.mxu0 %v3902
      %4385 = vmatpush.msra.mxu0 %v3901
      %4386 = vmatpush.msra.mxu0 %v3900
      %4387 = vmatmul.f32.gmra.mxu0 %v4256
      %v4388 = vpop.f32.mrf.mxu0
      %v4389 = vadd.f32 %v4276, %v4388
      %4390 = vmatmul.f32.gmra.mxu0 %v4256
      %v4391 = vpop.f32.mrf.mxu0
      %v4392 = vadd.f32 %v4279, %v4391
      %4393 = vmatmul.f32.gmra.mxu0 %v3934
      %v4394 = vpop.f32.mrf.mxu0
      %v4395 = vadd.f32 %v4282, %v4394
      %4396 = vmatmul.f32.gmra.mxu0 %v3937
      %v4397 = vpop.f32.mrf.mxu0
      %v4398 = vadd.f32 %v4285, %v4397
      %4399 = vmatmul.f32.gmra.mxu0 %v3940
      %v4400 = vpop.f32.mrf.mxu0
      %v4401 = vadd.f32 %v4288, %v4400
      %4402 = vmatmul.f32.gmra.mxu0 %v3943
      %v4403 = vpop.f32.mrf.mxu0
      %v4404 = vadd.f32 %v4291, %v4403
      %4405 = vmatmul.f32.gmra.mxu0 %v3946
      %v4406 = vpop.f32.mrf.mxu0
      %v4407 = vadd.f32 %v4294, %v4406
      %4408 = vmatmul.f32.gmra.mxu0 %v3949
      %v4409 = vpop.f32.mrf.mxu0
      %v4410 = vadd.f32 %v4297, %v4409
      %4411 = vmatmul.f32.gmra.mxu0 %v3952
      %v4412 = vpop.f32.mrf.mxu0
      %v4413 = vadd.f32 %v4300, %v4412
      %4414 = vmatmul.f32.gmra.mxu0 %v3955
      %v4415 = vpop.f32.mrf.mxu0
      %v4416 = vadd.f32 %v4303, %v4415
      %4417 = vmatmul.f32.gmra.mxu0 %v3958
      %v4418 = vpop.f32.mrf.mxu0
      %v4419 = vadd.f32 %v4306, %v4418
      %4420 = vmatmul.f32.gmra.mxu0 %v3961
      %v4421 = vpop.f32.mrf.mxu0
      %v4422 = vadd.f32 %v4309, %v4421
      %4423 = vmatmul.f32.gmra.mxu0 %v3964
      %v4424 = vpop.f32.mrf.mxu0
      %v4425 = vadd.f32 %v4312, %v4424
      %4426 = vmatmul.f32.gmra.mxu0 %v3967
      %v4427 = vpop.f32.mrf.mxu0
      %v4428 = vadd.f32 %v4315, %v4427
      %4429 = vmatmul.f32.gmra.mxu0 %v3970
      %v4430 = vpop.f32.mrf.mxu0
      %v4431 = vadd.f32 %v4318, %v4430
      %4432 = vmatmul.f32.gmra.mxu0 %v3973
      %v4433 = vpop.f32.mrf.mxu0
      %v4434 = vadd.f32 %v4321, %v4433
      %4435 = vmatmul.f32.gmra.mxu0 %v3976
      %v4436 = vpop.f32.mrf.mxu0
      %v4437 = vadd.f32 %v4324, %v4436
      %4438 = vmatmul.f32.gmra.mxu0 %v3979
      %v4439 = vpop.f32.mrf.mxu0
      %v4440 = vadd.f32 %v4327, %v4439
      %4441 = vmatmul.f32.gmra.mxu0 %v3982
      %v4442 = vpop.f32.mrf.mxu0
      %v4443 = vadd.f32 %v4330, %v4442
      %4444 = vmatmul.f32.gmra.mxu0 %v3985
      %v4445 = vpop.f32.mrf.mxu0
      %v4446 = vadd.f32 %v4333, %v4445
      %4447 = vmatmul.f32.gmra.mxu0 %v3988
      %v4448 = vpop.f32.mrf.mxu0
      %v4449 = vadd.f32 %v4336, %v4448
      %4450 = vmatmul.f32.gmra.mxu0 %v3991
      %v4451 = vpop.f32.mrf.mxu0
      %v4452 = vadd.f32 %v4339, %v4451
      %4453 = vmatmul.f32.gmra.mxu0 %v3994
      %v4454 = vpop.f32.mrf.mxu0
      %v4455 = vadd.f32 %v4342, %v4454
      %4456 = vmatmul.f32.gmra.mxu0 %v3997
      %v4457 = vpop.f32.mrf.mxu0
      %v4458 = vadd.f32 %v4345, %v4457
      %4459 = vmatmul.f32.gmra.mxu0 %v4000
      %v4460 = vpop.f32.mrf.mxu0
      %v4461 = vadd.f32 %v4348, %v4460
      %4462 = vmatmul.f32.gmra.mxu0 %v4003
      %v4463 = vpop.f32.mrf.mxu0
      %v4464 = vadd.f32 %v4351, %v4463
      %4465 = vmatmul.f32.gmra.mxu0 %v4006
      %v4466 = vpop.f32.mrf.mxu0
      %v4467 = vadd.f32 %v4354, %v4466
      %4468 = vmatmul.f32.gmra.mxu0 %v4009
      %v4469 = vpop.f32.mrf.mxu0
      %v4470 = vadd.f32 %v4357, %v4469
      %4471 = vmatmul.f32.gmra.mxu0 %v4012
      %v4472 = vpop.f32.mrf.mxu0
      %v4473 = vadd.f32 %v4360, %v4472
      %4474 = vmatmul.f32.gmra.mxu0 %v4015
      %v4475 = vpop.f32.mrf.mxu0
      %v4476 = vadd.f32 %v4363, %v4475
      %4477 = vmatmul.f32.gmra.mxu0 %v4018
      %v4478 = vpop.f32.mrf.mxu0
      %v4479 = vadd.f32 %v4366, %v4478
      %4480 = vmatmul.f32.gmra.mxu0 %v4021
      %v4481 = vpop.f32.mrf.mxu0
      %v4482 = vadd.f32 %v4369, %v4481
      %4483 = vdwg.mxu0
      %s4484 = scalar_lea.vmem %s12, 384
      %v4485 = vld [vmem:[%s4484] sm:$0xff]
      %v4486 = vld [vmem:[%s4484 + $0x8] sm:$0xff]
      %v4487 = vld [vmem:[%s4484 + $0x10] sm:$0xff]
      %v4488 = vld [vmem:[%s4484 + $0x18] sm:$0xff]
      %v4489 = vld [vmem:[%s4484 + $0x20] sm:$0xff]
      %v4490 = vld [vmem:[%s4484 + $0x28] sm:$0xff]
      %v4491 = vld [vmem:[%s4484 + $0x30] sm:$0xff]
      %v4492 = vld [vmem:[%s4484 + $0x38] sm:$0xff]
      %v4493 = vld [vmem:[%s4484 + $0x40] sm:$0xff]
      %v4494 = vld [vmem:[%s4484 + $0x48] sm:$0xff]
      %v4495 = vld [vmem:[%s4484 + $0x50] sm:$0xff]
      %v4496 = vld [vmem:[%s4484 + $0x58] sm:$0xff]
      %v4497 = vld [vmem:[%s4484 + $0x60] sm:$0xff]
      %v4498 = vld [vmem:[%s4484 + $0x68] sm:$0xff]
      %v4499 = vld [vmem:[%s4484 + $0x70] sm:$0xff]
      %v4500 = vld [vmem:[%s4484 + $0x78] sm:$0xff]
      %v4501 = vld [vmem:[%s4484 + $0x80] sm:$0xff]
      %v4502 = vld [vmem:[%s4484 + $0x88] sm:$0xff]
      %v4503 = vld [vmem:[%s4484 + $0x90] sm:$0xff]
      %v4504 = vld [vmem:[%s4484 + $0x98] sm:$0xff]
      %v4505 = vld [vmem:[%s4484 + $0xa0] sm:$0xff]
      %v4506 = vld [vmem:[%s4484 + $0xa8] sm:$0xff]
      %v4507 = vld [vmem:[%s4484 + $0xb0] sm:$0xff]
      %v4508 = vld [vmem:[%s4484 + $0xb8] sm:$0xff]
      %4509 = vmatpush.msra.mxu0 %v4500
      %4510 = vmatpush.msra.mxu0 %v4499
      %4511 = vmatpush.msra.mxu0 %v4498
      %4512 = vmatpush.msra.mxu0 %v4497
      %4513 = vmatpush.msra.mxu0 %v4496
      %4514 = vmatpush.msra.mxu0 %v4495
      %4515 = vmatpush.msra.mxu0 %v4494
      %4516 = vmatpush.msra.mxu0 %v4493
      %4517 = vmatpush.msra.mxu0 %v4492
      %4518 = vmatpush.msra.mxu0 %v4491
      %4519 = vmatpush.msra.mxu0 %v4490
      %4520 = vmatpush.msra.mxu0 %v4489
      %4521 = vmatpush.msra.mxu0 %v4488
      %4522 = vmatpush.msra.mxu0 %v4487
      %4523 = vmatpush.msra.mxu0 %v4486
      %4524 = vmatpush.msra.mxu0 %v4485
      %4525 = vmatmul.f32.gmra.mxu0 %v3854
      %v4526 = vpop.f32.mrf.mxu0
      %v4527 = vadd.f32 0.0, %v4526
      %4528 = vmatmul.f32.gmra.mxu0 %v3855
      %v4529 = vpop.f32.mrf.mxu0
      %v4530 = vadd.f32 0.0, %v4529
      %4531 = vmatmul.f32.gmra.mxu0 %v3856
      %v4532 = vpop.f32.mrf.mxu0
      %v4533 = vadd.f32 0.0, %v4532
      %4534 = vmatmul.f32.gmra.mxu0 %v3857
      %v4535 = vpop.f32.mrf.mxu0
      %v4536 = vadd.f32 0.0, %v4535
      %4537 = vmatmul.f32.gmra.mxu0 %v3858
      %v4538 = vpop.f32.mrf.mxu0
      %v4539 = vadd.f32 0.0, %v4538
      %4540 = vmatmul.f32.gmra.mxu0 %v3859
      %v4541 = vpop.f32.mrf.mxu0
      %v4542 = vadd.f32 0.0, %v4541
      %4543 = vmatmul.f32.gmra.mxu0 %v3860
      %v4544 = vpop.f32.mrf.mxu0
      %v4545 = vadd.f32 0.0, %v4544
      %4546 = vmatmul.f32.gmra.mxu0 %v3861
      %v4547 = vpop.f32.mrf.mxu0
      %v4548 = vadd.f32 0.0, %v4547
      %4549 = vmatmul.f32.gmra.mxu0 %v3862
      %v4550 = vpop.f32.mrf.mxu0
      %v4551 = vadd.f32 0.0, %v4550
      %4552 = vmatmul.f32.gmra.mxu0 %v3863
      %v4553 = vpop.f32.mrf.mxu0
      %v4554 = vadd.f32 0.0, %v4553
      %4555 = vmatmul.f32.gmra.mxu0 %v3864
      %v4556 = vpop.f32.mrf.mxu0
      %v4557 = vadd.f32 0.0, %v4556
      %4558 = vmatmul.f32.gmra.mxu0 %v3865
      %v4559 = vpop.f32.mrf.mxu0
      %v4560 = vadd.f32 0.0, %v4559
      %4561 = vmatmul.f32.gmra.mxu0 %v3866
      %v4562 = vpop.f32.mrf.mxu0
      %v4563 = vadd.f32 0.0, %v4562
      %4564 = vmatmul.f32.gmra.mxu0 %v3867
      %v4565 = vpop.f32.mrf.mxu0
      %v4566 = vadd.f32 0.0, %v4565
      %4567 = vmatmul.f32.gmra.mxu0 %v3868
      %v4568 = vpop.f32.mrf.mxu0
      %v4569 = vadd.f32 0.0, %v4568
      %4570 = vmatmul.f32.gmra.mxu0 %v3869
      %v4571 = vpop.f32.mrf.mxu0
      %v4572 = vadd.f32 0.0, %v4571
      %4573 = vmatmul.f32.gmra.mxu0 %v3870
      %v4574 = vpop.f32.mrf.mxu0
      %v4575 = vadd.f32 0.0, %v4574
      %4576 = vmatmul.f32.gmra.mxu0 %v3871
      %v4577 = vpop.f32.mrf.mxu0
      %v4578 = vadd.f32 0.0, %v4577
      %4579 = vmatmul.f32.gmra.mxu0 %v3872
      %v4580 = vpop.f32.mrf.mxu0
      %v4581 = vadd.f32 0.0, %v4580
      %4582 = vmatmul.f32.gmra.mxu0 %v3873
      %v4583 = vpop.f32.mrf.mxu0
      %v4584 = vadd.f32 0.0, %v4583
      %4585 = vmatmul.f32.gmra.mxu0 %v3874
      %v4586 = vpop.f32.mrf.mxu0
      %v4587 = vadd.f32 0.0, %v4586
      %4588 = vmatmul.f32.gmra.mxu0 %v3875
      %v4589 = vpop.f32.mrf.mxu0
      %v4590 = vadd.f32 0.0, %v4589
      %4591 = vmatmul.f32.gmra.mxu0 %v3876
      %v4592 = vpop.f32.mrf.mxu0
      %v4593 = vadd.f32 0.0, %v4592
      %4594 = vmatmul.f32.gmra.mxu0 %v3877
      %v4595 = vpop.f32.mrf.mxu0
      %v4596 = vadd.f32 0.0, %v4595
      %4597 = vmatmul.f32.gmra.mxu0 %v3878
      %v4598 = vpop.f32.mrf.mxu0
      %v4599 = vadd.f32 0.0, %v4598
      %4600 = vmatmul.f32.gmra.mxu0 %v3879
      %v4601 = vpop.f32.mrf.mxu0
      %v4602 = vadd.f32 0.0, %v4601
      %4603 = vmatmul.f32.gmra.mxu0 %v3880
      %v4604 = vpop.f32.mrf.mxu0
      %v4605 = vadd.f32 0.0, %v4604
      %4606 = vmatmul.f32.gmra.mxu0 %v3881
      %v4607 = vpop.f32.mrf.mxu0
      %v4608 = vadd.f32 0.0, %v4607
      %4609 = vmatmul.f32.gmra.mxu0 %v3882
      %v4610 = vpop.f32.mrf.mxu0
      %v4611 = vadd.f32 0.0, %v4610
      %4612 = vmatmul.f32.gmra.mxu0 %v3883
      %v4613 = vpop.f32.mrf.mxu0
      %v4614 = vadd.f32 0.0, %v4613
      %4615 = vmatmul.f32.gmra.mxu0 0.0
      %v4616 = vpop.f32.mrf.mxu0
      %v4617 = vadd.f32 0.0, %v4616
      %4618 = vmatmul.f32.gmra.mxu0 0.0
      %v4619 = vpop.f32.mrf.mxu0
      %v4620 = vadd.f32 0.0, %v4619
      %4621 = vdwg.mxu0
      %4622 = vmatpush.msra.mxu0 0.0
      %4623 = vmatpush.msra.mxu0 0.0
      %4624 = vmatpush.msra.mxu0 0.0
      %4625 = vmatpush.msra.mxu0 0.0
      %4626 = vmatpush.msra.mxu0 0.0
      %4627 = vmatpush.msra.mxu0 0.0
      %4628 = vmatpush.msra.mxu0 0.0
      %4629 = vmatpush.msra.mxu0 0.0
      %4630 = vmatpush.msra.mxu0 %v4508
      %4631 = vmatpush.msra.mxu0 %v4507
      %4632 = vmatpush.msra.mxu0 %v4506
      %4633 = vmatpush.msra.mxu0 %v4505
      %4634 = vmatpush.msra.mxu0 %v4504
      %4635 = vmatpush.msra.mxu0 %v4503
      %4636 = vmatpush.msra.mxu0 %v4502
      %4637 = vmatpush.msra.mxu0 %v4501
      %4638 = vmatmul.f32.gmra.mxu0 %v3940
      %v4639 = vpop.f32.mrf.mxu0
      %v4640 = vadd.f32 %v4527, %v4639
      %4641 = vmatmul.f32.gmra.mxu0 %v3943
      %v4642 = vpop.f32.mrf.mxu0
      %v4643 = vadd.f32 %v4530, %v4642
      %4644 = vmatmul.f32.gmra.mxu0 %v3946
      %v4645 = vpop.f32.mrf.mxu0
      %v4646 = vadd.f32 %v4533, %v4645
      %4647 = vmatmul.f32.gmra.mxu0 %v3949
      %v4648 = vpop.f32.mrf.mxu0
      %v4649 = vadd.f32 %v4536, %v4648
      %4650 = vmatmul.f32.gmra.mxu0 %v3952
      %v4651 = vpop.f32.mrf.mxu0
      %v4652 = vadd.f32 %v4539, %v4651
      %4653 = vmatmul.f32.gmra.mxu0 %v3955
      %v4654 = vpop.f32.mrf.mxu0
      %v4655 = vadd.f32 %v4542, %v4654
      %4656 = vmatmul.f32.gmra.mxu0 %v3958
      %v4657 = vpop.f32.mrf.mxu0
      %v4658 = vadd.f32 %v4545, %v4657
      %4659 = vmatmul.f32.gmra.mxu0 %v3961
      %v4660 = vpop.f32.mrf.mxu0
      %v4661 = vadd.f32 %v4548, %v4660
      %4662 = vmatmul.f32.gmra.mxu0 %v3964
      %v4663 = vpop.f32.mrf.mxu0
      %v4664 = vadd.f32 %v4551, %v4663
      %4665 = vmatmul.f32.gmra.mxu0 %v3967
      %v4666 = vpop.f32.mrf.mxu0
      %v4667 = vadd.f32 %v4554, %v4666
      %4668 = vmatmul.f32.gmra.mxu0 %v3970
      %v4669 = vpop.f32.mrf.mxu0
      %v4670 = vadd.f32 %v4557, %v4669
      %4671 = vmatmul.f32.gmra.mxu0 %v3973
      %v4672 = vpop.f32.mrf.mxu0
      %v4673 = vadd.f32 %v4560, %v4672
      %4674 = vmatmul.f32.gmra.mxu0 %v3976
      %v4675 = vpop.f32.mrf.mxu0
      %v4676 = vadd.f32 %v4563, %v4675
      %4677 = vmatmul.f32.gmra.mxu0 %v3979
      %v4678 = vpop.f32.mrf.mxu0
      %v4679 = vadd.f32 %v4566, %v4678
      %4680 = vmatmul.f32.gmra.mxu0 %v3982
      %v4681 = vpop.f32.mrf.mxu0
      %v4682 = vadd.f32 %v4569, %v4681
      %4683 = vmatmul.f32.gmra.mxu0 %v3985
      %v4684 = vpop.f32.mrf.mxu0
      %v4685 = vadd.f32 %v4572, %v4684
      %4686 = vmatmul.f32.gmra.mxu0 %v3988
      %v4687 = vpop.f32.mrf.mxu0
      %v4688 = vadd.f32 %v4575, %v4687
      %4689 = vmatmul.f32.gmra.mxu0 %v3991
      %v4690 = vpop.f32.mrf.mxu0
      %v4691 = vadd.f32 %v4578, %v4690
      %4692 = vmatmul.f32.gmra.mxu0 %v3994
      %v4693 = vpop.f32.mrf.mxu0
      %v4694 = vadd.f32 %v4581, %v4693
      %4695 = vmatmul.f32.gmra.mxu0 %v3997
      %v4696 = vpop.f32.mrf.mxu0
      %v4697 = vadd.f32 %v4584, %v4696
      %4698 = vmatmul.f32.gmra.mxu0 %v4000
      %v4699 = vpop.f32.mrf.mxu0
      %v4700 = vadd.f32 %v4587, %v4699
      %4701 = vmatmul.f32.gmra.mxu0 %v4003
      %v4702 = vpop.f32.mrf.mxu0
      %v4703 = vadd.f32 %v4590, %v4702
      %4704 = vmatmul.f32.gmra.mxu0 %v4006
      %v4705 = vpop.f32.mrf.mxu0
      %v4706 = vadd.f32 %v4593, %v4705
      %4707 = vmatmul.f32.gmra.mxu0 %v4009
      %v4708 = vpop.f32.mrf.mxu0
      %v4709 = vadd.f32 %v4596, %v4708
      %4710 = vmatmul.f32.gmra.mxu0 %v4012
      %v4711 = vpop.f32.mrf.mxu0
      %v4712 = vadd.f32 %v4599, %v4711
      %4713 = vmatmul.f32.gmra.mxu0 %v4015
      %v4714 = vpop.f32.mrf.mxu0
      %v4715 = vadd.f32 %v4602, %v4714
      %4716 = vmatmul.f32.gmra.mxu0 %v4018
      %v4717 = vpop.f32.mrf.mxu0
      %v4718 = vadd.f32 %v4605, %v4717
      %4719 = vmatmul.f32.gmra.mxu0 %v4021
      %v4720 = vpop.f32.mrf.mxu0
      %v4721 = vadd.f32 %v4608, %v4720
      %4722 = vmatmul.f32.gmra.mxu0 %v4024
      %v4723 = vpop.f32.mrf.mxu0
      %v4724 = vadd.f32 %v4611, %v4723
      %4725 = vmatmul.f32.gmra.mxu0 %v4027
      %v4726 = vpop.f32.mrf.mxu0
      %v4727 = vadd.f32 %v4614, %v4726
      %4728 = vmatmul.f32.gmra.mxu0 %v4256
      %v4729 = vpop.f32.mrf.mxu0
      %v4730 = vadd.f32 %v4617, %v4729
      %4731 = vmatmul.f32.gmra.mxu0 %v4256
      %v4732 = vpop.f32.mrf.mxu0
      %v4733 = vadd.f32 %v4620, %v4732
      %4734 = vdwg.mxu0
      %v4735 = vadd.f32 %v4389, %v4640
      %v4736 = vadd.f32 %v4392, %v4643
      %v4737 = vadd.f32 %v4395, %v4646
      %v4738 = vadd.f32 %v4398, %v4649
      %v4739 = vadd.f32 %v4401, %v4652
      %v4740 = vadd.f32 %v4404, %v4655
      %v4741 = vadd.f32 %v4407, %v4658
      %v4742 = vadd.f32 %v4410, %v4661
      %v4743 = vadd.f32 %v4413, %v4664
      %v4744 = vadd.f32 %v4416, %v4667
      %v4745 = vadd.f32 %v4419, %v4670
      %v4746 = vadd.f32 %v4422, %v4673
      %v4747 = vadd.f32 %v4425, %v4676
      %v4748 = vadd.f32 %v4428, %v4679
      %v4749 = vadd.f32 %v4431, %v4682
      %v4750 = vadd.f32 %v4434, %v4685
      %v4751 = vadd.f32 %v4437, %v4688
      %v4752 = vadd.f32 %v4440, %v4691
      %v4753 = vadd.f32 %v4443, %v4694
      %v4754 = vadd.f32 %v4446, %v4697
      %v4755 = vadd.f32 %v4449, %v4700
      %v4756 = vadd.f32 %v4452, %v4703
      %v4757 = vadd.f32 %v4455, %v4706
      %v4758 = vadd.f32 %v4458, %v4709
      %v4759 = vadd.f32 %v4461, %v4712
      %v4760 = vadd.f32 %v4464, %v4715
      %v4761 = vadd.f32 %v4467, %v4718
      %v4762 = vadd.f32 %v4470, %v4721
      %v4763 = vadd.f32 %v4473, %v4724
      %v4764 = vadd.f32 %v4476, %v4727
      %v4765 = vadd.f32 %v4479, %v4730
      %v4766 = vadd.f32 %v4482, %v4733
      %v4767 = vld [vmem:[%s13] sm:$0x1]
      %v4769 = vperm.slane %v4767, 0
      %v4771 = vadd.f32 %v4735, %v4769
      %v4772 = vadd.f32 %v4736, %v4769
      %v4773 = vadd.f32 %v4737, %v4769
      %v4774 = vadd.f32 %v4738, %v4769
      %v4775 = vadd.f32 %v4739, %v4769
      %v4776 = vadd.f32 %v4740, %v4769
      %v4777 = vadd.f32 %v4741, %v4769
      %v4778 = vadd.f32 %v4742, %v4769
      %v4779 = vadd.f32 %v4743, %v4769
      %v4780 = vadd.f32 %v4744, %v4769
      %v4781 = vadd.f32 %v4745, %v4769
      %v4782 = vadd.f32 %v4746, %v4769
      %v4783 = vadd.f32 %v4747, %v4769
      %v4784 = vadd.f32 %v4748, %v4769
      %v4785 = vadd.f32 %v4749, %v4769
      %v4786 = vadd.f32 %v4750, %v4769
      %v4787 = vadd.f32 %v4751, %v4769
      %v4788 = vadd.f32 %v4752, %v4769
      %v4789 = vadd.f32 %v4753, %v4769
      %v4790 = vadd.f32 %v4754, %v4769
      %v4791 = vadd.f32 %v4755, %v4769
      %v4792 = vadd.f32 %v4756, %v4769
      %v4793 = vadd.f32 %v4757, %v4769
      %v4794 = vadd.f32 %v4758, %v4769
      %v4795 = vadd.f32 %v4759, %v4769
      %v4796 = vadd.f32 %v4760, %v4769
      %v4797 = vadd.f32 %v4761, %v4769
      %v4798 = vadd.f32 %v4762, %v4769
      %v4799 = vadd.f32 %v4763, %v4769
      %v4800 = vadd.f32 %v4764, %v4769
      %v4801 = vadd.f32 %v4765, %v4769
      %v4802 = vadd.f32 %v4766, %v4769
      %v4803 = vmax.f32 %v4771, 0.0
      %v4804 = vmax.f32 %v4772, 0.0
      %v4805 = vmax.f32 %v4773, 0.0
      %v4806 = vmax.f32 %v4774, 0.0
      %v4807 = vmax.f32 %v4775, 0.0
      %v4808 = vmax.f32 %v4776, 0.0
      %v4809 = vmax.f32 %v4777, 0.0
      %v4810 = vmax.f32 %v4778, 0.0
      %v4811 = vmax.f32 %v4779, 0.0
      %v4812 = vmax.f32 %v4780, 0.0
      %v4813 = vmax.f32 %v4781, 0.0
      %v4814 = vmax.f32 %v4782, 0.0
      %v4815 = vmax.f32 %v4783, 0.0
      %v4816 = vmax.f32 %v4784, 0.0
      %v4817 = vmax.f32 %v4785, 0.0
      %v4818 = vmax.f32 %v4786, 0.0
      %v4819 = vmax.f32 %v4787, 0.0
      %v4820 = vmax.f32 %v4788, 0.0
      %v4821 = vmax.f32 %v4789, 0.0
      %v4822 = vmax.f32 %v4790, 0.0
      %v4823 = vmax.f32 %v4791, 0.0
      %v4824 = vmax.f32 %v4792, 0.0
      %v4825 = vmax.f32 %v4793, 0.0
      %v4826 = vmax.f32 %v4794, 0.0
      %v4827 = vmax.f32 %v4795, 0.0
      %v4828 = vmax.f32 %v4796, 0.0
      %v4829 = vmax.f32 %v4797, 0.0
      %v4830 = vmax.f32 %v4798, 0.0
      %v4831 = vmax.f32 %v4799, 0.0
      %v4832 = vmax.f32 %v4800, 0.0
      %v4833 = vmax.f32 %v4801, 0.0
      %v4834 = vmax.f32 %v4802, 0.0
      %4835 = vst.msk [vmem:[%s487] sm:$0xff] %vm780, %v4803
      %4836 = vst.msk [vmem:[%s487 + $0x8] sm:$0xff] %vm780, %v4804
      %4837 = vst.msk [vmem:[%s487 + $0x10] sm:$0xff] %vm780, %v4805
      %4838 = vst.msk [vmem:[%s487 + $0x18] sm:$0xff] %vm780, %v4806
      %4839 = vst.msk [vmem:[%s487 + $0x20] sm:$0xff] %vm780, %v4807
      %4840 = vst.msk [vmem:[%s487 + $0x28] sm:$0xff] %vm780, %v4808
      %4841 = vst.msk [vmem:[%s487 + $0x30] sm:$0xff] %vm780, %v4809
      %4842 = vst.msk [vmem:[%s487 + $0x38] sm:$0xff] %vm780, %v4810
      %4843 = vst.msk [vmem:[%s487 + $0x40] sm:$0xff] %vm780, %v4811
      %4844 = vst.msk [vmem:[%s487 + $0x48] sm:$0xff] %vm780, %v4812
      %4845 = vst.msk [vmem:[%s487 + $0x50] sm:$0xff] %vm780, %v4813
      %4846 = vst.msk [vmem:[%s487 + $0x58] sm:$0xff] %vm780, %v4814
      %4847 = vst.msk [vmem:[%s487 + $0x60] sm:$0xff] %vm780, %v4815
      %4848 = vst.msk [vmem:[%s487 + $0x68] sm:$0xff] %vm780, %v4816
      %4849 = vst.msk [vmem:[%s487 + $0x70] sm:$0xff] %vm780, %v4817
      %4850 = vst.msk [vmem:[%s487 + $0x78] sm:$0xff] %vm780, %v4818
      %4851 = vst.msk [vmem:[%s487 + $0x80] sm:$0xff] %vm780, %v4819
      %4852 = vst.msk [vmem:[%s487 + $0x88] sm:$0xff] %vm780, %v4820
      %4853 = vst.msk [vmem:[%s487 + $0x90] sm:$0xff] %vm780, %v4821
      %4854 = vst.msk [vmem:[%s487 + $0x98] sm:$0xff] %vm780, %v4822
      %4855 = vst.msk [vmem:[%s487 + $0xa0] sm:$0xff] %vm780, %v4823
      %4856 = vst.msk [vmem:[%s487 + $0xa8] sm:$0xff] %vm780, %v4824
      %4857 = vst.msk [vmem:[%s487 + $0xb0] sm:$0xff] %vm780, %v4825
      %4858 = vst.msk [vmem:[%s487 + $0xb8] sm:$0xff] %vm780, %v4826
      %4859 = vst.msk [vmem:[%s487 + $0xc0] sm:$0xff] %vm780, %v4827
      %4860 = vst.msk [vmem:[%s487 + $0xc8] sm:$0xff] %vm780, %v4828
      %4861 = vst.msk [vmem:[%s487 + $0xd0] sm:$0xff] %vm780, %v4829
      %4862 = vst.msk [vmem:[%s487 + $0xd8] sm:$0xff] %vm780, %v4830
      %4863 = vst.msk [vmem:[%s487 + $0xe0] sm:$0xff] %vm780, %v4831
      %4864 = vst.msk [vmem:[%s487 + $0xe8] sm:$0xff] %vm780, %v4832
      %4865 = vst.msk [vmem:[%s487 + $0xf0] sm:$0xff] %vm780, %v4833
      %4866 = vst.msk [vmem:[%s487 + $0xf8] sm:$0xff] %vm780, %v4834
      %p4867 = scmp.lt.s32.totalorder %s25, 1
      %s4868 = scalar_select %p4867, %s25, 1
      %s4869 = smul.addr %s4868, 32
      %s4870 = smul.addr %s4869, 8
      %s4871 = scalar_lea.vmem %s14, %s4870
      // Predicated region
      $region77: #{tpu_custom_call.1} parent=75 // pred_check
        %p4872 = pneg %p347
      $region78: #{tpu_custom_call.1} parent=75 // pred_check_branch
        %4874 = sbr.rel (%p4872) target = $region80
      $region79: #{tpu_custom_call.1} parent=75 // pred_region
        _
      $region80: #{tpu_custom_call.1} parent=75 // pred_fallthru
        _
    $region76: #{tpu_custom_call.1} parent=5 // pred_fallthru
      _
    %p4875 = scmp.le.s32.totalorder 2, %s20
    // Predicated region
    $region81: #{tpu_custom_call.1} parent=5 // pred_check
      %p4876 = pneg %p4875
    $region82: #{tpu_custom_call.1} parent=5 // pred_check_branch
      %4878 = sbr.rel (%p4876) target = $region84
    $region83: #{tpu_custom_call.1} parent=5 // pred_region
      %s4879 = ssub.s32 %s20, 2
      // Predicated region
      $region85: #{tpu_custom_call.1} parent=83 // pred_check
        %p4880 = pneg %p353
      $region86: #{tpu_custom_call.1} parent=83 // pred_check_branch
        %4882 = sbr.rel (%p4880) target = $region88
      $region87: #{tpu_custom_call.1} parent=83 // pred_region
        %p4883 = scmp.lt.s32.totalorder %s26, 1
        %s4884 = scalar_select %p4883, %s26, 1
        %s4885 = smul.addr %s4884, 32
        %s4886 = smul.addr %s4885, 8
        %s4887 = scalar_lea.vmem %s14, %s4886
      $region88: #{tpu_custom_call.1} parent=83 // pred_fallthru
        _
    $region84: #{tpu_custom_call.1} parent=5 // pred_fallthru
      _
  $region6: #{tpu_custom_call.1} parent=0 // loop_footer
    %s24 = sadd.s32 1, %s20
  $region7: #{tpu_custom_call.1} parent=0 // loop_footer_branch
    %19 = sbr.rel target = $region3
  $region8: #{tpu_custom_call.1} parent=0 // loop_exit
    _

</llo_original>
